<compile_context>
chip_gen: v7x
topology: tpu7x:2x2x1
jax: 0.10.0
libtpu: 0.0.40
codegen_flags: <defaults>
</compile_context>

<pallas_src>
import functools

import jax
import jax.numpy as jnp
from jax import lax
from jax.experimental import pallas as pl
from jax.experimental.pallas import tpu as pltpu


def _round_up(x, m):
    return (x + m - 1) // m * m


def _pick_rows(T_pad, B_pad, target=512):
    """Largest row tile = (divisor of T_pad) * B_pad that stays <= target."""
    best = B_pad
    for d in range(1, T_pad + 1):
        if T_pad % d == 0 and d * B_pad <= target:
            best = d * B_pad
    return best


def _invariant_spec(block_shape, index_map):
    """Grid-invariant block: single-buffered (no wasted second VMEM buffer)."""
    try:
        return pl.BlockSpec(block_shape, index_map, pipeline_mode=pl.Buffered(1))
    except Exception:   # older jax without pipeline_mode / Buffered
        return pl.BlockSpec(block_shape, index_map)


def _vmem_limit(nbytes):
    # Generous margin; never below the 32 MiB scoped default and capped well
    # under v7x's 64 MiB physical VMEM.
    return int(min(max(4 * nbytes, 32 << 20), 48 << 20))


# ----------------------------------------------------------------------------
# Kernel 1: input projection for both directions, off the serial path.
# xf row n = x at (time t, batch b); xb row n = x at (time T-1-t, batch b).
# Output columns are gate-interleaved: [i_f,i_b,f_f,f_b,g_f,g_b,o_f,o_b].
# ----------------------------------------------------------------------------
def _proj_kernel(H, xf_ref, xb_ref, wf_ref, wb_ref, bf_ref, bb_ref, o_ref):
    gf = jnp.dot(xf_ref[...], wf_ref[...],
                 preferred_element_type=jnp.float32) + bf_ref[...]   # (R,4H)
    gb = jnp.dot(xb_ref[...], wb_ref[...],
                 preferred_element_type=jnp.float32) + bb_ref[...]   # (R,4H)
    parts = []
    for k in range(4):                       # gate order i, f, g, o
        parts.append(gf[:, k * H:(k + 1) * H])
        parts.append(gb[:, k * H:(k + 1) * H])
    o_ref[...] = jnp.concatenate(parts, axis=-1)     # one lane-dense store


def input_projection(xf_flat, xb_flat, w_f, w_b, b_f, b_b, H, rows):
    N, E = xf_flat.shape
    G4, G8 = 4 * H, 8 * H
    n_tiles = N // rows
    tile_bytes = 2 * rows * E * xf_flat.dtype.itemsize + rows * G8 * 4
    weight_bytes = 2 * E * G4 * w_f.dtype.itemsize + 2 * G4 * 4
    return pl.pallas_call(
        functools.partial(_proj_kernel, H),
        out_shape=jax.ShapeDtypeStruct((N, G8), jnp.float32),
        grid=(n_tiles,),
        in_specs=[
            pl.BlockSpec((rows, E), lambda c: (c, 0)),
            pl.BlockSpec((rows, E), lambda c: (c, 0)),
            _invariant_spec((E, G4), lambda c: (0, 0)),
            _invariant_spec((E, G4), lambda c: (0, 0)),
            _invariant_spec((1, G4), lambda c: (0, 0)),
            _invariant_spec((1, G4), lambda c: (0, 0)),
        ],
        out_specs=pl.BlockSpec((rows, G8), lambda c: (c, 0)),
        compiler_params=pltpu.CompilerParams(
            dimension_semantics=("parallel",),
            vmem_limit_bytes=_vmem_limit(2 * tile_bytes + weight_bytes)),
    )(xf_flat, xb_flat, w_f, w_b, b_f, b_b)


# ----------------------------------------------------------------------------
# Kernel 2: bidirectional LSTM recurrence.  Grid iterates sequentially over
# time chunks of Tc steps; only h @ W_hh (block-diagonal, both directions in
# one MXU call) sits on the serial path.  Packed-sequence semantics are
# reproduced by masking (state freeze + zeroed outputs).
# ----------------------------------------------------------------------------
def _bilstm_kernel(H, Tc, unroll,
                   pre_ref, m_ref, whh_ref, out_f_ref, out_b_ref,
                   h_sc, c_sc):
    @pl.when(pl.program_id(0) == 0)
    def _():
        h_sc[...] = jnp.zeros_like(h_sc)
        c_sc[...] = jnp.zeros_like(c_sc)

    B = h_sc.shape[0]
    H2 = 2 * H
    state_lane = lax.broadcasted_iota(jnp.int32, (B, H2), 1)
    is_fwd_state = state_lane < H            # hoisted out of the time loop
    whh = whh_ref[...]                       # (2H, 8H) block-diagonal

    def step(j, carry):
        h, c = carry                         # (B, 2H) each, [fwd | bwd]
        jb = Tc - 1 - j
        pre = pre_ref[j]                     # (B,8H): fwd lanes x[t], bwd x[T-1-t]
        mm = m_ref[j]                        # (B,2): [mask[t], mask[T-1-t]]
        mf = mm[:, 0:1]
        mb = mm[:, 1:2]
        m = jnp.where(is_fwd_state, mf, mb)  # (B, 2H)

        gates = pre + jnp.dot(h, whh, preferred_element_type=jnp.float32)
        i_g = jax.nn.sigmoid(gates[:, 0 * H2:1 * H2])
        f_g = jax.nn.sigmoid(gates[:, 1 * H2:2 * H2])
        g_g = jnp.tanh(gates[:, 2 * H2:3 * H2])
        o_g = jax.nn.sigmoid(gates[:, 3 * H2:4 * H2])
        c_new = f_g * c + i_g * g_g
        h_new = o_g * jnp.tanh(c_new)
        # pack_padded_sequence: freeze state past seq_len (per direction).
        h = m * h_new + (1.0 - m) * h
        c = m * c_new + (1.0 - m) * c
        # pad_packed_sequence: emit zeros at padded positions.
        out_f_ref[j] = h[:, :H] * mf
        out_b_ref[jb] = h[:, H:] * mb
        return h, c

    h, c = lax.fori_loop(0, Tc, step, (h_sc[...], c_sc[...]), unroll=unroll)
    h_sc[...] = h
    c_sc[...] = c


def bilstm(preact_tm, mask2_tm, whh_bd, H, Tc, unroll):
    T, B, G8 = preact_tm.shape
    H2 = 2 * H
    nC = T // Tc
    tile_bytes = Tc * B * G8 * 4 + Tc * B * 2 * 4 + 2 * Tc * B * H * 4
    weight_bytes = H2 * G8 * 4 + 2 * B * H2 * 4
    out_f, out_b = pl.pallas_call(
        functools.partial(_bilstm_kernel, H, Tc, unroll),
        out_shape=(jax.ShapeDtypeStruct((T, B, H), jnp.float32),
                   jax.ShapeDtypeStruct((T, B, H), jnp.float32)),
        grid=(nC,),
        in_specs=[
            pl.BlockSpec((Tc, B, G8), lambda c: (c, 0, 0)),          # preact
            pl.BlockSpec((Tc, B, 2), lambda c: (c, 0, 0)),           # masks
            _invariant_spec((H2, G8), lambda c: (0, 0)),             # W_hh bd
        ],
        out_specs=(pl.BlockSpec((Tc, B, H), lambda c: (c, 0, 0)),
                   pl.BlockSpec((Tc, B, H), lambda c: (nC - 1 - c, 0, 0))),
        scratch_shapes=[pltpu.VMEM((B, H2), jnp.float32),
                        pltpu.VMEM((B, H2), jnp.float32)],
        compiler_params=pltpu.CompilerParams(
            dimension_semantics=("arbitrary",),      # recurrence -> sequential
            vmem_limit_bytes=_vmem_limit(2 * tile_bytes + weight_bytes)),
    )(preact_tm, mask2_tm, whh_bd)
    return out_f, out_b


# ----------------------------------------------------------------------------
# Kernel 3: token classifier.  One K=2H bf16 matmul per chunk (class dim
# padded to 128 lanes), first-occurrence argmax preds, and per-chunk partial
# NLL sums (grid axis fully parallel; reduced in JAX).
# ----------------------------------------------------------------------------
def _classifier_kernel(C_pad, hf_ref, hb_ref, y_ref, v_ref, w_ref, b_ref,
                       pred_ref, nll_ref):
    feats = jnp.concatenate([hf_ref[...], hb_ref[...]],
                            axis=-1).astype(jnp.bfloat16)          # (R, 2H)
    logits = (jnp.dot(feats, w_ref[...],
                      preferred_element_type=jnp.float32) + b_ref[...])

    mx = jnp.max(logits, axis=-1, keepdims=True)                   # (R, 1)
    iota = lax.broadcasted_iota(jnp.int32, logits.shape, 1)
    pred = jnp.min(jnp.where(logits == mx, iota, C_pad), axis=-1,
                   keepdims=True)
    pred_ref[...] = pred.astype(jnp.int32)

    y = y_ref[...]                                                 # (R, 1)
    lse = mx + jnp.log(jnp.sum(jnp.exp(logits - mx), axis=-1, keepdims=True))
    tgt = jnp.sum(jnp.where(iota == y, logits, 0.0), axis=-1, keepdims=True)
    nll = (lse - tgt) * v_ref[...]        # exclude artificially padded slots
    s = jnp.sum(nll)
    # per-chunk partial sum stored at [0,0] of a full (8,128) tile so the
    # grid axis stays "parallel" and the store is a clean full-tile store.
    r = lax.broadcasted_iota(jnp.int32, (8, 128), 0)
    l = lax.broadcasted_iota(jnp.int32, (8, 128), 1)
    nll_ref[...] = jnp.where((r == 0) & (l == 0), s, 0.0)


def classifier(hf_flat, hb_flat, y_flat, valid_flat, w_cat, b_cls, H, rows):
    N = hf_flat.shape[0]
    C_pad = w_cat.shape[1]
    n_tiles = N // rows
    tile_bytes = 2 * rows * H * 4 + 3 * rows * 4 + 8 * 128 * 4
    weight_bytes = 2 * H * C_pad * w_cat.dtype.itemsize + C_pad * 4
    pred, nll_parts = pl.pallas_call(
        functools.partial(_classifier_kernel, C_pad),
        out_shape=(jax.ShapeDtypeStruct((N, 1), jnp.int32),
                   jax.ShapeDtypeStruct((n_tiles * 8, 128), jnp.float32)),
        grid=(n_tiles,),
        in_specs=[
            pl.BlockSpec((rows, H), lambda c: (c, 0)),      # fwd features
            pl.BlockSpec((rows, H), lambda c: (c, 0)),      # bwd features
            pl.BlockSpec((rows, 1), lambda c: (c, 0)),      # targets
            pl.BlockSpec((rows, 1), lambda c: (c, 0)),      # validity weights
            _invariant_spec((2 * H, C_pad), lambda c: (0, 0)),
            _invariant_spec((1, C_pad), lambda c: (0, 0)),
        ],
        out_specs=(pl.BlockSpec((rows, 1), lambda c: (c, 0)),
                   pl.BlockSpec((8, 128), lambda c: (c, 0))),
        compiler_params=pltpu.CompilerParams(
            dimension_semantics=("parallel",),
            vmem_limit_bytes=_vmem_limit(2 * tile_bytes + weight_bytes)),
    )(hf_flat, hb_flat, y_flat, valid_flat, w_cat, b_cls)
    return pred, nll_parts


# ----------------------------------------------------------------------------
# Parameter packing: bf16 input/classifier weights, gate-interleaved
# block-diagonal W_hh, lane-padded classifier weights.
# ----------------------------------------------------------------------------
def pack_params(params, C_pad):
    H = params["whh_f"].shape[0]
    C = params["w_cls"].shape[1]

    def interleave(wf, wb):
        # (K,4H) fwd + (K,4H) bwd -> (K,8H) columns [i_f,i_b,f_f,f_b,...]
        K = wf.shape[0]
        return jnp.stack([wf.reshape(K, 4, H), wb.reshape(K, 4, H)],
                         axis=2).reshape(K, 8 * H)

    whh_bd = jnp.concatenate(
        [interleave(params["whh_f"], jnp.zeros_like(params["whh_f"])),
         interleave(jnp.zeros_like(params["whh_b"]), params["whh_b"])],
        axis=0).astype(jnp.float32)                               # (2H, 8H)

    w_f = params["wih_f"].astype(jnp.bfloat16)                    # (E, 4H)
    w_b = params["wih_b"].astype(jnp.bfloat16)
    b_f = params["b_f"].astype(jnp.float32)                       # (1, 4H)
    b_b = params["b_b"].astype(jnp.float32)

    w_cat = jnp.zeros((2 * H, C_pad), jnp.float32).at[:, :C].set(
        params["w_cls"]).astype(jnp.bfloat16)
    # pad columns get -1e30 logits -> ignored by argmax and logsumexp
    b_cls = jnp.full((1, C_pad), -1e30, jnp.float32).at[:, :C].set(
        params["b_cls"])
    return w_f, w_b, b_f, b_b, whh_bd, w_cat, b_cls


# ----------------------------------------------------------------------------
# Full forward (SeqTagger.forward with use_crf=False, testing=False).
# Batch-facing API is (B, T, ...) like the PyTorch module (batch_first=True).
# Assumes seq_len[0] == T so pad_packed_sequence keeps full length T.
# ----------------------------------------------------------------------------
def seq_tagger_forward(tokens, tags, mask, params, time_chunk=32,
                       row_target=512, lstm_unroll=None):
    B, T = tokens.shape
    H = params["whh_f"].shape[0]
    C = params["w_cls"].shape[1]
    C_pad = max(128, _round_up(C, 128))

    B_pad = _round_up(B, 8)                # full sublanes
    Tc = min(time_chunk, T)
    T_pad = _round_up(T, Tc)
    N = T_pad * B_pad
    rows = _pick_rows(T_pad, B_pad, row_target)   # decoupled from Tc*B_pad
    if lstm_unroll is None:
        lstm_unroll = True if H <= 64 else 8      # full unroll only if tiny H

    tok_p = jnp.zeros((B_pad, T_pad), tokens.dtype).at[:B, :T].set(tokens)
    tag_p = jnp.zeros((B_pad, T_pad), jnp.int32).at[:B, :T].set(
        tags.astype(jnp.int32))
    msk_p = jnp.zeros((B_pad, T_pad), jnp.float32).at[:B, :T].set(
        mask.astype(jnp.float32))

    w_f, w_b, b_f, b_b, whh_bd, w_cat, b_cls = pack_params(params, C_pad)

    # Embedding lookup (gather) stays in XLA; bf16 table halves its traffic
    # and feeds the MXU natively.
    emb_bf = params["emb"].astype(jnp.bfloat16)
    embed = jnp.take(emb_bf, tok_p, axis=0)               # (Bp, Tp, E)
    x_tm = jnp.transpose(embed, (1, 0, 2))                # (Tp, Bp, E)
    x_rev_tm = x_tm[::-1]                                 # one-time time flip
    E = x_tm.shape[-1]

    # Kernel 1: combined gate pre-activations for both directions.
    preact_flat = input_projection(x_tm.reshape(N, E), x_rev_tm.reshape(N, E),
                                   w_f, w_b, b_f, b_b, H, rows)
    preact_tm = preact_flat.reshape(T_pad, B_pad, 8 * H)

    mask_tm = jnp.transpose(msk_p, (1, 0))[:, :, None]    # (Tp, Bp, 1)
    mask2_tm = jnp.concatenate([mask_tm, mask_tm[::-1]], axis=-1)  # (Tp,Bp,2)

    # Kernel 2: bidirectional recurrence (only h @ W_hh on the serial path).
    out_f, out_b = bilstm(preact_tm, mask2_tm, whh_bd, H, Tc, lstm_unroll)

    # Kernel 3: classifier + argmax + per-chunk NLL partial sums.
    y_flat = jnp.transpose(tag_p, (1, 0)).reshape(N, 1)
    tvalid = (jnp.arange(T_pad) < T).astype(jnp.float32)[:, None]
    bvalid = (jnp.arange(B_pad) < B).astype(jnp.float32)[None, :]
    valid_flat = (tvalid * bvalid).reshape(N, 1)

    pred_flat, nll_parts = classifier(out_f.reshape(N, H), out_b.reshape(N, H),
                                      y_flat, valid_flat, w_cat, b_cls, H, rows)

    pred = pred_flat.reshape(T_pad, B_pad)[:T, :B].T          # (B, T)
    # CrossEntropyLoss(mean) over all B*T positions (padding inside real
    # sequences included, artificial batch/time padding excluded).
    loss = jnp.sum(nll_parts) / (B * T)
    return {"pred": pred, "loss": loss}


def init_params(key, V, E, H, C):
    ks = jax.random.split(key, 12)
    s = 0.1
    return {
        "emb":   jax.random.normal(ks[0], (V, E), jnp.float32) * s,
        # forward-direction LSTM (stored transposed: x @ W_ih^T), gate order
        # i, f, g, o; b_* holds b_ih + b_hh.
        "wih_f": jax.random.normal(ks[1], (E, 4 * H), jnp.float32) * s,
        "whh_f": jax.random.normal(ks[2], (H, 4 * H), jnp.float32) * s,
        "b_f":   (jax.random.normal(ks[3], (1, 4 * H), jnp.float32) * s
                  + jax.random.normal(ks[4], (1, 4 * H), jnp.float32) * s),
        # backward-direction LSTM
        "wih_b": jax.random.normal(ks[5], (E, 4 * H), jnp.float32) * s,
        "whh_b": jax.random.normal(ks[6], (H, 4 * H), jnp.float32) * s,
        "b_b":   (jax.random.normal(ks[7], (1, 4 * H), jnp.float32) * s
                  + jax.random.normal(ks[8], (1, 4 * H), jnp.float32) * s),
        # classifier Linear(2H -> C), stored transposed
        "w_cls": jax.random.normal(ks[9], (2 * H, C), jnp.float32) * s,
        "b_cls": jax.random.normal(ks[10], (1, C), jnp.float32) * s,
    }


if __name__ == "__main__":
    B, T, V, E, H, C = 4, 8, 32, 32, 32, 9

    key = jax.random.PRNGKey(0)
    k_par, k_tok, k_tag = jax.random.split(key, 3)
    params = init_params(k_par, V, E, H, C)

    tokens = jax.random.randint(k_tok, (B, T), 0, V, dtype=jnp.int32)
    tags = jax.random.randint(k_tag, (B, T), 0, C, dtype=jnp.int32)
    # sorted-descending lengths (pack_padded_sequence enforce_sorted=True);
    # seq_len[0] == T so pad_packed_sequence keeps full length T.
    seq_len = jnp.array([T, T - 2, T - 3, 2], dtype=jnp.int32)
    mask = jnp.arange(T, dtype=jnp.int32)[None, :] < seq_len[:, None]  # (B, T)

    res = jax.jit(seq_tagger_forward)(tokens, tags, mask, params)
    jax.block_until_ready(res["pred"])
    jax.block_until_ready(res["loss"])

    assert res["pred"].shape == (B, T)
    assert res["loss"].shape == ()
    print("KERNEL_OK")
</pallas_src>

<mosaic_0001>
module attributes {stable_mosaic.version = 11 : i64} {
  func.func @_proj_kernel(%arg0: i32, %arg1: memref<64x32xbf16, #tpu.memory_space<vmem>>, %arg2: memref<64x32xbf16, #tpu.memory_space<vmem>>, %arg3: memref<32x128xbf16, #tpu.memory_space<vmem>>, %arg4: memref<32x128xbf16, #tpu.memory_space<vmem>>, %arg5: memref<1x128xf32, #tpu.memory_space<vmem>>, %arg6: memref<1x128xf32, #tpu.memory_space<vmem>>, %arg7: memref<64x256xf32, #tpu.memory_space<vmem>>) attributes {dimension_semantics = [#tpu.dimension_semantics<parallel>], iteration_bounds = array<i64: 1>, scalar_prefetch = 0 : i64, scratch_operands = 0 : i64, tpu.core_type = #tpu.core_type<tc>, window_params = [{transform_indices = @transform_0, window_bounds = array<i64: 64, 32>}, {transform_indices = @transform_1, window_bounds = array<i64: 64, 32>}, {pipeline_mode = #tpu.pipeline_mode<synchronous>, transform_indices = @transform_2, window_bounds = array<i64: 32, 128>}, {pipeline_mode = #tpu.pipeline_mode<synchronous>, transform_indices = @transform_3, window_bounds = array<i64: 32, 128>}, {pipeline_mode = #tpu.pipeline_mode<synchronous>, transform_indices = @transform_4, window_bounds = array<i64: 1, 128>}, {pipeline_mode = #tpu.pipeline_mode<synchronous>, transform_indices = @transform_5, window_bounds = array<i64: 1, 128>}, {transform_indices = @transform_6, window_bounds = array<i64: 64, 256>}]} {
    %c0 = arith.constant 0 : index
    %c0_0 = arith.constant 0 : index
    %0 = vector.load %arg1[%c0, %c0_0] : memref<64x32xbf16, #tpu.memory_space<vmem>>, vector<64x32xbf16>
    %c0_1 = arith.constant 0 : index
    %c0_2 = arith.constant 0 : index
    %1 = vector.load %arg3[%c0_1, %c0_2] : memref<32x128xbf16, #tpu.memory_space<vmem>>, vector<32x128xbf16>
    %cst = arith.constant dense<0.000000e+00> : vector<64x128xf32>
    %2 = tpu.matmul %0, %1, %cst {dimension_numbers = #tpu.dot_dimension_numbers<[1], [0], [0], [1], [0, 0, 1, 1], [], []>} : vector<64x32xbf16>, vector<32x128xbf16>, vector<64x128xf32> -> vector<64x128xf32>
    %c0_3 = arith.constant 0 : index
    %c0_4 = arith.constant 0 : index
    %3 = vector.load %arg5[%c0_3, %c0_4] : memref<1x128xf32, #tpu.memory_space<vmem>>, vector<1x128xf32>
    %4 = vector.broadcast %3 : vector<1x128xf32> to vector<64x128xf32>
    %5 = arith.addf %2, %4 : vector<64x128xf32>
    %c0_5 = arith.constant 0 : index
    %c0_6 = arith.constant 0 : index
    %6 = vector.load %arg2[%c0_5, %c0_6] : memref<64x32xbf16, #tpu.memory_space<vmem>>, vector<64x32xbf16>
    %c0_7 = arith.constant 0 : index
    %c0_8 = arith.constant 0 : index
    %7 = vector.load %arg4[%c0_7, %c0_8] : memref<32x128xbf16, #tpu.memory_space<vmem>>, vector<32x128xbf16>
    %cst_9 = arith.constant dense<0.000000e+00> : vector<64x128xf32>
    %8 = tpu.matmul %6, %7, %cst_9 {dimension_numbers = #tpu.dot_dimension_numbers<[1], [0], [0], [1], [0, 0, 1, 1], [], []>} : vector<64x32xbf16>, vector<32x128xbf16>, vector<64x128xf32> -> vector<64x128xf32>
    %c0_10 = arith.constant 0 : index
    %c0_11 = arith.constant 0 : index
    %9 = vector.load %arg6[%c0_10, %c0_11] : memref<1x128xf32, #tpu.memory_space<vmem>>, vector<1x128xf32>
    %10 = vector.broadcast %9 : vector<1x128xf32> to vector<64x128xf32>
    %11 = arith.addf %8, %10 : vector<64x128xf32>
    %12 = vector.extract_strided_slice %5 {offsets = [0, 0], sizes = [64, 32], strides = [1, 1]} : vector<64x128xf32> to vector<64x32xf32>
    %13 = vector.extract_strided_slice %11 {offsets = [0, 0], sizes = [64, 32], strides = [1, 1]} : vector<64x128xf32> to vector<64x32xf32>
    %14 = vector.extract_strided_slice %5 {offsets = [0, 32], sizes = [64, 32], strides = [1, 1]} : vector<64x128xf32> to vector<64x32xf32>
    %15 = vector.extract_strided_slice %11 {offsets = [0, 32], sizes = [64, 32], strides = [1, 1]} : vector<64x128xf32> to vector<64x32xf32>
    %16 = vector.extract_strided_slice %5 {offsets = [0, 64], sizes = [64, 32], strides = [1, 1]} : vector<64x128xf32> to vector<64x32xf32>
    %17 = vector.extract_strided_slice %11 {offsets = [0, 64], sizes = [64, 32], strides = [1, 1]} : vector<64x128xf32> to vector<64x32xf32>
    %18 = vector.extract_strided_slice %5 {offsets = [0, 96], sizes = [64, 32], strides = [1, 1]} : vector<64x128xf32> to vector<64x32xf32>
    %19 = vector.extract_strided_slice %11 {offsets = [0, 96], sizes = [64, 32], strides = [1, 1]} : vector<64x128xf32> to vector<64x32xf32>
    %20 = tpu.concatenate %12, %13, %14, %15, %16, %17, %18, %19 in 1 : vector<64x32xf32>, vector<64x32xf32>, vector<64x32xf32>, vector<64x32xf32>, vector<64x32xf32>, vector<64x32xf32>, vector<64x32xf32>, vector<64x32xf32> -> vector<64x256xf32>
    %c0_12 = arith.constant 0 : index
    %c0_13 = arith.constant 0 : index
    %21 = vector.load %arg7[%c0_12, %c0_13] : memref<64x256xf32, #tpu.memory_space<vmem>>, vector<64x256xf32>
    tpu.vector_store %arg7[%c0_12, %c0_13], %20 {strides = array<i32>} : memref<64x256xf32, #tpu.memory_space<vmem>>, vector<64x256xf32>,
    return
  }
  func.func @transform_0(%arg0: i32) -> (i32, i32) {
    %c0_i32 = arith.constant 0 : i32
    %c0_i32_0 = arith.constant 0 : i32
    return %arg0, %c0_i32 : i32, i32
  }
  func.func @transform_1(%arg0: i32) -> (i32, i32) {
    %c0_i32 = arith.constant 0 : i32
    %c0_i32_0 = arith.constant 0 : i32
    return %arg0, %c0_i32 : i32, i32
  }
  func.func @transform_2(%arg0: i32) -> (i32, i32) {
    %c0_i32 = arith.constant 0 : i32
    %c0_i32_0 = arith.constant 0 : i32
    %c0_i32_1 = arith.constant 0 : i32
    return %c0_i32, %c0_i32_0 : i32, i32
  }
  func.func @transform_3(%arg0: i32) -> (i32, i32) {
    %c0_i32 = arith.constant 0 : i32
    %c0_i32_0 = arith.constant 0 : i32
    %c0_i32_1 = arith.constant 0 : i32
    return %c0_i32, %c0_i32_0 : i32, i32
  }
  func.func @transform_4(%arg0: i32) -> (i32, i32) {
    %c0_i32 = arith.constant 0 : i32
    %c0_i32_0 = arith.constant 0 : i32
    %c0_i32_1 = arith.constant 0 : i32
    return %c0_i32, %c0_i32_0 : i32, i32
  }
  func.func @transform_5(%arg0: i32) -> (i32, i32) {
    %c0_i32 = arith.constant 0 : i32
    %c0_i32_0 = arith.constant 0 : i32
    %c0_i32_1 = arith.constant 0 : i32
    return %c0_i32, %c0_i32_0 : i32, i32
  }
  func.func @transform_6(%arg0: i32) -> (i32, i32) {
    %c0_i32 = arith.constant 0 : i32
    %c0_i32_0 = arith.constant 0 : i32
    return %arg0, %c0_i32 : i32, i32
  }
}

module attributes {stable_mosaic.version = 11 : i64} {
  func.func @_bilstm_kernel(%arg0: i32, %arg1: memref<8x8x256xf32, #tpu.memory_space<vmem>>, %arg2: memref<8x8x2xf32, #tpu.memory_space<vmem>>, %arg3: memref<64x256xf32, #tpu.memory_space<vmem>>, %arg4: memref<8x8x32xf32, #tpu.memory_space<vmem>>, %arg5: memref<8x8x32xf32, #tpu.memory_space<vmem>>, %arg6: memref<8x64xf32, #tpu.memory_space<vmem>>, %arg7: memref<8x64xf32, #tpu.memory_space<vmem>>) attributes {dimension_semantics = [#tpu.dimension_semantics<arbitrary>], iteration_bounds = array<i64: 1>, scalar_prefetch = 0 : i64, scratch_operands = 2 : i64, tpu.core_type = #tpu.core_type<tc>, window_params = [{transform_indices = @transform_0, window_bounds = array<i64: 8, 8, 256>}, {transform_indices = @transform_1, window_bounds = array<i64: 8, 8, 2>}, {pipeline_mode = #tpu.pipeline_mode<synchronous>, transform_indices = @transform_2, window_bounds = array<i64: 64, 256>}, {transform_indices = @transform_3, window_bounds = array<i64: 8, 8, 32>}, {transform_indices = @transform_4, window_bounds = array<i64: 8, 8, 32>}]} {
    %c0_i32 = arith.constant 0 : i32
    %0 = arith.cmpi eq, %arg0, %c0_i32 : i32
    %1 = arith.extui %0 : i1 to i32
    %c0_i32_0 = arith.constant 0 : i32
    %2 = arith.cmpi ne, %1, %c0_i32_0 : i32
    scf.if %2 {
      %cst_130 = arith.constant 0.000000e+00 : f32
      %531 = vector.broadcast %cst_130 : f32 to vector<8x64xf32>
      %c0_131 = arith.constant 0 : index
      %c0_132 = arith.constant 0 : index
      %532 = vector.load %arg6[%c0_131, %c0_132] : memref<8x64xf32, #tpu.memory_space<vmem>>, vector<8x64xf32>
      tpu.vector_store %arg6[%c0_131, %c0_132], %531 {strides = array<i32>} : memref<8x64xf32, #tpu.memory_space<vmem>>, vector<8x64xf32>,
      %cst_133 = arith.constant 0.000000e+00 : f32
      %533 = vector.broadcast %cst_133 : f32 to vector<8x64xf32>
      %c0_134 = arith.constant 0 : index
      %c0_135 = arith.constant 0 : index
      %534 = vector.load %arg7[%c0_134, %c0_135] : memref<8x64xf32, #tpu.memory_space<vmem>>, vector<8x64xf32>
      tpu.vector_store %arg7[%c0_134, %c0_135], %533 {strides = array<i32>} : memref<8x64xf32, #tpu.memory_space<vmem>>, vector<8x64xf32>,
    } else {
    }
    %3 = tpu.iota {dimensions = array<i32: 1>} : vector<8x64xi32>
    %c32_i32 = arith.constant 32 : i32
    %4 = vector.broadcast %c32_i32 : i32 to vector<8x64xi32>
    %5 = arith.cmpi slt, %3, %4 : vector<8x64xi32>
    %c0 = arith.constant 0 : index
    %c0_1 = arith.constant 0 : index
    %6 = vector.load %arg3[%c0, %c0_1] : memref<64x256xf32, #tpu.memory_space<vmem>>, vector<64x256xf32>
    %c0_2 = arith.constant 0 : index
    %c0_3 = arith.constant 0 : index
    %7 = vector.load %arg6[%c0_2, %c0_3] : memref<8x64xf32, #tpu.memory_space<vmem>>, vector<8x64xf32>
    %c0_4 = arith.constant 0 : index
    %c0_5 = arith.constant 0 : index
    %8 = vector.load %arg7[%c0_4, %c0_5] : memref<8x64xf32, #tpu.memory_space<vmem>>, vector<8x64xf32>
    %c0_i32_6 = arith.constant 0 : i32
    %c7_i32 = arith.constant 7 : i32
    %9 = arith.subi %c7_i32, %c0_i32_6 : i32
    %10 = arith.index_cast %c0_i32_6 : i32 to index
    %c0_7 = arith.constant 0 : index
    %c0_8 = arith.constant 0 : index
    %11 = vector.load %arg1[%10, %c0_7, %c0_8] : memref<8x8x256xf32, #tpu.memory_space<vmem>>, vector<1x8x256xf32>
    %12 = vector.shape_cast %11 : vector<1x8x256xf32> to vector<8x256xf32>
    %13 = arith.index_cast %c0_i32_6 : i32 to index
    %c0_9 = arith.constant 0 : index
    %c0_10 = arith.constant 0 : index
    %14 = vector.load %arg2[%13, %c0_9, %c0_10] : memref<8x8x2xf32, #tpu.memory_space<vmem>>, vector<1x8x2xf32>
    %15 = vector.shape_cast %14 : vector<1x8x2xf32> to vector<8x2xf32>
    %16 = vector.extract_strided_slice %15 {offsets = [0, 0], sizes = [8, 1], strides = [1, 1]} : vector<8x2xf32> to vector<8x1xf32>
    %17 = vector.extract_strided_slice %15 {offsets = [0, 1], sizes = [8, 1], strides = [1, 1]} : vector<8x2xf32> to vector<8x1xf32>
    %18 = vector.shape_cast %16 : vector<8x1xf32> to vector<8x1xf32>
    %19 = vector.broadcast %18 : vector<8x1xf32> to vector<8x64xf32>
    %20 = vector.shape_cast %17 : vector<8x1xf32> to vector<8x1xf32>
    %21 = vector.broadcast %20 : vector<8x1xf32> to vector<8x64xf32>
    %22 = arith.select %5, %19, %21 : vector<8x64xi1>, vector<8x64xf32>
    %cst = arith.constant dense<0.000000e+00> : vector<8x256xf32>
    %23 = tpu.matmul %7, %6, %cst {dimension_numbers = #tpu.dot_dimension_numbers<[1], [0], [0], [1], [0, 0, 1, 1], [], []>} : vector<8x64xf32>, vector<64x256xf32>, vector<8x256xf32> -> vector<8x256xf32>
    %24 = arith.addf %12, %23 : vector<8x256xf32>
    %25 = vector.extract_strided_slice %24 {offsets = [0, 0], sizes = [8, 64], strides = [1, 1]} : vector<8x256xf32> to vector<8x64xf32>
    %26 = arith.negf %25 : vector<8x64xf32>
    %27 = math.exp %26 : vector<8x64xf32>
    %cst_11 = arith.constant 1.000000e+00 : f32
    %28 = vector.broadcast %cst_11 : f32 to vector<8x64xf32>
    %29 = arith.addf %28, %27 : vector<8x64xf32>
    %30 = arith.divf %28, %29 : vector<8x64xf32>
    %31 = vector.extract_strided_slice %24 {offsets = [0, 64], sizes = [8, 64], strides = [1, 1]} : vector<8x256xf32> to vector<8x64xf32>
    %32 = arith.negf %31 : vector<8x64xf32>
    %33 = math.exp %32 : vector<8x64xf32>
    %cst_12 = arith.constant 1.000000e+00 : f32
    %34 = vector.broadcast %cst_12 : f32 to vector<8x64xf32>
    %35 = arith.addf %34, %33 : vector<8x64xf32>
    %36 = arith.divf %34, %35 : vector<8x64xf32>
    %37 = vector.extract_strided_slice %24 {offsets = [0, 128], sizes = [8, 64], strides = [1, 1]} : vector<8x256xf32> to vector<8x64xf32>
    %38 = math.tanh %37 : vector<8x64xf32>
    %39 = vector.extract_strided_slice %24 {offsets = [0, 192], sizes = [8, 64], strides = [1, 1]} : vector<8x256xf32> to vector<8x64xf32>
    %40 = arith.negf %39 : vector<8x64xf32>
    %41 = math.exp %40 : vector<8x64xf32>
    %cst_13 = arith.constant 1.000000e+00 : f32
    %42 = vector.broadcast %cst_13 : f32 to vector<8x64xf32>
    %43 = arith.addf %42, %41 : vector<8x64xf32>
    %44 = arith.divf %42, %43 : vector<8x64xf32>
    %45 = arith.mulf %36, %8 : vector<8x64xf32>
    %46 = arith.mulf %30, %38 : vector<8x64xf32>
    %47 = arith.addf %45, %46 : vector<8x64xf32>
    %48 = math.tanh %47 : vector<8x64xf32>
    %49 = arith.mulf %44, %48 : vector<8x64xf32>
    %50 = arith.mulf %22, %49 : vector<8x64xf32>
    %cst_14 = arith.constant 1.000000e+00 : f32
    %51 = vector.broadcast %cst_14 : f32 to vector<8x64xf32>
    %52 = arith.subf %51, %22 : vector<8x64xf32>
    %53 = arith.mulf %52, %7 : vector<8x64xf32>
    %54 = arith.addf %50, %53 : vector<8x64xf32>
    %55 = arith.mulf %22, %47 : vector<8x64xf32>
    %cst_15 = arith.constant 1.000000e+00 : f32
    %56 = vector.broadcast %cst_15 : f32 to vector<8x64xf32>
    %57 = arith.subf %56, %22 : vector<8x64xf32>
    %58 = arith.mulf %57, %8 : vector<8x64xf32>
    %59 = arith.addf %55, %58 : vector<8x64xf32>
    %60 = vector.extract_strided_slice %54 {offsets = [0, 0], sizes = [8, 32], strides = [1, 1]} : vector<8x64xf32> to vector<8x32xf32>
    %61 = vector.broadcast %16 : vector<8x1xf32> to vector<8x32xf32>
    %62 = arith.mulf %60, %61 : vector<8x32xf32>
    %63 = arith.index_cast %c0_i32_6 : i32 to index
    %c0_16 = arith.constant 0 : index
    %c0_17 = arith.constant 0 : index
    %64 = vector.load %arg4[%63, %c0_16, %c0_17] : memref<8x8x32xf32, #tpu.memory_space<vmem>>, vector<1x8x32xf32>
    %65 = vector.shape_cast %64 : vector<1x8x32xf32> to vector<8x32xf32>
    %66 = vector.shape_cast %62 : vector<8x32xf32> to vector<1x8x32xf32>
    tpu.vector_store %arg4[%63, %c0_16, %c0_17], %66 {strides = array<i32>} : memref<8x8x32xf32, #tpu.memory_space<vmem>>, vector<1x8x32xf32>,
    %67 = vector.extract_strided_slice %54 {offsets = [0, 32], sizes = [8, 32], strides = [1, 1]} : vector<8x64xf32> to vector<8x32xf32>
    %68 = vector.broadcast %17 : vector<8x1xf32> to vector<8x32xf32>
    %69 = arith.mulf %67, %68 : vector<8x32xf32>
    %70 = arith.index_cast %9 : i32 to index
    %c0_18 = arith.constant 0 : index
    %c0_19 = arith.constant 0 : index
    %71 = vector.load %arg5[%70, %c0_18, %c0_19] : memref<8x8x32xf32, #tpu.memory_space<vmem>>, vector<1x8x32xf32>
    %72 = vector.shape_cast %71 : vector<1x8x32xf32> to vector<8x32xf32>
    %73 = vector.shape_cast %69 : vector<8x32xf32> to vector<1x8x32xf32>
    tpu.vector_store %arg5[%70, %c0_18, %c0_19], %73 {strides = array<i32>} : memref<8x8x32xf32, #tpu.memory_space<vmem>>, vector<1x8x32xf32>,
    %c1_i32 = arith.constant 1 : i32
    %c7_i32_20 = arith.constant 7 : i32
    %74 = arith.subi %c7_i32_20, %c1_i32 : i32
    %75 = arith.index_cast %c1_i32 : i32 to index
    %c0_21 = arith.constant 0 : index
    %c0_22 = arith.constant 0 : index
    %76 = vector.load %arg1[%75, %c0_21, %c0_22] : memref<8x8x256xf32, #tpu.memory_space<vmem>>, vector<1x8x256xf32>
    %77 = vector.shape_cast %76 : vector<1x8x256xf32> to vector<8x256xf32>
    %78 = arith.index_cast %c1_i32 : i32 to index
    %c0_23 = arith.constant 0 : index
    %c0_24 = arith.constant 0 : index
    %79 = vector.load %arg2[%78, %c0_23, %c0_24] : memref<8x8x2xf32, #tpu.memory_space<vmem>>, vector<1x8x2xf32>
    %80 = vector.shape_cast %79 : vector<1x8x2xf32> to vector<8x2xf32>
    %81 = vector.extract_strided_slice %80 {offsets = [0, 0], sizes = [8, 1], strides = [1, 1]} : vector<8x2xf32> to vector<8x1xf32>
    %82 = vector.extract_strided_slice %80 {offsets = [0, 1], sizes = [8, 1], strides = [1, 1]} : vector<8x2xf32> to vector<8x1xf32>
    %83 = vector.shape_cast %81 : vector<8x1xf32> to vector<8x1xf32>
    %84 = vector.broadcast %83 : vector<8x1xf32> to vector<8x64xf32>
    %85 = vector.shape_cast %82 : vector<8x1xf32> to vector<8x1xf32>
    %86 = vector.broadcast %85 : vector<8x1xf32> to vector<8x64xf32>
    %87 = arith.select %5, %84, %86 : vector<8x64xi1>, vector<8x64xf32>
    %cst_25 = arith.constant dense<0.000000e+00> : vector<8x256xf32>
    %88 = tpu.matmul %54, %6, %cst_25 {dimension_numbers = #tpu.dot_dimension_numbers<[1], [0], [0], [1], [0, 0, 1, 1], [], []>} : vector<8x64xf32>, vector<64x256xf32>, vector<8x256xf32> -> vector<8x256xf32>
    %89 = arith.addf %77, %88 : vector<8x256xf32>
    %90 = vector.extract_strided_slice %89 {offsets = [0, 0], sizes = [8, 64], strides = [1, 1]} : vector<8x256xf32> to vector<8x64xf32>
    %91 = arith.negf %90 : vector<8x64xf32>
    %92 = math.exp %91 : vector<8x64xf32>
    %cst_26 = arith.constant 1.000000e+00 : f32
    %93 = vector.broadcast %cst_26 : f32 to vector<8x64xf32>
    %94 = arith.addf %93, %92 : vector<8x64xf32>
    %95 = arith.divf %93, %94 : vector<8x64xf32>
    %96 = vector.extract_strided_slice %89 {offsets = [0, 64], sizes = [8, 64], strides = [1, 1]} : vector<8x256xf32> to vector<8x64xf32>
    %97 = arith.negf %96 : vector<8x64xf32>
    %98 = math.exp %97 : vector<8x64xf32>
    %cst_27 = arith.constant 1.000000e+00 : f32
    %99 = vector.broadcast %cst_27 : f32 to vector<8x64xf32>
    %100 = arith.addf %99, %98 : vector<8x64xf32>
    %101 = arith.divf %99, %100 : vector<8x64xf32>
    %102 = vector.extract_strided_slice %89 {offsets = [0, 128], sizes = [8, 64], strides = [1, 1]} : vector<8x256xf32> to vector<8x64xf32>
    %103 = math.tanh %102 : vector<8x64xf32>
    %104 = vector.extract_strided_slice %89 {offsets = [0, 192], sizes = [8, 64], strides = [1, 1]} : vector<8x256xf32> to vector<8x64xf32>
    %105 = arith.negf %104 : vector<8x64xf32>
    %106 = math.exp %105 : vector<8x64xf32>
    %cst_28 = arith.constant 1.000000e+00 : f32
    %107 = vector.broadcast %cst_28 : f32 to vector<8x64xf32>
    %108 = arith.addf %107, %106 : vector<8x64xf32>
    %109 = arith.divf %107, %108 : vector<8x64xf32>
    %110 = arith.mulf %101, %59 : vector<8x64xf32>
    %111 = arith.mulf %95, %103 : vector<8x64xf32>
    %112 = arith.addf %110, %111 : vector<8x64xf32>
    %113 = math.tanh %112 : vector<8x64xf32>
    %114 = arith.mulf %109, %113 : vector<8x64xf32>
    %115 = arith.mulf %87, %114 : vector<8x64xf32>
    %cst_29 = arith.constant 1.000000e+00 : f32
    %116 = vector.broadcast %cst_29 : f32 to vector<8x64xf32>
    %117 = arith.subf %116, %87 : vector<8x64xf32>
    %118 = arith.mulf %117, %54 : vector<8x64xf32>
    %119 = arith.addf %115, %118 : vector<8x64xf32>
    %120 = arith.mulf %87, %112 : vector<8x64xf32>
    %cst_30 = arith.constant 1.000000e+00 : f32
    %121 = vector.broadcast %cst_30 : f32 to vector<8x64xf32>
    %122 = arith.subf %121, %87 : vector<8x64xf32>
    %123 = arith.mulf %122, %59 : vector<8x64xf32>
    %124 = arith.addf %120, %123 : vector<8x64xf32>
    %125 = vector.extract_strided_slice %119 {offsets = [0, 0], sizes = [8, 32], strides = [1, 1]} : vector<8x64xf32> to vector<8x32xf32>
    %126 = vector.broadcast %81 : vector<8x1xf32> to vector<8x32xf32>
    %127 = arith.mulf %125, %126 : vector<8x32xf32>
    %128 = arith.index_cast %c1_i32 : i32 to index
    %c0_31 = arith.constant 0 : index
    %c0_32 = arith.constant 0 : index
    %129 = vector.load %arg4[%128, %c0_31, %c0_32] : memref<8x8x32xf32, #tpu.memory_space<vmem>>, vector<1x8x32xf32>
    %130 = vector.shape_cast %129 : vector<1x8x32xf32> to vector<8x32xf32>
    %131 = vector.shape_cast %127 : vector<8x32xf32> to vector<1x8x32xf32>
    tpu.vector_store %arg4[%128, %c0_31, %c0_32], %131 {strides = array<i32>} : memref<8x8x32xf32, #tpu.memory_space<vmem>>, vector<1x8x32xf32>,
    %132 = vector.extract_strided_slice %119 {offsets = [0, 32], sizes = [8, 32], strides = [1, 1]} : vector<8x64xf32> to vector<8x32xf32>
    %133 = vector.broadcast %82 : vector<8x1xf32> to vector<8x32xf32>
    %134 = arith.mulf %132, %133 : vector<8x32xf32>
    %135 = arith.index_cast %74 : i32 to index
    %c0_33 = arith.constant 0 : index
    %c0_34 = arith.constant 0 : index
    %136 = vector.load %arg5[%135, %c0_33, %c0_34] : memref<8x8x32xf32, #tpu.memory_space<vmem>>, vector<1x8x32xf32>
    %137 = vector.shape_cast %136 : vector<1x8x32xf32> to vector<8x32xf32>
    %138 = vector.shape_cast %134 : vector<8x32xf32> to vector<1x8x32xf32>
    tpu.vector_store %arg5[%135, %c0_33, %c0_34], %138 {strides = array<i32>} : memref<8x8x32xf32, #tpu.memory_space<vmem>>, vector<1x8x32xf32>,
    %c2_i32 = arith.constant 2 : i32
    %c7_i32_35 = arith.constant 7 : i32
    %139 = arith.subi %c7_i32_35, %c2_i32 : i32
    %140 = arith.index_cast %c2_i32 : i32 to index
    %c0_36 = arith.constant 0 : index
    %c0_37 = arith.constant 0 : index
    %141 = vector.load %arg1[%140, %c0_36, %c0_37] : memref<8x8x256xf32, #tpu.memory_space<vmem>>, vector<1x8x256xf32>
    %142 = vector.shape_cast %141 : vector<1x8x256xf32> to vector<8x256xf32>
    %143 = arith.index_cast %c2_i32 : i32 to index
    %c0_38 = arith.constant 0 : index
    %c0_39 = arith.constant 0 : index
    %144 = vector.load %arg2[%143, %c0_38, %c0_39] : memref<8x8x2xf32, #tpu.memory_space<vmem>>, vector<1x8x2xf32>
    %145 = vector.shape_cast %144 : vector<1x8x2xf32> to vector<8x2xf32>
    %146 = vector.extract_strided_slice %145 {offsets = [0, 0], sizes = [8, 1], strides = [1, 1]} : vector<8x2xf32> to vector<8x1xf32>
    %147 = vector.extract_strided_slice %145 {offsets = [0, 1], sizes = [8, 1], strides = [1, 1]} : vector<8x2xf32> to vector<8x1xf32>
    %148 = vector.shape_cast %146 : vector<8x1xf32> to vector<8x1xf32>
    %149 = vector.broadcast %148 : vector<8x1xf32> to vector<8x64xf32>
    %150 = vector.shape_cast %147 : vector<8x1xf32> to vector<8x1xf32>
    %151 = vector.broadcast %150 : vector<8x1xf32> to vector<8x64xf32>
    %152 = arith.select %5, %149, %151 : vector<8x64xi1>, vector<8x64xf32>
    %cst_40 = arith.constant dense<0.000000e+00> : vector<8x256xf32>
    %153 = tpu.matmul %119, %6, %cst_40 {dimension_numbers = #tpu.dot_dimension_numbers<[1], [0], [0], [1], [0, 0, 1, 1], [], []>} : vector<8x64xf32>, vector<64x256xf32>, vector<8x256xf32> -> vector<8x256xf32>
    %154 = arith.addf %142, %153 : vector<8x256xf32>
    %155 = vector.extract_strided_slice %154 {offsets = [0, 0], sizes = [8, 64], strides = [1, 1]} : vector<8x256xf32> to vector<8x64xf32>
    %156 = arith.negf %155 : vector<8x64xf32>
    %157 = math.exp %156 : vector<8x64xf32>
    %cst_41 = arith.constant 1.000000e+00 : f32
    %158 = vector.broadcast %cst_41 : f32 to vector<8x64xf32>
    %159 = arith.addf %158, %157 : vector<8x64xf32>
    %160 = arith.divf %158, %159 : vector<8x64xf32>
    %161 = vector.extract_strided_slice %154 {offsets = [0, 64], sizes = [8, 64], strides = [1, 1]} : vector<8x256xf32> to vector<8x64xf32>
    %162 = arith.negf %161 : vector<8x64xf32>
    %163 = math.exp %162 : vector<8x64xf32>
    %cst_42 = arith.constant 1.000000e+00 : f32
    %164 = vector.broadcast %cst_42 : f32 to vector<8x64xf32>
    %165 = arith.addf %164, %163 : vector<8x64xf32>
    %166 = arith.divf %164, %165 : vector<8x64xf32>
    %167 = vector.extract_strided_slice %154 {offsets = [0, 128], sizes = [8, 64], strides = [1, 1]} : vector<8x256xf32> to vector<8x64xf32>
    %168 = math.tanh %167 : vector<8x64xf32>
    %169 = vector.extract_strided_slice %154 {offsets = [0, 192], sizes = [8, 64], strides = [1, 1]} : vector<8x256xf32> to vector<8x64xf32>
    %170 = arith.negf %169 : vector<8x64xf32>
    %171 = math.exp %170 : vector<8x64xf32>
    %cst_43 = arith.constant 1.000000e+00 : f32
    %172 = vector.broadcast %cst_43 : f32 to vector<8x64xf32>
    %173 = arith.addf %172, %171 : vector<8x64xf32>
    %174 = arith.divf %172, %173 : vector<8x64xf32>
    %175 = arith.mulf %166, %124 : vector<8x64xf32>
    %176 = arith.mulf %160, %168 : vector<8x64xf32>
    %177 = arith.addf %175, %176 : vector<8x64xf32>
    %178 = math.tanh %177 : vector<8x64xf32>
    %179 = arith.mulf %174, %178 : vector<8x64xf32>
    %180 = arith.mulf %152, %179 : vector<8x64xf32>
    %cst_44 = arith.constant 1.000000e+00 : f32
    %181 = vector.broadcast %cst_44 : f32 to vector<8x64xf32>
    %182 = arith.subf %181, %152 : vector<8x64xf32>
    %183 = arith.mulf %182, %119 : vector<8x64xf32>
    %184 = arith.addf %180, %183 : vector<8x64xf32>
    %185 = arith.mulf %152, %177 : vector<8x64xf32>
    %cst_45 = arith.constant 1.000000e+00 : f32
    %186 = vector.broadcast %cst_45 : f32 to vector<8x64xf32>
    %187 = arith.subf %186, %152 : vector<8x64xf32>
    %188 = arith.mulf %187, %124 : vector<8x64xf32>
    %189 = arith.addf %185, %188 : vector<8x64xf32>
    %190 = vector.extract_strided_slice %184 {offsets = [0, 0], sizes = [8, 32], strides = [1, 1]} : vector<8x64xf32> to vector<8x32xf32>
    %191 = vector.broadcast %146 : vector<8x1xf32> to vector<8x32xf32>
    %192 = arith.mulf %190, %191 : vector<8x32xf32>
    %193 = arith.index_cast %c2_i32 : i32 to index
    %c0_46 = arith.constant 0 : index
    %c0_47 = arith.constant 0 : index
    %194 = vector.load %arg4[%193, %c0_46, %c0_47] : memref<8x8x32xf32, #tpu.memory_space<vmem>>, vector<1x8x32xf32>
    %195 = vector.shape_cast %194 : vector<1x8x32xf32> to vector<8x32xf32>
    %196 = vector.shape_cast %192 : vector<8x32xf32> to vector<1x8x32xf32>
    tpu.vector_store %arg4[%193, %c0_46, %c0_47], %196 {strides = array<i32>} : memref<8x8x32xf32, #tpu.memory_space<vmem>>, vector<1x8x32xf32>,
    %197 = vector.extract_strided_slice %184 {offsets = [0, 32], sizes = [8, 32], strides = [1, 1]} : vector<8x64xf32> to vector<8x32xf32>
    %198 = vector.broadcast %147 : vector<8x1xf32> to vector<8x32xf32>
    %199 = arith.mulf %197, %198 : vector<8x32xf32>
    %200 = arith.index_cast %139 : i32 to index
    %c0_48 = arith.constant 0 : index
    %c0_49 = arith.constant 0 : index
    %201 = vector.load %arg5[%200, %c0_48, %c0_49] : memref<8x8x32xf32, #tpu.memory_space<vmem>>, vector<1x8x32xf32>
    %202 = vector.shape_cast %201 : vector<1x8x32xf32> to vector<8x32xf32>
    %203 = vector.shape_cast %199 : vector<8x32xf32> to vector<1x8x32xf32>
    tpu.vector_store %arg5[%200, %c0_48, %c0_49], %203 {strides = array<i32>} : memref<8x8x32xf32, #tpu.memory_space<vmem>>, vector<1x8x32xf32>,
    %c3_i32 = arith.constant 3 : i32
    %c7_i32_50 = arith.constant 7 : i32
    %204 = arith.subi %c7_i32_50, %c3_i32 : i32
    %205 = arith.index_cast %c3_i32 : i32 to index
    %c0_51 = arith.constant 0 : index
    %c0_52 = arith.constant 0 : index
    %206 = vector.load %arg1[%205, %c0_51, %c0_52] : memref<8x8x256xf32, #tpu.memory_space<vmem>>, vector<1x8x256xf32>
    %207 = vector.shape_cast %206 : vector<1x8x256xf32> to vector<8x256xf32>
    %208 = arith.index_cast %c3_i32 : i32 to index
    %c0_53 = arith.constant 0 : index
    %c0_54 = arith.constant 0 : index
    %209 = vector.load %arg2[%208, %c0_53, %c0_54] : memref<8x8x2xf32, #tpu.memory_space<vmem>>, vector<1x8x2xf32>
    %210 = vector.shape_cast %209 : vector<1x8x2xf32> to vector<8x2xf32>
    %211 = vector.extract_strided_slice %210 {offsets = [0, 0], sizes = [8, 1], strides = [1, 1]} : vector<8x2xf32> to vector<8x1xf32>
    %212 = vector.extract_strided_slice %210 {offsets = [0, 1], sizes = [8, 1], strides = [1, 1]} : vector<8x2xf32> to vector<8x1xf32>
    %213 = vector.shape_cast %211 : vector<8x1xf32> to vector<8x1xf32>
    %214 = vector.broadcast %213 : vector<8x1xf32> to vector<8x64xf32>
    %215 = vector.shape_cast %212 : vector<8x1xf32> to vector<8x1xf32>
    %216 = vector.broadcast %215 : vector<8x1xf32> to vector<8x64xf32>
    %217 = arith.select %5, %214, %216 : vector<8x64xi1>, vector<8x64xf32>
    %cst_55 = arith.constant dense<0.000000e+00> : vector<8x256xf32>
    %218 = tpu.matmul %184, %6, %cst_55 {dimension_numbers = #tpu.dot_dimension_numbers<[1], [0], [0], [1], [0, 0, 1, 1], [], []>} : vector<8x64xf32>, vector<64x256xf32>, vector<8x256xf32> -> vector<8x256xf32>
    %219 = arith.addf %207, %218 : vector<8x256xf32>
    %220 = vector.extract_strided_slice %219 {offsets = [0, 0], sizes = [8, 64], strides = [1, 1]} : vector<8x256xf32> to vector<8x64xf32>
    %221 = arith.negf %220 : vector<8x64xf32>
    %222 = math.exp %221 : vector<8x64xf32>
    %cst_56 = arith.constant 1.000000e+00 : f32
    %223 = vector.broadcast %cst_56 : f32 to vector<8x64xf32>
    %224 = arith.addf %223, %222 : vector<8x64xf32>
    %225 = arith.divf %223, %224 : vector<8x64xf32>
    %226 = vector.extract_strided_slice %219 {offsets = [0, 64], sizes = [8, 64], strides = [1, 1]} : vector<8x256xf32> to vector<8x64xf32>
    %227 = arith.negf %226 : vector<8x64xf32>
    %228 = math.exp %227 : vector<8x64xf32>
    %cst_57 = arith.constant 1.000000e+00 : f32
    %229 = vector.broadcast %cst_57 : f32 to vector<8x64xf32>
    %230 = arith.addf %229, %228 : vector<8x64xf32>
    %231 = arith.divf %229, %230 : vector<8x64xf32>
    %232 = vector.extract_strided_slice %219 {offsets = [0, 128], sizes = [8, 64], strides = [1, 1]} : vector<8x256xf32> to vector<8x64xf32>
    %233 = math.tanh %232 : vector<8x64xf32>
    %234 = vector.extract_strided_slice %219 {offsets = [0, 192], sizes = [8, 64], strides = [1, 1]} : vector<8x256xf32> to vector<8x64xf32>
    %235 = arith.negf %234 : vector<8x64xf32>
    %236 = math.exp %235 : vector<8x64xf32>
    %cst_58 = arith.constant 1.000000e+00 : f32
    %237 = vector.broadcast %cst_58 : f32 to vector<8x64xf32>
    %238 = arith.addf %237, %236 : vector<8x64xf32>
    %239 = arith.divf %237, %238 : vector<8x64xf32>
    %240 = arith.mulf %231, %189 : vector<8x64xf32>
    %241 = arith.mulf %225, %233 : vector<8x64xf32>
    %242 = arith.addf %240, %241 : vector<8x64xf32>
    %243 = math.tanh %242 : vector<8x64xf32>
    %244 = arith.mulf %239, %243 : vector<8x64xf32>
    %245 = arith.mulf %217, %244 : vector<8x64xf32>
    %cst_59 = arith.constant 1.000000e+00 : f32
    %246 = vector.broadcast %cst_59 : f32 to vector<8x64xf32>
    %247 = arith.subf %246, %217 : vector<8x64xf32>
    %248 = arith.mulf %247, %184 : vector<8x64xf32>
    %249 = arith.addf %245, %248 : vector<8x64xf32>
    %250 = arith.mulf %217, %242 : vector<8x64xf32>
    %cst_60 = arith.constant 1.000000e+00 : f32
    %251 = vector.broadcast %cst_60 : f32 to vector<8x64xf32>
    %252 = arith.subf %251, %217 : vector<8x64xf32>
    %253 = arith.mulf %252, %189 : vector<8x64xf32>
    %254 = arith.addf %250, %253 : vector<8x64xf32>
    %255 = vector.extract_strided_slice %249 {offsets = [0, 0], sizes = [8, 32], strides = [1, 1]} : vector<8x64xf32> to vector<8x32xf32>
    %256 = vector.broadcast %211 : vector<8x1xf32> to vector<8x32xf32>
    %257 = arith.mulf %255, %256 : vector<8x32xf32>
    %258 = arith.index_cast %c3_i32 : i32 to index
    %c0_61 = arith.constant 0 : index
    %c0_62 = arith.constant 0 : index
    %259 = vector.load %arg4[%258, %c0_61, %c0_62] : memref<8x8x32xf32, #tpu.memory_space<vmem>>, vector<1x8x32xf32>
    %260 = vector.shape_cast %259 : vector<1x8x32xf32> to vector<8x32xf32>
    %261 = vector.shape_cast %257 : vector<8x32xf32> to vector<1x8x32xf32>
    tpu.vector_store %arg4[%258, %c0_61, %c0_62], %261 {strides = array<i32>} : memref<8x8x32xf32, #tpu.memory_space<vmem>>, vector<1x8x32xf32>,
    %262 = vector.extract_strided_slice %249 {offsets = [0, 32], sizes = [8, 32], strides = [1, 1]} : vector<8x64xf32> to vector<8x32xf32>
    %263 = vector.broadcast %212 : vector<8x1xf32> to vector<8x32xf32>
    %264 = arith.mulf %262, %263 : vector<8x32xf32>
    %265 = arith.index_cast %204 : i32 to index
    %c0_63 = arith.constant 0 : index
    %c0_64 = arith.constant 0 : index
    %266 = vector.load %arg5[%265, %c0_63, %c0_64] : memref<8x8x32xf32, #tpu.memory_space<vmem>>, vector<1x8x32xf32>
    %267 = vector.shape_cast %266 : vector<1x8x32xf32> to vector<8x32xf32>
    %268 = vector.shape_cast %264 : vector<8x32xf32> to vector<1x8x32xf32>
    tpu.vector_store %arg5[%265, %c0_63, %c0_64], %268 {strides = array<i32>} : memref<8x8x32xf32, #tpu.memory_space<vmem>>, vector<1x8x32xf32>,
    %c4_i32 = arith.constant 4 : i32
    %c7_i32_65 = arith.constant 7 : i32
    %269 = arith.subi %c7_i32_65, %c4_i32 : i32
    %270 = arith.index_cast %c4_i32 : i32 to index
    %c0_66 = arith.constant 0 : index
    %c0_67 = arith.constant 0 : index
    %271 = vector.load %arg1[%270, %c0_66, %c0_67] : memref<8x8x256xf32, #tpu.memory_space<vmem>>, vector<1x8x256xf32>
    %272 = vector.shape_cast %271 : vector<1x8x256xf32> to vector<8x256xf32>
    %273 = arith.index_cast %c4_i32 : i32 to index
    %c0_68 = arith.constant 0 : index
    %c0_69 = arith.constant 0 : index
    %274 = vector.load %arg2[%273, %c0_68, %c0_69] : memref<8x8x2xf32, #tpu.memory_space<vmem>>, vector<1x8x2xf32>
    %275 = vector.shape_cast %274 : vector<1x8x2xf32> to vector<8x2xf32>
    %276 = vector.extract_strided_slice %275 {offsets = [0, 0], sizes = [8, 1], strides = [1, 1]} : vector<8x2xf32> to vector<8x1xf32>
    %277 = vector.extract_strided_slice %275 {offsets = [0, 1], sizes = [8, 1], strides = [1, 1]} : vector<8x2xf32> to vector<8x1xf32>
    %278 = vector.shape_cast %276 : vector<8x1xf32> to vector<8x1xf32>
    %279 = vector.broadcast %278 : vector<8x1xf32> to vector<8x64xf32>
    %280 = vector.shape_cast %277 : vector<8x1xf32> to vector<8x1xf32>
    %281 = vector.broadcast %280 : vector<8x1xf32> to vector<8x64xf32>
    %282 = arith.select %5, %279, %281 : vector<8x64xi1>, vector<8x64xf32>
    %cst_70 = arith.constant dense<0.000000e+00> : vector<8x256xf32>
    %283 = tpu.matmul %249, %6, %cst_70 {dimension_numbers = #tpu.dot_dimension_numbers<[1], [0], [0], [1], [0, 0, 1, 1], [], []>} : vector<8x64xf32>, vector<64x256xf32>, vector<8x256xf32> -> vector<8x256xf32>
    %284 = arith.addf %272, %283 : vector<8x256xf32>
    %285 = vector.extract_strided_slice %284 {offsets = [0, 0], sizes = [8, 64], strides = [1, 1]} : vector<8x256xf32> to vector<8x64xf32>
    %286 = arith.negf %285 : vector<8x64xf32>
    %287 = math.exp %286 : vector<8x64xf32>
    %cst_71 = arith.constant 1.000000e+00 : f32
    %288 = vector.broadcast %cst_71 : f32 to vector<8x64xf32>
    %289 = arith.addf %288, %287 : vector<8x64xf32>
    %290 = arith.divf %288, %289 : vector<8x64xf32>
    %291 = vector.extract_strided_slice %284 {offsets = [0, 64], sizes = [8, 64], strides = [1, 1]} : vector<8x256xf32> to vector<8x64xf32>
    %292 = arith.negf %291 : vector<8x64xf32>
    %293 = math.exp %292 : vector<8x64xf32>
    %cst_72 = arith.constant 1.000000e+00 : f32
    %294 = vector.broadcast %cst_72 : f32 to vector<8x64xf32>
    %295 = arith.addf %294, %293 : vector<8x64xf32>
    %296 = arith.divf %294, %295 : vector<8x64xf32>
    %297 = vector.extract_strided_slice %284 {offsets = [0, 128], sizes = [8, 64], strides = [1, 1]} : vector<8x256xf32> to vector<8x64xf32>
    %298 = math.tanh %297 : vector<8x64xf32>
    %299 = vector.extract_strided_slice %284 {offsets = [0, 192], sizes = [8, 64], strides = [1, 1]} : vector<8x256xf32> to vector<8x64xf32>
    %300 = arith.negf %299 : vector<8x64xf32>
    %301 = math.exp %300 : vector<8x64xf32>
    %cst_73 = arith.constant 1.000000e+00 : f32
    %302 = vector.broadcast %cst_73 : f32 to vector<8x64xf32>
    %303 = arith.addf %302, %301 : vector<8x64xf32>
    %304 = arith.divf %302, %303 : vector<8x64xf32>
    %305 = arith.mulf %296, %254 : vector<8x64xf32>
    %306 = arith.mulf %290, %298 : vector<8x64xf32>
    %307 = arith.addf %305, %306 : vector<8x64xf32>
    %308 = math.tanh %307 : vector<8x64xf32>
    %309 = arith.mulf %304, %308 : vector<8x64xf32>
    %310 = arith.mulf %282, %309 : vector<8x64xf32>
    %cst_74 = arith.constant 1.000000e+00 : f32
    %311 = vector.broadcast %cst_74 : f32 to vector<8x64xf32>
    %312 = arith.subf %311, %282 : vector<8x64xf32>
    %313 = arith.mulf %312, %249 : vector<8x64xf32>
    %314 = arith.addf %310, %313 : vector<8x64xf32>
    %315 = arith.mulf %282, %307 : vector<8x64xf32>
    %cst_75 = arith.constant 1.000000e+00 : f32
    %316 = vector.broadcast %cst_75 : f32 to vector<8x64xf32>
    %317 = arith.subf %316, %282 : vector<8x64xf32>
    %318 = arith.mulf %317, %254 : vector<8x64xf32>
    %319 = arith.addf %315, %318 : vector<8x64xf32>
    %320 = vector.extract_strided_slice %314 {offsets = [0, 0], sizes = [8, 32], strides = [1, 1]} : vector<8x64xf32> to vector<8x32xf32>
    %321 = vector.broadcast %276 : vector<8x1xf32> to vector<8x32xf32>
    %322 = arith.mulf %320, %321 : vector<8x32xf32>
    %323 = arith.index_cast %c4_i32 : i32 to index
    %c0_76 = arith.constant 0 : index
    %c0_77 = arith.constant 0 : index
    %324 = vector.load %arg4[%323, %c0_76, %c0_77] : memref<8x8x32xf32, #tpu.memory_space<vmem>>, vector<1x8x32xf32>
    %325 = vector.shape_cast %324 : vector<1x8x32xf32> to vector<8x32xf32>
    %326 = vector.shape_cast %322 : vector<8x32xf32> to vector<1x8x32xf32>
    tpu.vector_store %arg4[%323, %c0_76, %c0_77], %326 {strides = array<i32>} : memref<8x8x32xf32, #tpu.memory_space<vmem>>, vector<1x8x32xf32>,
    %327 = vector.extract_strided_slice %314 {offsets = [0, 32], sizes = [8, 32], strides = [1, 1]} : vector<8x64xf32> to vector<8x32xf32>
    %328 = vector.broadcast %277 : vector<8x1xf32> to vector<8x32xf32>
    %329 = arith.mulf %327, %328 : vector<8x32xf32>
    %330 = arith.index_cast %269 : i32 to index
    %c0_78 = arith.constant 0 : index
    %c0_79 = arith.constant 0 : index
    %331 = vector.load %arg5[%330, %c0_78, %c0_79] : memref<8x8x32xf32, #tpu.memory_space<vmem>>, vector<1x8x32xf32>
    %332 = vector.shape_cast %331 : vector<1x8x32xf32> to vector<8x32xf32>
    %333 = vector.shape_cast %329 : vector<8x32xf32> to vector<1x8x32xf32>
    tpu.vector_store %arg5[%330, %c0_78, %c0_79], %333 {strides = array<i32>} : memref<8x8x32xf32, #tpu.memory_space<vmem>>, vector<1x8x32xf32>,
    %c5_i32 = arith.constant 5 : i32
    %c7_i32_80 = arith.constant 7 : i32
    %334 = arith.subi %c7_i32_80, %c5_i32 : i32
    %335 = arith.index_cast %c5_i32 : i32 to index
    %c0_81 = arith.constant 0 : index
    %c0_82 = arith.constant 0 : index
    %336 = vector.load %arg1[%335, %c0_81, %c0_82] : memref<8x8x256xf32, #tpu.memory_space<vmem>>, vector<1x8x256xf32>
    %337 = vector.shape_cast %336 : vector<1x8x256xf32> to vector<8x256xf32>
    %338 = arith.index_cast %c5_i32 : i32 to index
    %c0_83 = arith.constant 0 : index
    %c0_84 = arith.constant 0 : index
    %339 = vector.load %arg2[%338, %c0_83, %c0_84] : memref<8x8x2xf32, #tpu.memory_space<vmem>>, vector<1x8x2xf32>
    %340 = vector.shape_cast %339 : vector<1x8x2xf32> to vector<8x2xf32>
    %341 = vector.extract_strided_slice %340 {offsets = [0, 0], sizes = [8, 1], strides = [1, 1]} : vector<8x2xf32> to vector<8x1xf32>
    %342 = vector.extract_strided_slice %340 {offsets = [0, 1], sizes = [8, 1], strides = [1, 1]} : vector<8x2xf32> to vector<8x1xf32>
    %343 = vector.shape_cast %341 : vector<8x1xf32> to vector<8x1xf32>
    %344 = vector.broadcast %343 : vector<8x1xf32> to vector<8x64xf32>
    %345 = vector.shape_cast %342 : vector<8x1xf32> to vector<8x1xf32>
    %346 = vector.broadcast %345 : vector<8x1xf32> to vector<8x64xf32>
    %347 = arith.select %5, %344, %346 : vector<8x64xi1>, vector<8x64xf32>
    %cst_85 = arith.constant dense<0.000000e+00> : vector<8x256xf32>
    %348 = tpu.matmul %314, %6, %cst_85 {dimension_numbers = #tpu.dot_dimension_numbers<[1], [0], [0], [1], [0, 0, 1, 1], [], []>} : vector<8x64xf32>, vector<64x256xf32>, vector<8x256xf32> -> vector<8x256xf32>
    %349 = arith.addf %337, %348 : vector<8x256xf32>
    %350 = vector.extract_strided_slice %349 {offsets = [0, 0], sizes = [8, 64], strides = [1, 1]} : vector<8x256xf32> to vector<8x64xf32>
    %351 = arith.negf %350 : vector<8x64xf32>
    %352 = math.exp %351 : vector<8x64xf32>
    %cst_86 = arith.constant 1.000000e+00 : f32
    %353 = vector.broadcast %cst_86 : f32 to vector<8x64xf32>
    %354 = arith.addf %353, %352 : vector<8x64xf32>
    %355 = arith.divf %353, %354 : vector<8x64xf32>
    %356 = vector.extract_strided_slice %349 {offsets = [0, 64], sizes = [8, 64], strides = [1, 1]} : vector<8x256xf32> to vector<8x64xf32>
    %357 = arith.negf %356 : vector<8x64xf32>
    %358 = math.exp %357 : vector<8x64xf32>
    %cst_87 = arith.constant 1.000000e+00 : f32
    %359 = vector.broadcast %cst_87 : f32 to vector<8x64xf32>
    %360 = arith.addf %359, %358 : vector<8x64xf32>
    %361 = arith.divf %359, %360 : vector<8x64xf32>
    %362 = vector.extract_strided_slice %349 {offsets = [0, 128], sizes = [8, 64], strides = [1, 1]} : vector<8x256xf32> to vector<8x64xf32>
    %363 = math.tanh %362 : vector<8x64xf32>
    %364 = vector.extract_strided_slice %349 {offsets = [0, 192], sizes = [8, 64], strides = [1, 1]} : vector<8x256xf32> to vector<8x64xf32>
    %365 = arith.negf %364 : vector<8x64xf32>
    %366 = math.exp %365 : vector<8x64xf32>
    %cst_88 = arith.constant 1.000000e+00 : f32
    %367 = vector.broadcast %cst_88 : f32 to vector<8x64xf32>
    %368 = arith.addf %367, %366 : vector<8x64xf32>
    %369 = arith.divf %367, %368 : vector<8x64xf32>
    %370 = arith.mulf %361, %319 : vector<8x64xf32>
    %371 = arith.mulf %355, %363 : vector<8x64xf32>
    %372 = arith.addf %370, %371 : vector<8x64xf32>
    %373 = math.tanh %372 : vector<8x64xf32>
    %374 = arith.mulf %369, %373 : vector<8x64xf32>
    %375 = arith.mulf %347, %374 : vector<8x64xf32>
    %cst_89 = arith.constant 1.000000e+00 : f32
    %376 = vector.broadcast %cst_89 : f32 to vector<8x64xf32>
    %377 = arith.subf %376, %347 : vector<8x64xf32>
    %378 = arith.mulf %377, %314 : vector<8x64xf32>
    %379 = arith.addf %375, %378 : vector<8x64xf32>
    %380 = arith.mulf %347, %372 : vector<8x64xf32>
    %cst_90 = arith.constant 1.000000e+00 : f32
    %381 = vector.broadcast %cst_90 : f32 to vector<8x64xf32>
    %382 = arith.subf %381, %347 : vector<8x64xf32>
    %383 = arith.mulf %382, %319 : vector<8x64xf32>
    %384 = arith.addf %380, %383 : vector<8x64xf32>
    %385 = vector.extract_strided_slice %379 {offsets = [0, 0], sizes = [8, 32], strides = [1, 1]} : vector<8x64xf32> to vector<8x32xf32>
    %386 = vector.broadcast %341 : vector<8x1xf32> to vector<8x32xf32>
    %387 = arith.mulf %385, %386 : vector<8x32xf32>
    %388 = arith.index_cast %c5_i32 : i32 to index
    %c0_91 = arith.constant 0 : index
    %c0_92 = arith.constant 0 : index
    %389 = vector.load %arg4[%388, %c0_91, %c0_92] : memref<8x8x32xf32, #tpu.memory_space<vmem>>, vector<1x8x32xf32>
    %390 = vector.shape_cast %389 : vector<1x8x32xf32> to vector<8x32xf32>
    %391 = vector.shape_cast %387 : vector<8x32xf32> to vector<1x8x32xf32>
    tpu.vector_store %arg4[%388, %c0_91, %c0_92], %391 {strides = array<i32>} : memref<8x8x32xf32, #tpu.memory_space<vmem>>, vector<1x8x32xf32>,
    %392 = vector.extract_strided_slice %379 {offsets = [0, 32], sizes = [8, 32], strides = [1, 1]} : vector<8x64xf32> to vector<8x32xf32>
    %393 = vector.broadcast %342 : vector<8x1xf32> to vector<8x32xf32>
    %394 = arith.mulf %392, %393 : vector<8x32xf32>
    %395 = arith.index_cast %334 : i32 to index
    %c0_93 = arith.constant 0 : index
    %c0_94 = arith.constant 0 : index
    %396 = vector.load %arg5[%395, %c0_93, %c0_94] : memref<8x8x32xf32, #tpu.memory_space<vmem>>, vector<1x8x32xf32>
    %397 = vector.shape_cast %396 : vector<1x8x32xf32> to vector<8x32xf32>
    %398 = vector.shape_cast %394 : vector<8x32xf32> to vector<1x8x32xf32>
    tpu.vector_store %arg5[%395, %c0_93, %c0_94], %398 {strides = array<i32>} : memref<8x8x32xf32, #tpu.memory_space<vmem>>, vector<1x8x32xf32>,
    %c6_i32 = arith.constant 6 : i32
    %c7_i32_95 = arith.constant 7 : i32
    %399 = arith.subi %c7_i32_95, %c6_i32 : i32
    %400 = arith.index_cast %c6_i32 : i32 to index
    %c0_96 = arith.constant 0 : index
    %c0_97 = arith.constant 0 : index
    %401 = vector.load %arg1[%400, %c0_96, %c0_97] : memref<8x8x256xf32, #tpu.memory_space<vmem>>, vector<1x8x256xf32>
    %402 = vector.shape_cast %401 : vector<1x8x256xf32> to vector<8x256xf32>
    %403 = arith.index_cast %c6_i32 : i32 to index
    %c0_98 = arith.constant 0 : index
    %c0_99 = arith.constant 0 : index
    %404 = vector.load %arg2[%403, %c0_98, %c0_99] : memref<8x8x2xf32, #tpu.memory_space<vmem>>, vector<1x8x2xf32>
    %405 = vector.shape_cast %404 : vector<1x8x2xf32> to vector<8x2xf32>
    %406 = vector.extract_strided_slice %405 {offsets = [0, 0], sizes = [8, 1], strides = [1, 1]} : vector<8x2xf32> to vector<8x1xf32>
    %407 = vector.extract_strided_slice %405 {offsets = [0, 1], sizes = [8, 1], strides = [1, 1]} : vector<8x2xf32> to vector<8x1xf32>
    %408 = vector.shape_cast %406 : vector<8x1xf32> to vector<8x1xf32>
    %409 = vector.broadcast %408 : vector<8x1xf32> to vector<8x64xf32>
    %410 = vector.shape_cast %407 : vector<8x1xf32> to vector<8x1xf32>
    %411 = vector.broadcast %410 : vector<8x1xf32> to vector<8x64xf32>
    %412 = arith.select %5, %409, %411 : vector<8x64xi1>, vector<8x64xf32>
    %cst_100 = arith.constant dense<0.000000e+00> : vector<8x256xf32>
    %413 = tpu.matmul %379, %6, %cst_100 {dimension_numbers = #tpu.dot_dimension_numbers<[1], [0], [0], [1], [0, 0, 1, 1], [], []>} : vector<8x64xf32>, vector<64x256xf32>, vector<8x256xf32> -> vector<8x256xf32>
    %414 = arith.addf %402, %413 : vector<8x256xf32>
    %415 = vector.extract_strided_slice %414 {offsets = [0, 0], sizes = [8, 64], strides = [1, 1]} : vector<8x256xf32> to vector<8x64xf32>
    %416 = arith.negf %415 : vector<8x64xf32>
    %417 = math.exp %416 : vector<8x64xf32>
    %cst_101 = arith.constant 1.000000e+00 : f32
    %418 = vector.broadcast %cst_101 : f32 to vector<8x64xf32>
    %419 = arith.addf %418, %417 : vector<8x64xf32>
    %420 = arith.divf %418, %419 : vector<8x64xf32>
    %421 = vector.extract_strided_slice %414 {offsets = [0, 64], sizes = [8, 64], strides = [1, 1]} : vector<8x256xf32> to vector<8x64xf32>
    %422 = arith.negf %421 : vector<8x64xf32>
    %423 = math.exp %422 : vector<8x64xf32>
    %cst_102 = arith.constant 1.000000e+00 : f32
    %424 = vector.broadcast %cst_102 : f32 to vector<8x64xf32>
    %425 = arith.addf %424, %423 : vector<8x64xf32>
    %426 = arith.divf %424, %425 : vector<8x64xf32>
    %427 = vector.extract_strided_slice %414 {offsets = [0, 128], sizes = [8, 64], strides = [1, 1]} : vector<8x256xf32> to vector<8x64xf32>
    %428 = math.tanh %427 : vector<8x64xf32>
    %429 = vector.extract_strided_slice %414 {offsets = [0, 192], sizes = [8, 64], strides = [1, 1]} : vector<8x256xf32> to vector<8x64xf32>
    %430 = arith.negf %429 : vector<8x64xf32>
    %431 = math.exp %430 : vector<8x64xf32>
    %cst_103 = arith.constant 1.000000e+00 : f32
    %432 = vector.broadcast %cst_103 : f32 to vector<8x64xf32>
    %433 = arith.addf %432, %431 : vector<8x64xf32>
    %434 = arith.divf %432, %433 : vector<8x64xf32>
    %435 = arith.mulf %426, %384 : vector<8x64xf32>
    %436 = arith.mulf %420, %428 : vector<8x64xf32>
    %437 = arith.addf %435, %436 : vector<8x64xf32>
    %438 = math.tanh %437 : vector<8x64xf32>
    %439 = arith.mulf %434, %438 : vector<8x64xf32>
    %440 = arith.mulf %412, %439 : vector<8x64xf32>
    %cst_104 = arith.constant 1.000000e+00 : f32
    %441 = vector.broadcast %cst_104 : f32 to vector<8x64xf32>
    %442 = arith.subf %441, %412 : vector<8x64xf32>
    %443 = arith.mulf %442, %379 : vector<8x64xf32>
    %444 = arith.addf %440, %443 : vector<8x64xf32>
    %445 = arith.mulf %412, %437 : vector<8x64xf32>
    %cst_105 = arith.constant 1.000000e+00 : f32
    %446 = vector.broadcast %cst_105 : f32 to vector<8x64xf32>
    %447 = arith.subf %446, %412 : vector<8x64xf32>
    %448 = arith.mulf %447, %384 : vector<8x64xf32>
    %449 = arith.addf %445, %448 : vector<8x64xf32>
    %450 = vector.extract_strided_slice %444 {offsets = [0, 0], sizes = [8, 32], strides = [1, 1]} : vector<8x64xf32> to vector<8x32xf32>
    %451 = vector.broadcast %406 : vector<8x1xf32> to vector<8x32xf32>
    %452 = arith.mulf %450, %451 : vector<8x32xf32>
    %453 = arith.index_cast %c6_i32 : i32 to index
    %c0_106 = arith.constant 0 : index
    %c0_107 = arith.constant 0 : index
    %454 = vector.load %arg4[%453, %c0_106, %c0_107] : memref<8x8x32xf32, #tpu.memory_space<vmem>>, vector<1x8x32xf32>
    %455 = vector.shape_cast %454 : vector<1x8x32xf32> to vector<8x32xf32>
    %456 = vector.shape_cast %452 : vector<8x32xf32> to vector<1x8x32xf32>
    tpu.vector_store %arg4[%453, %c0_106, %c0_107], %456 {strides = array<i32>} : memref<8x8x32xf32, #tpu.memory_space<vmem>>, vector<1x8x32xf32>,
    %457 = vector.extract_strided_slice %444 {offsets = [0, 32], sizes = [8, 32], strides = [1, 1]} : vector<8x64xf32> to vector<8x32xf32>
    %458 = vector.broadcast %407 : vector<8x1xf32> to vector<8x32xf32>
    %459 = arith.mulf %457, %458 : vector<8x32xf32>
    %460 = arith.index_cast %399 : i32 to index
    %c0_108 = arith.constant 0 : index
    %c0_109 = arith.constant 0 : index
    %461 = vector.load %arg5[%460, %c0_108, %c0_109] : memref<8x8x32xf32, #tpu.memory_space<vmem>>, vector<1x8x32xf32>
    %462 = vector.shape_cast %461 : vector<1x8x32xf32> to vector<8x32xf32>
    %463 = vector.shape_cast %459 : vector<8x32xf32> to vector<1x8x32xf32>
    tpu.vector_store %arg5[%460, %c0_108, %c0_109], %463 {strides = array<i32>} : memref<8x8x32xf32, #tpu.memory_space<vmem>>, vector<1x8x32xf32>,
    %c7_i32_110 = arith.constant 7 : i32
    %c7_i32_111 = arith.constant 7 : i32
    %464 = arith.subi %c7_i32_111, %c7_i32_110 : i32
    %465 = arith.index_cast %c7_i32_110 : i32 to index
    %c0_112 = arith.constant 0 : index
    %c0_113 = arith.constant 0 : index
    %466 = vector.load %arg1[%465, %c0_112, %c0_113] : memref<8x8x256xf32, #tpu.memory_space<vmem>>, vector<1x8x256xf32>
    %467 = vector.shape_cast %466 : vector<1x8x256xf32> to vector<8x256xf32>
    %468 = arith.index_cast %c7_i32_110 : i32 to index
    %c0_114 = arith.constant 0 : index
    %c0_115 = arith.constant 0 : index
    %469 = vector.load %arg2[%468, %c0_114, %c0_115] : memref<8x8x2xf32, #tpu.memory_space<vmem>>, vector<1x8x2xf32>
    %470 = vector.shape_cast %469 : vector<1x8x2xf32> to vector<8x2xf32>
    %471 = vector.extract_strided_slice %470 {offsets = [0, 0], sizes = [8, 1], strides = [1, 1]} : vector<8x2xf32> to vector<8x1xf32>
    %472 = vector.extract_strided_slice %470 {offsets = [0, 1], sizes = [8, 1], strides = [1, 1]} : vector<8x2xf32> to vector<8x1xf32>
    %473 = vector.shape_cast %471 : vector<8x1xf32> to vector<8x1xf32>
    %474 = vector.broadcast %473 : vector<8x1xf32> to vector<8x64xf32>
    %475 = vector.shape_cast %472 : vector<8x1xf32> to vector<8x1xf32>
    %476 = vector.broadcast %475 : vector<8x1xf32> to vector<8x64xf32>
    %477 = arith.select %5, %474, %476 : vector<8x64xi1>, vector<8x64xf32>
    %cst_116 = arith.constant dense<0.000000e+00> : vector<8x256xf32>
    %478 = tpu.matmul %444, %6, %cst_116 {dimension_numbers = #tpu.dot_dimension_numbers<[1], [0], [0], [1], [0, 0, 1, 1], [], []>} : vector<8x64xf32>, vector<64x256xf32>, vector<8x256xf32> -> vector<8x256xf32>
    %479 = arith.addf %467, %478 : vector<8x256xf32>
    %480 = vector.extract_strided_slice %479 {offsets = [0, 0], sizes = [8, 64], strides = [1, 1]} : vector<8x256xf32> to vector<8x64xf32>
    %481 = arith.negf %480 : vector<8x64xf32>
    %482 = math.exp %481 : vector<8x64xf32>
    %cst_117 = arith.constant 1.000000e+00 : f32
    %483 = vector.broadcast %cst_117 : f32 to vector<8x64xf32>
    %484 = arith.addf %483, %482 : vector<8x64xf32>
    %485 = arith.divf %483, %484 : vector<8x64xf32>
    %486 = vector.extract_strided_slice %479 {offsets = [0, 64], sizes = [8, 64], strides = [1, 1]} : vector<8x256xf32> to vector<8x64xf32>
    %487 = arith.negf %486 : vector<8x64xf32>
    %488 = math.exp %487 : vector<8x64xf32>
    %cst_118 = arith.constant 1.000000e+00 : f32
    %489 = vector.broadcast %cst_118 : f32 to vector<8x64xf32>
    %490 = arith.addf %489, %488 : vector<8x64xf32>
    %491 = arith.divf %489, %490 : vector<8x64xf32>
    %492 = vector.extract_strided_slice %479 {offsets = [0, 128], sizes = [8, 64], strides = [1, 1]} : vector<8x256xf32> to vector<8x64xf32>
    %493 = math.tanh %492 : vector<8x64xf32>
    %494 = vector.extract_strided_slice %479 {offsets = [0, 192], sizes = [8, 64], strides = [1, 1]} : vector<8x256xf32> to vector<8x64xf32>
    %495 = arith.negf %494 : vector<8x64xf32>
    %496 = math.exp %495 : vector<8x64xf32>
    %cst_119 = arith.constant 1.000000e+00 : f32
    %497 = vector.broadcast %cst_119 : f32 to vector<8x64xf32>
    %498 = arith.addf %497, %496 : vector<8x64xf32>
    %499 = arith.divf %497, %498 : vector<8x64xf32>
    %500 = arith.mulf %491, %449 : vector<8x64xf32>
    %501 = arith.mulf %485, %493 : vector<8x64xf32>
    %502 = arith.addf %500, %501 : vector<8x64xf32>
    %503 = math.tanh %502 : vector<8x64xf32>
    %504 = arith.mulf %499, %503 : vector<8x64xf32>
    %505 = arith.mulf %477, %504 : vector<8x64xf32>
    %cst_120 = arith.constant 1.000000e+00 : f32
    %506 = vector.broadcast %cst_120 : f32 to vector<8x64xf32>
    %507 = arith.subf %506, %477 : vector<8x64xf32>
    %508 = arith.mulf %507, %444 : vector<8x64xf32>
    %509 = arith.addf %505, %508 : vector<8x64xf32>
    %510 = arith.mulf %477, %502 : vector<8x64xf32>
    %cst_121 = arith.constant 1.000000e+00 : f32
    %511 = vector.broadcast %cst_121 : f32 to vector<8x64xf32>
    %512 = arith.subf %511, %477 : vector<8x64xf32>
    %513 = arith.mulf %512, %449 : vector<8x64xf32>
    %514 = arith.addf %510, %513 : vector<8x64xf32>
    %515 = vector.extract_strided_slice %509 {offsets = [0, 0], sizes = [8, 32], strides = [1, 1]} : vector<8x64xf32> to vector<8x32xf32>
    %516 = vector.broadcast %471 : vector<8x1xf32> to vector<8x32xf32>
    %517 = arith.mulf %515, %516 : vector<8x32xf32>
    %518 = arith.index_cast %c7_i32_110 : i32 to index
    %c0_122 = arith.constant 0 : index
    %c0_123 = arith.constant 0 : index
    %519 = vector.load %arg4[%518, %c0_122, %c0_123] : memref<8x8x32xf32, #tpu.memory_space<vmem>>, vector<1x8x32xf32>
    %520 = vector.shape_cast %519 : vector<1x8x32xf32> to vector<8x32xf32>
    %521 = vector.shape_cast %517 : vector<8x32xf32> to vector<1x8x32xf32>
    tpu.vector_store %arg4[%518, %c0_122, %c0_123], %521 {strides = array<i32>} : memref<8x8x32xf32, #tpu.memory_space<vmem>>, vector<1x8x32xf32>,
    %522 = vector.extract_strided_slice %509 {offsets = [0, 32], sizes = [8, 32], strides = [1, 1]} : vector<8x64xf32> to vector<8x32xf32>
    %523 = vector.broadcast %472 : vector<8x1xf32> to vector<8x32xf32>
    %524 = arith.mulf %522, %523 : vector<8x32xf32>
    %525 = arith.index_cast %464 : i32 to index
    %c0_124 = arith.constant 0 : index
    %c0_125 = arith.constant 0 : index
    %526 = vector.load %arg5[%525, %c0_124, %c0_125] : memref<8x8x32xf32, #tpu.memory_space<vmem>>, vector<1x8x32xf32>
    %527 = vector.shape_cast %526 : vector<1x8x32xf32> to vector<8x32xf32>
    %528 = vector.shape_cast %524 : vector<8x32xf32> to vector<1x8x32xf32>
    tpu.vector_store %arg5[%525, %c0_124, %c0_125], %528 {strides = array<i32>} : memref<8x8x32xf32, #tpu.memory_space<vmem>>, vector<1x8x32xf32>,
    %c8_i32 = arith.constant 8 : i32
    %c0_126 = arith.constant 0 : index
    %c0_127 = arith.constant 0 : index
    %529 = vector.load %arg6[%c0_126, %c0_127] : memref<8x64xf32, #tpu.memory_space<vmem>>, vector<8x64xf32>
    tpu.vector_store %arg6[%c0_126, %c0_127], %509 {strides = array<i32>} : memref<8x64xf32, #tpu.memory_space<vmem>>, vector<8x64xf32>,
    %c0_128 = arith.constant 0 : index
    %c0_129 = arith.constant 0 : index
    %530 = vector.load %arg7[%c0_128, %c0_129] : memref<8x64xf32, #tpu.memory_space<vmem>>, vector<8x64xf32>
    tpu.vector_store %arg7[%c0_128, %c0_129], %514 {strides = array<i32>} : memref<8x64xf32, #tpu.memory_space<vmem>>, vector<8x64xf32>,
    return
  }
  func.func @transform_0(%arg0: i32) -> (i32, i32, i32) {
    %c0_i32 = arith.constant 0 : i32
    %c0_i32_0 = arith.constant 0 : i32
    %c0_i32_1 = arith.constant 0 : i32
    return %arg0, %c0_i32, %c0_i32_0 : i32, i32, i32
  }
  func.func @transform_1(%arg0: i32) -> (i32, i32, i32) {
    %c0_i32 = arith.constant 0 : i32
    %c0_i32_0 = arith.constant 0 : i32
    %c0_i32_1 = arith.constant 0 : i32
    return %arg0, %c0_i32, %c0_i32_0 : i32, i32, i32
  }
  func.func @transform_2(%arg0: i32) -> (i32, i32) {
    %c0_i32 = arith.constant 0 : i32
    %c0_i32_0 = arith.constant 0 : i32
    %c0_i32_1 = arith.constant 0 : i32
    return %c0_i32, %c0_i32_0 : i32, i32
  }
  func.func @transform_3(%arg0: i32) -> (i32, i32, i32) {
    %c0_i32 = arith.constant 0 : i32
    %c0_i32_0 = arith.constant 0 : i32
    %c0_i32_1 = arith.constant 0 : i32
    return %arg0, %c0_i32, %c0_i32_0 : i32, i32, i32
  }
  func.func @transform_4(%arg0: i32) -> (i32, i32, i32) {
    %c0_i32 = arith.constant 0 : i32
    %0 = arith.subi %c0_i32, %arg0 : i32
    %c0_i32_0 = arith.constant 0 : i32
    %c0_i32_1 = arith.constant 0 : i32
    %c0_i32_2 = arith.constant 0 : i32
    return %0, %c0_i32_0, %c0_i32_1 : i32, i32, i32
  }
}

module attributes {stable_mosaic.version = 11 : i64} {
  func.func @_classifier_kernel(%arg0: i32, %arg1: memref<64x32xf32, #tpu.memory_space<vmem>>, %arg2: memref<64x32xf32, #tpu.memory_space<vmem>>, %arg3: memref<64x1xi32, #tpu.memory_space<vmem>>, %arg4: memref<64x1xf32, #tpu.memory_space<vmem>>, %arg5: memref<64x128xbf16, #tpu.memory_space<vmem>>, %arg6: memref<1x128xf32, #tpu.memory_space<vmem>>, %arg7: memref<64x1xi32, #tpu.memory_space<vmem>>, %arg8: memref<8x128xf32, #tpu.memory_space<vmem>>) attributes {dimension_semantics = [#tpu.dimension_semantics<parallel>], iteration_bounds = array<i64: 1>, scalar_prefetch = 0 : i64, scratch_operands = 0 : i64, tpu.core_type = #tpu.core_type<tc>, window_params = [{transform_indices = @transform_0, window_bounds = array<i64: 64, 32>}, {transform_indices = @transform_1, window_bounds = array<i64: 64, 32>}, {transform_indices = @transform_2, window_bounds = array<i64: 64, 1>}, {transform_indices = @transform_3, window_bounds = array<i64: 64, 1>}, {pipeline_mode = #tpu.pipeline_mode<synchronous>, transform_indices = @transform_4, window_bounds = array<i64: 64, 128>}, {pipeline_mode = #tpu.pipeline_mode<synchronous>, transform_indices = @transform_5, window_bounds = array<i64: 1, 128>}, {transform_indices = @transform_6, window_bounds = array<i64: 64, 1>}, {transform_indices = @transform_7, window_bounds = array<i64: 8, 128>}]} {
    %c0 = arith.constant 0 : index
    %c0_0 = arith.constant 0 : index
    %0 = vector.load %arg1[%c0, %c0_0] : memref<64x32xf32, #tpu.memory_space<vmem>>, vector<64x32xf32>
    %c0_1 = arith.constant 0 : index
    %c0_2 = arith.constant 0 : index
    %1 = vector.load %arg2[%c0_1, %c0_2] : memref<64x32xf32, #tpu.memory_space<vmem>>, vector<64x32xf32>
    %2 = tpu.concatenate %0, %1 in 1 : vector<64x32xf32>, vector<64x32xf32> -> vector<64x64xf32>
    %3 = arith.truncf %2 : vector<64x64xf32> to vector<64x64xbf16>
    %c0_3 = arith.constant 0 : index
    %c0_4 = arith.constant 0 : index
    %4 = vector.load %arg5[%c0_3, %c0_4] : memref<64x128xbf16, #tpu.memory_space<vmem>>, vector<64x128xbf16>
    %cst = arith.constant dense<0.000000e+00> : vector<64x128xf32>
    %5 = tpu.matmul %3, %4, %cst {dimension_numbers = #tpu.dot_dimension_numbers<[1], [0], [0], [1], [0, 0, 1, 1], [], []>} : vector<64x64xbf16>, vector<64x128xbf16>, vector<64x128xf32> -> vector<64x128xf32>
    %c0_5 = arith.constant 0 : index
    %c0_6 = arith.constant 0 : index
    %6 = vector.load %arg6[%c0_5, %c0_6] : memref<1x128xf32, #tpu.memory_space<vmem>>, vector<1x128xf32>
    %7 = vector.broadcast %6 : vector<1x128xf32> to vector<64x128xf32>
    %8 = arith.addf %5, %7 : vector<64x128xf32>
    %cst_7 = arith.constant dense<0xFF800000> : vector<64xf32>
    %9 = vector.multi_reduction <maximumf>, %8, %cst_7 [1] : vector<64x128xf32> to vector<64xf32>
    %10 = vector.shape_cast %9 : vector<64xf32> to vector<64x1xf32>
    %11 = tpu.iota {dimensions = array<i32: 1>} : vector<64x128xi32>
    %12 = vector.broadcast %10 : vector<64x1xf32> to vector<64x128xf32>
    %13 = arith.cmpf oeq, %8, %12 : vector<64x128xf32>
    %c128_i32 = arith.constant 128 : i32
    %14 = vector.broadcast %c128_i32 : i32 to vector<64x128xi32>
    %15 = arith.select %13, %11, %14 : vector<64x128xi1>, vector<64x128xi32>
    %cst_8 = arith.constant dense<2147483647> : vector<64xi32>
    %16 = vector.multi_reduction <minsi>, %15, %cst_8 [1] : vector<64x128xi32> to vector<64xi32>
    %17 = vector.shape_cast %16 : vector<64xi32> to vector<64x1xi32>
    %c0_9 = arith.constant 0 : index
    %c0_10 = arith.constant 0 : index
    %18 = vector.load %arg7[%c0_9, %c0_10] : memref<64x1xi32, #tpu.memory_space<vmem>>, vector<64x1xi32>
    tpu.vector_store %arg7[%c0_9, %c0_10], %17 {strides = array<i32>} : memref<64x1xi32, #tpu.memory_space<vmem>>, vector<64x1xi32>,
    %c0_11 = arith.constant 0 : index
    %c0_12 = arith.constant 0 : index
    %19 = vector.load %arg3[%c0_11, %c0_12] : memref<64x1xi32, #tpu.memory_space<vmem>>, vector<64x1xi32>
    %20 = vector.broadcast %10 : vector<64x1xf32> to vector<64x128xf32>
    %21 = arith.subf %8, %20 : vector<64x128xf32>
    %22 = math.exp %21 : vector<64x128xf32>
    %cst_13 = arith.constant dense<0.000000e+00> : vector<64xf32>
    %23 = vector.multi_reduction <add>, %22, %cst_13 [1] : vector<64x128xf32> to vector<64xf32>
    %24 = vector.shape_cast %23 : vector<64xf32> to vector<64x1xf32>
    %25 = math.log %24 : vector<64x1xf32>
    %26 = arith.addf %10, %25 : vector<64x1xf32>
    %27 = vector.broadcast %19 : vector<64x1xi32> to vector<64x128xi32>
    %28 = arith.cmpi eq, %11, %27 : vector<64x128xi32>
    %cst_14 = arith.constant 0.000000e+00 : f32
    %29 = vector.broadcast %cst_14 : f32 to vector<64x128xf32>
    %30 = arith.select %28, %8, %29 : vector<64x128xi1>, vector<64x128xf32>
    %cst_15 = arith.constant dense<0.000000e+00> : vector<64xf32>
    %31 = vector.multi_reduction <add>, %30, %cst_15 [1] : vector<64x128xf32> to vector<64xf32>
    %32 = vector.shape_cast %31 : vector<64xf32> to vector<64x1xf32>
    %33 = arith.subf %26, %32 : vector<64x1xf32>
    %c0_16 = arith.constant 0 : index
    %c0_17 = arith.constant 0 : index
    %34 = vector.load %arg4[%c0_16, %c0_17] : memref<64x1xf32, #tpu.memory_space<vmem>>, vector<64x1xf32>
    %35 = arith.mulf %33, %34 : vector<64x1xf32>
    %36 = vector.shape_cast %35 : vector<64x1xf32> to vector<1x64x1xf32>
    %cst_18 = arith.constant dense<0.000000e+00> : vector<1xf32>
    %37 = vector.multi_reduction <add>, %36, %cst_18 [1, 2] : vector<1x64x1xf32> to vector<1xf32>
    %38 = vector.shape_cast %37 : vector<1xf32> to vector<1x1x1xf32>
    %39 = vector.extract %38[0, 0, 0] : f32 from vector<1x1x1xf32>
    %40 = tpu.iota {dimensions = array<i32: 0>} : vector<8x128xi32>
    %41 = tpu.iota {dimensions = array<i32: 1>} : vector<8x128xi32>
    %c0_i32 = arith.constant 0 : i32
    %42 = vector.broadcast %c0_i32 : i32 to vector<8x128xi32>
    %43 = arith.cmpi eq, %40, %42 : vector<8x128xi32>
    %c0_i32_19 = arith.constant 0 : i32
    %44 = vector.broadcast %c0_i32_19 : i32 to vector<8x128xi32>
    %45 = arith.cmpi eq, %41, %44 : vector<8x128xi32>
    %46 = arith.andi %43, %45 : vector<8x128xi1>
    %cst_20 = arith.constant 0.000000e+00 : f32
    %47 = vector.broadcast %39 : f32 to vector<8x128xf32>
    %48 = vector.broadcast %cst_20 : f32 to vector<8x128xf32>
    %49 = arith.select %46, %47, %48 : vector<8x128xi1>, vector<8x128xf32>
    %c0_21 = arith.constant 0 : index
    %c0_22 = arith.constant 0 : index
    %50 = vector.load %arg8[%c0_21, %c0_22] : memref<8x128xf32, #tpu.memory_space<vmem>>, vector<8x128xf32>
    tpu.vector_store %arg8[%c0_21, %c0_22], %49 {strides = array<i32>} : memref<8x128xf32, #tpu.memory_space<vmem>>, vector<8x128xf32>,
    return
  }
  func.func @transform_0(%arg0: i32) -> (i32, i32) {
    %c0_i32 = arith.constant 0 : i32
    %c0_i32_0 = arith.constant 0 : i32
    return %arg0, %c0_i32 : i32, i32
  }
  func.func @transform_1(%arg0: i32) -> (i32, i32) {
    %c0_i32 = arith.constant 0 : i32
    %c0_i32_0 = arith.constant 0 : i32
    return %arg0, %c0_i32 : i32, i32
  }
  func.func @transform_2(%arg0: i32) -> (i32, i32) {
    %c0_i32 = arith.constant 0 : i32
    %c0_i32_0 = arith.constant 0 : i32
    return %arg0, %c0_i32 : i32, i32
  }
  func.func @transform_3(%arg0: i32) -> (i32, i32) {
    %c0_i32 = arith.constant 0 : i32
    %c0_i32_0 = arith.constant 0 : i32
    return %arg0, %c0_i32 : i32, i32
  }
  func.func @transform_4(%arg0: i32) -> (i32, i32) {
    %c0_i32 = arith.constant 0 : i32
    %c0_i32_0 = arith.constant 0 : i32
    %c0_i32_1 = arith.constant 0 : i32
    return %c0_i32, %c0_i32_0 : i32, i32
  }
  func.func @transform_5(%arg0: i32) -> (i32, i32) {
    %c0_i32 = arith.constant 0 : i32
    %c0_i32_0 = arith.constant 0 : i32
    %c0_i32_1 = arith.constant 0 : i32
    return %c0_i32, %c0_i32_0 : i32, i32
  }
  func.func @transform_6(%arg0: i32) -> (i32, i32) {
    %c0_i32 = arith.constant 0 : i32
    %c0_i32_0 = arith.constant 0 : i32
    return %arg0, %c0_i32 : i32, i32
  }
  func.func @transform_7(%arg0: i32) -> (i32, i32) {
    %c0_i32 = arith.constant 0 : i32
    %c0_i32_0 = arith.constant 0 : i32
    return %arg0, %c0_i32 : i32, i32
  }
}

</mosaic_0001>

<llo_original>
// kernel: reverse
$region0: #{reverse}
  %s0 = inlined_call_operand.vmem [shape: f32[8,8], index: 0, kind: input, shape index: {}]
  %s1 = inlined_call_operand.vmem [shape: f32[8,8], index: 1, kind: output, shape index: {}]
  $region1: #{reverse} parent=0
    #allocation0 [shape = 'u8[4096]{0}', space=vmem, size = 0x1000, scoped, tag = 'operand span for operand 0']
    #allocation1 [shape = 'u8[4096]{0}', space=vmem, size = 0x1000, scoped, tag = 'operand span for operand 1']
    // Predicated region
    $region2: #{reverse} parent=1 // pred_check
      _
    $region3: #{reverse} parent=1 // pred_check_branch
      %3 = sbr.rel (0) target = $region5
    $region4: #{reverse} parent=1 // pred_region
      // Predicated region
      $region6: #{reverse} parent=4 // pred_check
        _
      $region7: #{reverse} parent=4 // pred_check_branch
        %5 = sbr.rel (0) target = $region9
      $region8: #{reverse} parent=4 // pred_region
        // Predicated region
        $region21: #{reverse} parent=8 // pred_check
          _
        $region22: #{reverse} parent=8 // pred_check_branch
          %20 = sbr.rel (0) target = $region24
        $region23: #{reverse} parent=8 // pred_region
          loop: start=0, step=1, limit=1
          $region25: #{reverse} parent=23 // loop_pre_header
            _
          $region26: #{reverse} parent=23 // loop_header
            %s22 = sphi 0, %s26
            %p23 = scmp.ge.s32.totalorder %s22, 1
            %s27 = sphi %s0, %s0
            %s28 = sphi [#allocation0], [#allocation0]
          $region27: #{reverse} parent=23 // loop_header_branch
            %25 = sbr.rel (%p23) target = $region31
          $region28: #{reverse} parent=23 // loop_body
            %v29 = vld [vmem:[%s27] sm:$0xff]
            %30 = vst [vmem:[%s28] sm:$0xff] %v29
          $region29: #{reverse} parent=23 // loop_footer
            %s26 = sadd.s32 1, %s22
          $region30: #{reverse} parent=23 // loop_footer_branch
            %21 = sbr.rel target = $region26
          $region31: #{reverse} parent=23 // loop_exit
            _
        $region24: #{reverse} parent=8 // pred_fallthru
          _
        // Predicated region
        $region32: #{reverse} parent=8 // pred_check
          _
        $region33: #{reverse} parent=8 // pred_check_branch
          %32 = sbr.rel target = $region35
        $region34: #{reverse} parent=8 // pred_region
          _
        $region35: #{reverse} parent=8 // pred_fallthru
          _
      $region9: #{reverse} parent=4 // pred_fallthru
        _
      // Predicated region
      $region10: #{reverse} parent=4 // pred_check
        _
      $region11: #{reverse} parent=4 // pred_check_branch
        %7 = sbr.rel target = $region13
      $region12: #{reverse} parent=4 // pred_region
        loop: start=0, step=1, limit=1
        $region14: #{reverse} parent=12 // loop_pre_header
          _
        $region15: #{reverse} parent=12 // loop_header
          %s10 = sphi 0, %s14
          %p11 = scmp.ge.s32.totalorder %s10, 1
          %s15 = sphi %s0, %s0
          %s16 = sphi [#allocation0], [#allocation0]
        $region16: #{reverse} parent=12 // loop_header_branch
          %13 = sbr.rel (%p11) target = $region20
        $region17: #{reverse} parent=12 // loop_body
          %v17 = vld [vmem:[%s15] sm:$0xff]
          %18 = vst [vmem:[%s16] sm:$0xff] %v17
        $region18: #{reverse} parent=12 // loop_footer
          %s14 = sadd.s32 1, %s10
        $region19: #{reverse} parent=12 // loop_footer_branch
          %9 = sbr.rel target = $region15
        $region20: #{reverse} parent=12 // loop_exit
          _
      $region13: #{reverse} parent=4 // pred_fallthru
        _
    $region5: #{reverse} parent=1 // pred_fallthru
      _
    %33 = vnop
    %s34 = scalar_lea.vmem [#allocation0], 7
    %v35 = vld [vmem:[%s34] ss:$-1 sm:$0xff]
    %36 = vst [vmem:[#allocation1] sm:$0xff] %v35
    // Predicated region
    $region36: #{reverse} parent=1 // pred_check
      _
    $region37: #{reverse} parent=1 // pred_check_branch
      %38 = sbr.rel (0) target = $region39
    $region38: #{reverse} parent=1 // pred_region
      // Predicated region
      $region40: #{reverse} parent=38 // pred_check
        _
      $region41: #{reverse} parent=38 // pred_check_branch
        %40 = sbr.rel (0) target = $region43
      $region42: #{reverse} parent=38 // pred_region
        // Predicated region
        $region55: #{reverse} parent=42 // pred_check
          _
        $region56: #{reverse} parent=42 // pred_check_branch
          %55 = sbr.rel (0) target = $region58
        $region57: #{reverse} parent=42 // pred_region
          loop: start=0, step=1, limit=1
          $region59: #{reverse} parent=57 // loop_pre_header
            _
          $region60: #{reverse} parent=57 // loop_header
            %s57 = sphi 0, %s61
            %p58 = scmp.ge.s32.totalorder %s57, 1
            %s62 = sphi [#allocation1], [#allocation1]
            %s63 = sphi %s1, %s1
          $region61: #{reverse} parent=57 // loop_header_branch
            %60 = sbr.rel (%p58) target = $region65
          $region62: #{reverse} parent=57 // loop_body
            %v64 = vld [vmem:[%s62] sm:$0xff]
            %65 = vst [vmem:[%s63] sm:$0xff] %v64
          $region63: #{reverse} parent=57 // loop_footer
            %s61 = sadd.s32 1, %s57
          $region64: #{reverse} parent=57 // loop_footer_branch
            %56 = sbr.rel target = $region60
          $region65: #{reverse} parent=57 // loop_exit
            _
        $region58: #{reverse} parent=42 // pred_fallthru
          _
        // Predicated region
        $region66: #{reverse} parent=42 // pred_check
          _
        $region67: #{reverse} parent=42 // pred_check_branch
          %67 = sbr.rel target = $region69
        $region68: #{reverse} parent=42 // pred_region
          _
        $region69: #{reverse} parent=42 // pred_fallthru
          _
      $region43: #{reverse} parent=38 // pred_fallthru
        _
      // Predicated region
      $region44: #{reverse} parent=38 // pred_check
        _
      $region45: #{reverse} parent=38 // pred_check_branch
        %42 = sbr.rel target = $region47
      $region46: #{reverse} parent=38 // pred_region
        loop: start=0, step=1, limit=1
        $region48: #{reverse} parent=46 // loop_pre_header
          _
        $region49: #{reverse} parent=46 // loop_header
          %s45 = sphi 0, %s49
          %p46 = scmp.ge.s32.totalorder %s45, 1
          %s50 = sphi [#allocation1], [#allocation1]
          %s51 = sphi %s1, %s1
        $region50: #{reverse} parent=46 // loop_header_branch
          %48 = sbr.rel (%p46) target = $region54
        $region51: #{reverse} parent=46 // loop_body
          %v52 = vld [vmem:[%s50] sm:$0xff]
          %53 = vst [vmem:[%s51] sm:$0xff] %v52
        $region52: #{reverse} parent=46 // loop_footer
          %s49 = sadd.s32 1, %s45
        $region53: #{reverse} parent=46 // loop_footer_branch
          %44 = sbr.rel target = $region49
        $region54: #{reverse} parent=46 // loop_exit
          _
      $region47: #{reverse} parent=38 // pred_fallthru
        _
    $region39: #{reverse} parent=1 // pred_fallthru
      _
    %68 = vnop

// kernel: seq_tagger_forward.3
$region0: #{seq_tagger_forward.3}
  #allocation0 [shape = 'u32[]', space=smem, size = 0x4, offset = 0x4, fixed_abs, tag = 'smem constant byte address 0x4 - core index']
  #allocation1 [shape = 'u32[144,128]{1,0:T(1,128)}', space=vmem, size = 0x12000, scoped, tag = 'internal scratch']
  %s0 = inlined_call_operand.vmem [shape: bf16[64,32], index: 0, kind: input, shape index: {}]
  %s1 = inlined_call_operand.vmem [shape: bf16[64,32], index: 1, kind: input, shape index: {}]
  %s2 = inlined_call_operand.vmem [shape: bf16[32,128], index: 2, kind: input, shape index: {}]
  %s3 = inlined_call_operand.vmem [shape: bf16[32,128], index: 3, kind: input, shape index: {}]
  %s4 = inlined_call_operand.vmem [shape: f32[1,128], index: 4, kind: input, shape index: {}]
  %s5 = inlined_call_operand.vmem [shape: f32[1,128], index: 5, kind: input, shape index: {}]
  %s6 = inlined_call_operand.vmem [shape: f32[64,256], index: 6, kind: output, shape index: {}]
  %s7 = sld [smem:[#allocation0]]
  $region34: #{seq_tagger_forward.3} parent=0
    _
  %s9 = ssub.s32 1, %s7
  %s10 = scalar_select 0, %s9, %s7
  // Predicated region
  $region2: #{seq_tagger_forward.3} parent=0 // pred_check
    _
  $region3: #{seq_tagger_forward.3} parent=0 // pred_check_branch
    %12 = sbr.rel (0) target = $region5
  $region4: #{seq_tagger_forward.3} parent=0 // pred_region
    _
  $region5: #{seq_tagger_forward.3} parent=0 // pred_fallthru
    _
  // Predicated region
  $region6: #{seq_tagger_forward.3} parent=0 // pred_check
    _
  $region7: #{seq_tagger_forward.3} parent=0 // pred_check_branch
    %14 = sbr.rel (0) target = $region9
  $region8: #{seq_tagger_forward.3} parent=0 // pred_region
    _
  $region9: #{seq_tagger_forward.3} parent=0 // pred_fallthru
    _
  // Predicated region
  $region10: #{seq_tagger_forward.3} parent=0 // pred_check
    _
  $region11: #{seq_tagger_forward.3} parent=0 // pred_check_branch
    %16 = sbr.rel (0) target = $region13
  $region12: #{seq_tagger_forward.3} parent=0 // pred_region
    _
  $region13: #{seq_tagger_forward.3} parent=0 // pred_fallthru
    _
  // Predicated region
  $region14: #{seq_tagger_forward.3} parent=0 // pred_check
    _
  $region15: #{seq_tagger_forward.3} parent=0 // pred_check_branch
    %18 = sbr.rel (0) target = $region17
  $region16: #{seq_tagger_forward.3} parent=0 // pred_region
    _
  $region17: #{seq_tagger_forward.3} parent=0 // pred_fallthru
    _
  // Predicated region
  $region18: #{seq_tagger_forward.3} parent=0 // pred_check
    _
  $region19: #{seq_tagger_forward.3} parent=0 // pred_check_branch
    %20 = sbr.rel (0) target = $region21
  $region20: #{seq_tagger_forward.3} parent=0 // pred_region
    _
  $region21: #{seq_tagger_forward.3} parent=0 // pred_fallthru
    _
  // Predicated region
  $region22: #{seq_tagger_forward.3} parent=0 // pred_check
    _
  $region23: #{seq_tagger_forward.3} parent=0 // pred_check_branch
    %22 = sbr.rel (0) target = $region25
  $region24: #{seq_tagger_forward.3} parent=0 // pred_region
    _
  $region25: #{seq_tagger_forward.3} parent=0 // pred_fallthru
    _
  %v24 = vld [vmem:[%s0] sm:$0xf]
  %v25 = vld [vmem:[%s0 + $0x4] sm:$0xf]
  %v26 = vld [vmem:[%s0 + $0x8] sm:$0xf]
  %v27 = vld [vmem:[%s0 + $0xc] sm:$0xf]
  %v28 = vld [vmem:[%s0 + $0x10] sm:$0xf]
  %v29 = vld [vmem:[%s0 + $0x14] sm:$0xf]
  %v30 = vld [vmem:[%s0 + $0x18] sm:$0xf]
  %v31 = vld [vmem:[%s0 + $0x1c] sm:$0xf]
  %v32 = vld [vmem:[%s2] sm:$0xf]
  %v33 = vld [vmem:[%s2 + $0x4] sm:$0xf]
  %v34 = vld [vmem:[%s2 + $0x8] sm:$0xf]
  %v35 = vld [vmem:[%s2 + $0xc] sm:$0xf]
  %v36 = vld [vmem:[%s4] sm:$0x1]
  %v38 = vlaneseq
  %v39 = vshrl.u32 %v38, 7
  %v40 = vsub.s32 0, %v39
  %v41 = vrot.slane %v36, %v40
  %v51 = vunpack.c.l.b16 %v24
  %v52 = vunpack.c.l.b16 %v25
  %v53 = vunpack.c.l.b16 %v26
  %v54 = vunpack.c.l.b16 %v27
  %v55 = vunpack.c.l.b16 %v28
  %v56 = vunpack.c.l.b16 %v29
  %v57 = vunpack.c.l.b16 %v30
  %v58 = vunpack.c.l.b16 %v31
  %v59 = vpack.c.b16 %v52, %v51
  %v60 = vpack.c.b16 %v54, %v53
  %v61 = vpack.c.b16 %v56, %v55
  %v62 = vpack.c.b16 %v58, %v57
  %v67 = vunpack.c.l.b16 %v32
  %v68 = vunpack.c.l.b16 %v33
  %v69 = vunpack.c.l.b16 %v34
  %v70 = vunpack.c.l.b16 %v35
  %v71 = vpack.c.b16 %v68, %v67
  %v72 = vpack.c.b16 %v70, %v69
  %vm75 = vcmask 261120
  %v77 = vsel %vm75, %v59, 0
  %v80 = vsel %vm75, %v60, 0
  %v83 = vsel %vm75, %v61, 0
  %v86 = vsel %vm75, %v62, 0
  %88 = vmatprep.subr.bf16.mxu0 0
  %89 = vmatpush1.bf16.msra.mxu0 %v71
  %90 = vmatprep.subr.bf16.mxu0 0
  %91 = vmatpush1.bf16.msra.mxu0 %v72
  %92 = vmatprep.subr.bf16.mxu0 0
  %93 = vmatpush1.bf16.msra.mxu0 0
  %94 = vmatprep.subr.bf16.mxu0 0
  %95 = vmatpush1.bf16.msra.mxu0 0
  %96 = vmatprep.subr.bf16.mxu0 0
  %97 = vmatpush1.bf16.msra.mxu0 0
  %98 = vmatprep.subr.bf16.mxu0 0
  %99 = vmatpush1.bf16.msra.mxu0 0
  %100 = vmatprep.subr.bf16.mxu0 0
  %101 = vmatpush1.bf16.msra.mxu0 0
  %102 = vmatprep.subr.bf16.mxu0 0
  %103 = vmatpush1.bf16.msra.mxu0 0
  %104 = vmatprep.subr.bf16.mxu0 0
  %105 = vmatpush1.bf16.msra.mxu0 0
  %106 = vmatprep.subr.bf16.mxu0 0
  %107 = vmatpush1.bf16.msra.mxu0 0
  %108 = vmatprep.subr.bf16.mxu0 0
  %109 = vmatpush1.bf16.msra.mxu0 0
  %110 = vmatprep.subr.bf16.mxu0 0
  %111 = vmatpush1.bf16.msra.mxu0 0
  %112 = vmatprep.subr.bf16.mxu0 0
  %113 = vmatpush1.bf16.msra.mxu0 0
  %114 = vmatprep.subr.bf16.mxu0 0
  %115 = vmatpush1.bf16.msra.mxu0 0
  %116 = vmatprep.subr.bf16.mxu0 0
  %117 = vmatpush1.bf16.msra.mxu0 0
  %118 = vmatprep.subr.bf16.mxu0 0
  %119 = vmatpush1.bf16.msra.mxu0 0
  %120 = vmatprep.mubr.bf16.mxu0 0
  %121 = vmatmul.mubr.bf16.gmra.mrb[0].mxu0 %v77
  %v122 = vpop.f32.mrb[0].mxu0
  %v123 = vadd.f32 %v41, %v122
  %v124 = vpop.f32.mrb[0].mxu0
  %v125 = vpop.f32.mrb[0].mxu0
  %v126 = vadd.f32 %v41, %v125
  %v127 = vpop.f32.mrb[0].mxu0
  %128 = vmatprep.mubr.bf16.mxu0 0
  %129 = vmatmul.mubr.bf16.gmra.mrb[0].mxu0 %v80
  %v130 = vpop.f32.mrb[0].mxu0
  %v131 = vadd.f32 %v41, %v130
  %v132 = vpop.f32.mrb[0].mxu0
  %v133 = vpop.f32.mrb[0].mxu0
  %v134 = vadd.f32 %v41, %v133
  %v135 = vpop.f32.mrb[0].mxu0
  %136 = vmatprep.mubr.bf16.mxu0 0
  %137 = vmatmul.mubr.bf16.gmra.mrb[0].mxu0 %v83
  %v138 = vpop.f32.mrb[0].mxu0
  %v139 = vadd.f32 %v41, %v138
  %v140 = vpop.f32.mrb[0].mxu0
  %v141 = vpop.f32.mrb[0].mxu0
  %v142 = vadd.f32 %v41, %v141
  %v143 = vpop.f32.mrb[0].mxu0
  %144 = vmatprep.mubr.bf16.mxu0 0
  %145 = vmatmul.mubr.bf16.gmra.mrb[0].mxu0 %v86
  %v146 = vpop.f32.mrb[0].mxu0
  %v147 = vadd.f32 %v41, %v146
  %v148 = vpop.f32.mrb[0].mxu0
  %v149 = vpop.f32.mrb[0].mxu0
  %v150 = vadd.f32 %v41, %v149
  %v151 = vpop.f32.mrb[0].mxu0
  %152 = vdwg.mxu0
  %v153 = vld [vmem:[%s1] sm:$0xf]
  %v154 = vld [vmem:[%s1 + $0x4] sm:$0xf]
  %v155 = vld [vmem:[%s1 + $0x8] sm:$0xf]
  %v156 = vld [vmem:[%s1 + $0xc] sm:$0xf]
  %v157 = vld [vmem:[%s1 + $0x10] sm:$0xf]
  %v158 = vld [vmem:[%s1 + $0x14] sm:$0xf]
  %v159 = vld [vmem:[%s1 + $0x18] sm:$0xf]
  %v160 = vld [vmem:[%s1 + $0x1c] sm:$0xf]
  %v161 = vld [vmem:[%s3] sm:$0xf]
  %v162 = vld [vmem:[%s3 + $0x4] sm:$0xf]
  %v163 = vld [vmem:[%s3 + $0x8] sm:$0xf]
  %v164 = vld [vmem:[%s3 + $0xc] sm:$0xf]
  %v165 = vld [vmem:[%s5] sm:$0x1]
  %v167 = vlaneseq
  %v168 = vshrl.u32 %v167, 7
  %v169 = vsub.s32 0, %v168
  %v170 = vrot.slane %v165, %v169
  %v180 = vunpack.c.l.b16 %v153
  %v181 = vunpack.c.l.b16 %v154
  %v182 = vunpack.c.l.b16 %v155
  %v183 = vunpack.c.l.b16 %v156
  %v184 = vunpack.c.l.b16 %v157
  %v185 = vunpack.c.l.b16 %v158
  %v186 = vunpack.c.l.b16 %v159
  %v187 = vunpack.c.l.b16 %v160
  %v188 = vpack.c.b16 %v181, %v180
  %v189 = vpack.c.b16 %v183, %v182
  %v190 = vpack.c.b16 %v185, %v184
  %v191 = vpack.c.b16 %v187, %v186
  %v196 = vunpack.c.l.b16 %v161
  %v197 = vunpack.c.l.b16 %v162
  %v198 = vunpack.c.l.b16 %v163
  %v199 = vunpack.c.l.b16 %v164
  %v200 = vpack.c.b16 %v197, %v196
  %v201 = vpack.c.b16 %v199, %v198
  %v205 = vsel %vm75, %v188, 0
  %v208 = vsel %vm75, %v189, 0
  %v211 = vsel %vm75, %v190, 0
  %v214 = vsel %vm75, %v191, 0
  %216 = vmatprep.subr.bf16.mxu0 0
  %217 = vmatpush1.bf16.msra.mxu0 %v200
  %218 = vmatprep.subr.bf16.mxu0 0
  %219 = vmatpush1.bf16.msra.mxu0 %v201
  %220 = vmatprep.subr.bf16.mxu0 0
  %221 = vmatpush1.bf16.msra.mxu0 0
  %222 = vmatprep.subr.bf16.mxu0 0
  %223 = vmatpush1.bf16.msra.mxu0 0
  %224 = vmatprep.subr.bf16.mxu0 0
  %225 = vmatpush1.bf16.msra.mxu0 0
  %226 = vmatprep.subr.bf16.mxu0 0
  %227 = vmatpush1.bf16.msra.mxu0 0
  %228 = vmatprep.subr.bf16.mxu0 0
  %229 = vmatpush1.bf16.msra.mxu0 0
  %230 = vmatprep.subr.bf16.mxu0 0
  %231 = vmatpush1.bf16.msra.mxu0 0
  %232 = vmatprep.subr.bf16.mxu0 0
  %233 = vmatpush1.bf16.msra.mxu0 0
  %234 = vmatprep.subr.bf16.mxu0 0
  %235 = vmatpush1.bf16.msra.mxu0 0
  %236 = vmatprep.subr.bf16.mxu0 0
  %237 = vmatpush1.bf16.msra.mxu0 0
  %238 = vmatprep.subr.bf16.mxu0 0
  %239 = vmatpush1.bf16.msra.mxu0 0
  %240 = vmatprep.subr.bf16.mxu0 0
  %241 = vmatpush1.bf16.msra.mxu0 0
  %242 = vmatprep.subr.bf16.mxu0 0
  %243 = vmatpush1.bf16.msra.mxu0 0
  %244 = vmatprep.subr.bf16.mxu0 0
  %245 = vmatpush1.bf16.msra.mxu0 0
  %246 = vmatprep.subr.bf16.mxu0 0
  %247 = vmatpush1.bf16.msra.mxu0 0
  %248 = vmatprep.mubr.bf16.mxu0 0
  %249 = vmatmul.mubr.bf16.gmra.mrb[0].mxu0 %v205
  %v250 = vpop.f32.mrb[0].mxu0
  %v251 = vadd.f32 %v170, %v250
  %v252 = vpop.f32.mrb[0].mxu0
  %v253 = vpop.f32.mrb[0].mxu0
  %v254 = vadd.f32 %v170, %v253
  %v255 = vpop.f32.mrb[0].mxu0
  %256 = vmatprep.mubr.bf16.mxu0 0
  %257 = vmatmul.mubr.bf16.gmra.mrb[0].mxu0 %v208
  %v258 = vpop.f32.mrb[0].mxu0
  %v259 = vadd.f32 %v170, %v258
  %v260 = vpop.f32.mrb[0].mxu0
  %v261 = vpop.f32.mrb[0].mxu0
  %v262 = vadd.f32 %v170, %v261
  %v263 = vpop.f32.mrb[0].mxu0
  %264 = vmatprep.mubr.bf16.mxu0 0
  %265 = vmatmul.mubr.bf16.gmra.mrb[0].mxu0 %v211
  %v266 = vpop.f32.mrb[0].mxu0
  %v267 = vadd.f32 %v170, %v266
  %v268 = vpop.f32.mrb[0].mxu0
  %v269 = vpop.f32.mrb[0].mxu0
  %v270 = vadd.f32 %v170, %v269
  %v271 = vpop.f32.mrb[0].mxu0
  %272 = vmatprep.mubr.bf16.mxu0 0
  %273 = vmatmul.mubr.bf16.gmra.mrb[0].mxu0 %v214
  %v274 = vpop.f32.mrb[0].mxu0
  %v275 = vadd.f32 %v170, %v274
  %v276 = vpop.f32.mrb[0].mxu0
  %v277 = vpop.f32.mrb[0].mxu0
  %v278 = vadd.f32 %v170, %v277
  %v279 = vpop.f32.mrb[0].mxu0
  %280 = vdwg.mxu0
  %289 = vrot.lane.b32.xlu0 %v251, 32
  %v290 = vpop.permute.xlu0 %289
  %291 = vrot.lane.b32.xlu0 %v254, 32
  %v292 = vpop.permute.xlu0 %291
  %293 = vrot.lane.b32.xlu0 %v259, 32
  %v294 = vpop.permute.xlu0 %293
  %295 = vrot.lane.b32.xlu0 %v262, 32
  %v296 = vpop.permute.xlu0 %295
  %297 = vrot.lane.b32.xlu0 %v267, 32
  %v298 = vpop.permute.xlu0 %297
  %299 = vrot.lane.b32.xlu0 %v270, 32
  %v300 = vpop.permute.xlu0 %299
  %301 = vrot.lane.b32.xlu0 %v275, 32
  %v302 = vpop.permute.xlu0 %301
  %303 = vrot.lane.b32.xlu0 %v278, 32
  %v304 = vpop.permute.xlu0 %303
  %321 = vrot.lane.b32.xlu0 %v123, 32
  %v322 = vpop.permute.xlu0 %321
  %323 = vrot.lane.b32.xlu0 %v126, 32
  %v324 = vpop.permute.xlu0 %323
  %325 = vrot.lane.b32.xlu0 %v131, 32
  %v326 = vpop.permute.xlu0 %325
  %327 = vrot.lane.b32.xlu0 %v134, 32
  %v328 = vpop.permute.xlu0 %327
  %329 = vrot.lane.b32.xlu0 %v139, 32
  %v330 = vpop.permute.xlu0 %329
  %331 = vrot.lane.b32.xlu0 %v142, 32
  %v332 = vpop.permute.xlu0 %331
  %333 = vrot.lane.b32.xlu0 %v147, 32
  %v334 = vpop.permute.xlu0 %333
  %335 = vrot.lane.b32.xlu0 %v150, 32
  %v336 = vpop.permute.xlu0 %335
  %345 = vrot.lane.b32.xlu0 %v251, 64
  %v346 = vpop.permute.xlu0 %345
  %347 = vrot.lane.b32.xlu0 %v254, 64
  %v348 = vpop.permute.xlu0 %347
  %349 = vrot.lane.b32.xlu0 %v259, 64
  %v350 = vpop.permute.xlu0 %349
  %351 = vrot.lane.b32.xlu0 %v262, 64
  %v352 = vpop.permute.xlu0 %351
  %353 = vrot.lane.b32.xlu0 %v267, 64
  %v354 = vpop.permute.xlu0 %353
  %355 = vrot.lane.b32.xlu0 %v270, 64
  %v356 = vpop.permute.xlu0 %355
  %357 = vrot.lane.b32.xlu0 %v275, 64
  %v358 = vpop.permute.xlu0 %357
  %359 = vrot.lane.b32.xlu0 %v278, 64
  %v360 = vpop.permute.xlu0 %359
  %369 = vrot.lane.b32.xlu0 %v123, 64
  %v370 = vpop.permute.xlu0 %369
  %371 = vrot.lane.b32.xlu0 %v126, 64
  %v372 = vpop.permute.xlu0 %371
  %373 = vrot.lane.b32.xlu0 %v131, 64
  %v374 = vpop.permute.xlu0 %373
  %375 = vrot.lane.b32.xlu0 %v134, 64
  %v376 = vpop.permute.xlu0 %375
  %377 = vrot.lane.b32.xlu0 %v139, 64
  %v378 = vpop.permute.xlu0 %377
  %379 = vrot.lane.b32.xlu0 %v142, 64
  %v380 = vpop.permute.xlu0 %379
  %381 = vrot.lane.b32.xlu0 %v147, 64
  %v382 = vpop.permute.xlu0 %381
  %383 = vrot.lane.b32.xlu0 %v150, 64
  %v384 = vpop.permute.xlu0 %383
  %393 = vrot.lane.b32.xlu0 %v251, 96
  %v394 = vpop.permute.xlu0 %393
  %395 = vrot.lane.b32.xlu0 %v254, 96
  %v396 = vpop.permute.xlu0 %395
  %397 = vrot.lane.b32.xlu0 %v259, 96
  %v398 = vpop.permute.xlu0 %397
  %399 = vrot.lane.b32.xlu0 %v262, 96
  %v400 = vpop.permute.xlu0 %399
  %401 = vrot.lane.b32.xlu0 %v267, 96
  %v402 = vpop.permute.xlu0 %401
  %403 = vrot.lane.b32.xlu0 %v270, 96
  %v404 = vpop.permute.xlu0 %403
  %405 = vrot.lane.b32.xlu0 %v275, 96
  %v406 = vpop.permute.xlu0 %405
  %407 = vrot.lane.b32.xlu0 %v278, 96
  %v408 = vpop.permute.xlu0 %407
  %417 = vrot.lane.b32.xlu0 %v123, 96
  %v418 = vpop.permute.xlu0 %417
  %419 = vrot.lane.b32.xlu0 %v126, 96
  %v420 = vpop.permute.xlu0 %419
  %421 = vrot.lane.b32.xlu0 %v131, 96
  %v422 = vpop.permute.xlu0 %421
  %423 = vrot.lane.b32.xlu0 %v134, 96
  %v424 = vpop.permute.xlu0 %423
  %425 = vrot.lane.b32.xlu0 %v139, 96
  %v426 = vpop.permute.xlu0 %425
  %427 = vrot.lane.b32.xlu0 %v142, 96
  %v428 = vpop.permute.xlu0 %427
  %429 = vrot.lane.b32.xlu0 %v147, 96
  %v430 = vpop.permute.xlu0 %429
  %431 = vrot.lane.b32.xlu0 %v150, 96
  %v432 = vpop.permute.xlu0 %431
  %v441 = vsel %vm75, %v123, %v290
  %v442 = vsel %vm75, %v126, %v292
  %v443 = vsel %vm75, %v131, %v294
  %v444 = vsel %vm75, %v134, %v296
  %v445 = vsel %vm75, %v139, %v298
  %v446 = vsel %vm75, %v142, %v300
  %v447 = vsel %vm75, %v147, %v302
  %v448 = vsel %vm75, %v150, %v304
  %vm449 = vcmask 523264
  %v450 = vsel %vm449, %v441, %v322
  %v451 = vsel %vm449, %v442, %v324
  %v452 = vsel %vm449, %v443, %v326
  %v453 = vsel %vm449, %v444, %v328
  %v454 = vsel %vm449, %v445, %v330
  %v455 = vsel %vm449, %v446, %v332
  %v456 = vsel %vm449, %v447, %v334
  %v457 = vsel %vm449, %v448, %v336
  %vm458 = vcmask 785408
  %v459 = vsel %vm458, %v450, %v346
  %v460 = vsel %vm458, %v451, %v348
  %v461 = vsel %vm458, %v452, %v350
  %v462 = vsel %vm458, %v453, %v352
  %v463 = vsel %vm458, %v454, %v354
  %v464 = vsel %vm458, %v455, %v356
  %v465 = vsel %vm458, %v456, %v358
  %v466 = vsel %vm458, %v457, %v360
  %v467 = vsel %vm75, %v370, %v394
  %v468 = vsel %vm75, %v372, %v396
  %v469 = vsel %vm75, %v374, %v398
  %v470 = vsel %vm75, %v376, %v400
  %v471 = vsel %vm75, %v378, %v402
  %v472 = vsel %vm75, %v380, %v404
  %v473 = vsel %vm75, %v382, %v406
  %v474 = vsel %vm75, %v384, %v408
  %v475 = vsel %vm449, %v467, %v418
  %v476 = vsel %vm449, %v468, %v420
  %v477 = vsel %vm449, %v469, %v422
  %v478 = vsel %vm449, %v470, %v424
  %v479 = vsel %vm449, %v471, %v426
  %v480 = vsel %vm449, %v472, %v428
  %v481 = vsel %vm449, %v473, %v430
  %v482 = vsel %vm449, %v474, %v432
  %v483 = vsel %vm458, %v475, %v251
  %v484 = vsel %vm458, %v476, %v254
  %v485 = vsel %vm458, %v477, %v259
  %v486 = vsel %vm458, %v478, %v262
  %v487 = vsel %vm458, %v479, %v267
  %v488 = vsel %vm458, %v480, %v270
  %v489 = vsel %vm458, %v481, %v275
  %v490 = vsel %vm458, %v482, %v278
  %491 = vst [vmem:[%s6] sm:$0xff] %v459
  %492 = vst [vmem:[%s6 + $0x8] sm:$0xff] %v483
  %493 = vst [vmem:[%s6 + $0x10] sm:$0xff] %v460
  %494 = vst [vmem:[%s6 + $0x18] sm:$0xff] %v484
  %495 = vst [vmem:[%s6 + $0x20] sm:$0xff] %v461
  %496 = vst [vmem:[%s6 + $0x28] sm:$0xff] %v485
  %497 = vst [vmem:[%s6 + $0x30] sm:$0xff] %v462
  %498 = vst [vmem:[%s6 + $0x38] sm:$0xff] %v486
  %499 = vst [vmem:[%s6 + $0x40] sm:$0xff] %v463
  %500 = vst [vmem:[%s6 + $0x48] sm:$0xff] %v487
  %501 = vst [vmem:[%s6 + $0x50] sm:$0xff] %v464
  %502 = vst [vmem:[%s6 + $0x58] sm:$0xff] %v488
  %503 = vst [vmem:[%s6 + $0x60] sm:$0xff] %v465
  %504 = vst [vmem:[%s6 + $0x68] sm:$0xff] %v489
  %505 = vst [vmem:[%s6 + $0x70] sm:$0xff] %v466
  %506 = vst [vmem:[%s6 + $0x78] sm:$0xff] %v490
  // Predicated region
  $region26: #{seq_tagger_forward.3} parent=0 // pred_check
    _
  $region27: #{seq_tagger_forward.3} parent=0 // pred_check_branch
    %508 = sbr.rel (0) target = $region29
  $region28: #{seq_tagger_forward.3} parent=0 // pred_region
    _
  $region29: #{seq_tagger_forward.3} parent=0 // pred_fallthru
    _
  // Predicated region
  $region30: #{seq_tagger_forward.3} parent=0 // pred_check
    _
  $region31: #{seq_tagger_forward.3} parent=0 // pred_check_branch
    %510 = sbr.rel (0) target = $region33
  $region32: #{seq_tagger_forward.3} parent=0 // pred_region
    _
  $region33: #{seq_tagger_forward.3} parent=0 // pred_fallthru
    _

// kernel: seq_tagger_forward.4
$region0: #{seq_tagger_forward.4}
  #allocation0 [shape = 'u32[]', space=smem, size = 0x4, offset = 0x4, fixed_abs, tag = 'smem constant byte address 0x4 - core index']
  #allocation1 [shape = 'u32[144,128]{1,0:T(1,128)}', space=vmem, size = 0x12000, scoped, tag = 'internal scratch']
  #allocation2 [shape = 'f32[8,64]{1,0:T(8,128)}', space=vmem, size = 0x1000, scoped, tag = 'scratch operand']
  #allocation3 [shape = 'f32[8,64]{1,0:T(8,128)}', space=vmem, size = 0x1000, scoped, tag = 'scratch operand']
  %s0 = inlined_call_operand.vmem [shape: f32[8,8,256], index: 0, kind: input, shape index: {}]
  %s1 = inlined_call_operand.vmem [shape: f32[8,8,2], index: 1, kind: input, shape index: {}]
  %s2 = inlined_call_operand.vmem [shape: f32[64,256], index: 2, kind: input, shape index: {}]
  %s3 = inlined_call_operand.vmem [shape: f32[8,8,32], index: 3, kind: output, shape index: {0}]
  %s4 = inlined_call_operand.vmem [shape: f32[8,8,32], index: 4, kind: output, shape index: {1}]
  %5 = xla_tuple %s3, %s4
  %s6 = sld [smem:[#allocation0]]
  $region34: #{seq_tagger_forward.4} parent=0
    _
  %s8 = ssub.s32 1, %s6
  %s9 = scalar_select 0, %s8, %s6
  // Predicated region
  $region2: #{seq_tagger_forward.4} parent=0 // pred_check
    _
  $region3: #{seq_tagger_forward.4} parent=0 // pred_check_branch
    %11 = sbr.rel (0) target = $region5
  $region4: #{seq_tagger_forward.4} parent=0 // pred_region
    _
  $region5: #{seq_tagger_forward.4} parent=0 // pred_fallthru
    _
  // Predicated region
  $region6: #{seq_tagger_forward.4} parent=0 // pred_check
    _
  $region7: #{seq_tagger_forward.4} parent=0 // pred_check_branch
    %13 = sbr.rel (0) target = $region9
  $region8: #{seq_tagger_forward.4} parent=0 // pred_region
    _
  $region9: #{seq_tagger_forward.4} parent=0 // pred_fallthru
    _
  // Predicated region
  $region10: #{seq_tagger_forward.4} parent=0 // pred_check
    _
  $region11: #{seq_tagger_forward.4} parent=0 // pred_check_branch
    %15 = sbr.rel (0) target = $region13
  $region12: #{seq_tagger_forward.4} parent=0 // pred_region
    _
  $region13: #{seq_tagger_forward.4} parent=0 // pred_fallthru
    _
  %s16 = ssub.s32 0, 0
  %s17 = smul.u32 8, %s16
  %p18 = scmp.lt.s32.totalorder %s17, 7
  %s19 = scalar_select %p18, %s17, 7
  %s20 = smul.addr %s19, 8
  %s21 = scalar_lea.vmem %s4, %s20
  %s22 = ssub.s32 0, 0
  %s23 = smul.u32 8, %s22
  %p24 = scmp.lt.s32.totalorder %s23, 7
  %s25 = scalar_select %p24, %s23, 7
  %s26 = smul.addr %s25, 8
  %s27 = scalar_lea.vmem %s4, %s26
  %s28 = ssub.s32 0, 0
  %s29 = smul.u32 8, %s28
  %p30 = scmp.eq.s32.totalorder 0, 0
  // Predicated region
  $region14: #{seq_tagger_forward.4} parent=0 // pred_check
    %p31 = pneg %p30
  $region15: #{seq_tagger_forward.4} parent=0 // pred_check_branch
    %33 = sbr.rel (%p31) target = $region17
  $region16: #{seq_tagger_forward.4} parent=0 // pred_region
    %vm34 = vcmask 523264
    %35 = vst.msk [vmem:[#allocation2] sm:$0xff] %vm34, 0.0
    %36 = vst.msk [vmem:[#allocation3] sm:$0xff] %vm34, 0.0
  $region17: #{seq_tagger_forward.4} parent=0 // pred_fallthru
    _
  %v37 = vlaneseq
  %v38 = vand.u32 %v37, 127
  %vm39 = vcmp.lt.s32.totalorder %v38, 32
  %v40 = vld [vmem:[%s2] sm:$0xff]
  %v41 = vld [vmem:[%s2 + $0x8] sm:$0xff]
  %v42 = vld [vmem:[%s2 + $0x10] sm:$0xff]
  %v43 = vld [vmem:[%s2 + $0x18] sm:$0xff]
  %v44 = vld [vmem:[%s2 + $0x20] sm:$0xff]
  %v45 = vld [vmem:[%s2 + $0x28] sm:$0xff]
  %v46 = vld [vmem:[%s2 + $0x30] sm:$0xff]
  %v47 = vld [vmem:[%s2 + $0x38] sm:$0xff]
  %v48 = vld [vmem:[%s2 + $0x40] sm:$0xff]
  %v49 = vld [vmem:[%s2 + $0x48] sm:$0xff]
  %v50 = vld [vmem:[%s2 + $0x50] sm:$0xff]
  %v51 = vld [vmem:[%s2 + $0x58] sm:$0xff]
  %v52 = vld [vmem:[%s2 + $0x60] sm:$0xff]
  %v53 = vld [vmem:[%s2 + $0x68] sm:$0xff]
  %v54 = vld [vmem:[%s2 + $0x70] sm:$0xff]
  %v55 = vld [vmem:[%s2 + $0x78] sm:$0xff]
  %v56 = vld [vmem:[#allocation2] sm:$0xff]
  %v57 = vld [vmem:[#allocation3] sm:$0xff]
  %v58 = vld [vmem:[%s0] sm:$0xff]
  %v59 = vld [vmem:[%s0 + $0x8] sm:$0xff]
  %v60 = vld [vmem:[%s1] sm:$0xff]
  %62 = vset.pattern.permute.xlu0 0
  %63 = vperm.xlu0 %62, %v60
  %v64 = vpop.permute.xlu0 %63
  %66 = vset.pattern.permute.xlu0 1
  %67 = vperm.xlu0 %66, %v60
  %v68 = vpop.permute.xlu0 %67
  %v70 = vsel %vm39, %v64, %v68
  %vm71 = vcmask 523264
  %v73 = vsel %vm71, %v56, 0
  %75 = vmatprep.subr.mxu0 %v41
  %76 = vmatpush1.msra.mxu0 %v40
  %77 = vmatprep.subr.mxu0 %v43
  %78 = vmatpush1.msra.mxu0 %v42
  %79 = vmatprep.subr.mxu0 %v45
  %80 = vmatpush1.msra.mxu0 %v44
  %81 = vmatprep.subr.mxu0 %v47
  %82 = vmatpush1.msra.mxu0 %v46
  %83 = vmatprep.subr.mxu0 %v49
  %84 = vmatpush1.msra.mxu0 %v48
  %85 = vmatprep.subr.mxu0 %v51
  %86 = vmatpush1.msra.mxu0 %v50
  %87 = vmatprep.subr.mxu0 %v53
  %88 = vmatpush1.msra.mxu0 %v52
  %89 = vmatprep.subr.mxu0 %v55
  %90 = vmatpush1.msra.mxu0 %v54
  %91 = vmatprep.subr.mxu0 0.0
  %92 = vmatpush1.msra.mxu0 0.0
  %93 = vmatprep.subr.mxu0 0.0
  %94 = vmatpush1.msra.mxu0 0.0
  %95 = vmatprep.subr.mxu0 0.0
  %96 = vmatpush1.msra.mxu0 0.0
  %97 = vmatprep.subr.mxu0 0.0
  %98 = vmatpush1.msra.mxu0 0.0
  %99 = vmatprep.subr.mxu0 0.0
  %100 = vmatpush1.msra.mxu0 0.0
  %101 = vmatprep.subr.mxu0 0.0
  %102 = vmatpush1.msra.mxu0 0.0
  %103 = vmatprep.subr.mxu0 0.0
  %104 = vmatpush1.msra.mxu0 0.0
  %105 = vmatprep.subr.mxu0 0.0
  %106 = vmatpush1.msra.mxu0 0.0
  %107 = vmatprep.subr.mxu0 0.0
  %108 = vmatpush1.msra.mxu0 0.0
  %109 = vmatprep.subr.mxu0 0.0
  %110 = vmatpush1.msra.mxu0 0.0
  %111 = vmatprep.subr.mxu0 0.0
  %112 = vmatpush1.msra.mxu0 0.0
  %113 = vmatprep.subr.mxu0 0.0
  %114 = vmatpush1.msra.mxu0 0.0
  %115 = vmatprep.subr.mxu0 0.0
  %116 = vmatpush1.msra.mxu0 0.0
  %117 = vmatprep.subr.mxu0 0.0
  %118 = vmatpush1.msra.mxu0 0.0
  %119 = vmatprep.subr.mxu0 0.0
  %120 = vmatpush1.msra.mxu0 0.0
  %121 = vmatprep.subr.mxu0 0.0
  %122 = vmatpush1.msra.mxu0 0.0
  %123 = vmatprep.subr.mxu0 0.0
  %124 = vmatpush1.msra.mxu0 0.0
  %125 = vmatprep.subr.mxu0 0.0
  %126 = vmatpush1.msra.mxu0 0.0
  %127 = vmatprep.subr.mxu0 0.0
  %128 = vmatpush1.msra.mxu0 0.0
  %129 = vmatprep.subr.mxu0 0.0
  %130 = vmatpush1.msra.mxu0 0.0
  %131 = vmatprep.subr.mxu0 0.0
  %132 = vmatpush1.msra.mxu0 0.0
  %133 = vmatprep.subr.mxu0 0.0
  %134 = vmatpush1.msra.mxu0 0.0
  %135 = vmatprep.subr.mxu0 0.0
  %136 = vmatpush1.msra.mxu0 0.0
  %137 = vmatprep.subr.mxu0 0.0
  %138 = vmatpush1.msra.mxu0 0.0
  %139 = vmatprep.mubr.f32.mxu0 0.0
  %140 = vmatmul.mubr.f32.gmra.mrb[0].mxu0 %v73
  %v141 = vpop.f32.mrb[0].mxu0
  %v142 = vadd.f32 0.0, %v141
  %v143 = vpop.f32.mrb[0].mxu0
  %v144 = vadd.f32 0.0, %v143
  %145 = vdwg.mxu0
  %v146 = vadd.f32 %v58, %v142
  %v147 = vadd.f32 %v59, %v144
  %v148 = vxor.u32 %v146, 2147483648
  %v149 = vmul.f32 %v148, 1.442695
  %v150 = vpow.pop %v149
  %v151 = vadd.f32 %v150, 1.0
  %v152 = vrcp.pop %v151
  %v153 = vmul.f32 1.0, %v152
  %v154 = vtanh.pop %v147
  %v155 = vxor.u32 %v147, 2147483648
  %v156 = vmul.f32 %v155, 1.442695
  %v157 = vpow.pop %v156
  %v158 = vadd.f32 %v157, 1.0
  %v159 = vrcp.pop %v158
  %v160 = vmul.f32 1.0, %v159
  %162 = vrot.lane.b32.xlu0 %v57, 64
  %v163 = vpop.permute.xlu0 %162
  %v165 = vmul.f32 %v153, %v163
  %v166 = vmul.f32 %v153, %v154
  %168 = vrot.lane.b32.xlu0 %v166, 64
  %v169 = vpop.permute.xlu0 %168
  %v171 = vadd.f32 %v165, %v169
  %v172 = vtanh.pop %v171
  %v173 = vmul.f32 %v160, %v172
  %175 = vrot.lane.b32.xlu0 %v173, 64
  %v176 = vpop.permute.xlu0 %175
  %v178 = vmul.f32 %v70, %v176
  %v179 = vsub.f32 1.0, %v70
  %v180 = vmul.f32 %v179, %v56
  %v181 = vadd.f32 %v178, %v180
  %183 = vrot.lane.b32.xlu0 %v171, 64
  %v184 = vpop.permute.xlu0 %183
  %v186 = vmul.f32 %v70, %v184
  %v187 = vmul.f32 %v179, %v57
  %v188 = vadd.f32 %v186, %v187
  %v189 = vmul.f32 %v181, %v64
  %vm190 = vcmask 261120
  %191 = vst.msk [vmem:[%s3] sm:$0xff] %vm190, %v189
  %v192 = vmul.f32 %v181, %v68
  %194 = vrot.lane.b32.xlu0 %v192, 96
  %v195 = vpop.permute.xlu0 %194
  %s197 = scalar_lea.vmem %s27, 56
  %198 = vst.msk [vmem:[%s197] sm:$0xff] %vm190, %v195
  %s199 = scalar_lea.vmem %s0, 16
  %v200 = vld [vmem:[%s199] sm:$0xff]
  %v201 = vld [vmem:[%s199 + $0x8] sm:$0xff]
  %s202 = scalar_lea.vmem %s1, 8
  %v203 = vld [vmem:[%s202] sm:$0xff]
  %205 = vset.pattern.permute.xlu0 0
  %206 = vperm.xlu0 %205, %v203
  %v207 = vpop.permute.xlu0 %206
  %209 = vset.pattern.permute.xlu0 1
  %210 = vperm.xlu0 %209, %v203
  %v211 = vpop.permute.xlu0 %210
  %v213 = vsel %vm39, %v207, %v211
  %v215 = vsel %vm71, %v181, 0
  %217 = vmatprep.subr.mxu0 %v41
  %218 = vmatpush1.msra.mxu0 %v40
  %219 = vmatprep.subr.mxu0 %v43
  %220 = vmatpush1.msra.mxu0 %v42
  %221 = vmatprep.subr.mxu0 %v45
  %222 = vmatpush1.msra.mxu0 %v44
  %223 = vmatprep.subr.mxu0 %v47
  %224 = vmatpush1.msra.mxu0 %v46
  %225 = vmatprep.subr.mxu0 %v49
  %226 = vmatpush1.msra.mxu0 %v48
  %227 = vmatprep.subr.mxu0 %v51
  %228 = vmatpush1.msra.mxu0 %v50
  %229 = vmatprep.subr.mxu0 %v53
  %230 = vmatpush1.msra.mxu0 %v52
  %231 = vmatprep.subr.mxu0 %v55
  %232 = vmatpush1.msra.mxu0 %v54
  %233 = vmatprep.subr.mxu0 0.0
  %234 = vmatpush1.msra.mxu0 0.0
  %235 = vmatprep.subr.mxu0 0.0
  %236 = vmatpush1.msra.mxu0 0.0
  %237 = vmatprep.subr.mxu0 0.0
  %238 = vmatpush1.msra.mxu0 0.0
  %239 = vmatprep.subr.mxu0 0.0
  %240 = vmatpush1.msra.mxu0 0.0
  %241 = vmatprep.subr.mxu0 0.0
  %242 = vmatpush1.msra.mxu0 0.0
  %243 = vmatprep.subr.mxu0 0.0
  %244 = vmatpush1.msra.mxu0 0.0
  %245 = vmatprep.subr.mxu0 0.0
  %246 = vmatpush1.msra.mxu0 0.0
  %247 = vmatprep.subr.mxu0 0.0
  %248 = vmatpush1.msra.mxu0 0.0
  %249 = vmatprep.subr.mxu0 0.0
  %250 = vmatpush1.msra.mxu0 0.0
  %251 = vmatprep.subr.mxu0 0.0
  %252 = vmatpush1.msra.mxu0 0.0
  %253 = vmatprep.subr.mxu0 0.0
  %254 = vmatpush1.msra.mxu0 0.0
  %255 = vmatprep.subr.mxu0 0.0
  %256 = vmatpush1.msra.mxu0 0.0
  %257 = vmatprep.subr.mxu0 0.0
  %258 = vmatpush1.msra.mxu0 0.0
  %259 = vmatprep.subr.mxu0 0.0
  %260 = vmatpush1.msra.mxu0 0.0
  %261 = vmatprep.subr.mxu0 0.0
  %262 = vmatpush1.msra.mxu0 0.0
  %263 = vmatprep.subr.mxu0 0.0
  %264 = vmatpush1.msra.mxu0 0.0
  %265 = vmatprep.subr.mxu0 0.0
  %266 = vmatpush1.msra.mxu0 0.0
  %267 = vmatprep.subr.mxu0 0.0
  %268 = vmatpush1.msra.mxu0 0.0
  %269 = vmatprep.subr.mxu0 0.0
  %270 = vmatpush1.msra.mxu0 0.0
  %271 = vmatprep.subr.mxu0 0.0
  %272 = vmatpush1.msra.mxu0 0.0
  %273 = vmatprep.subr.mxu0 0.0
  %274 = vmatpush1.msra.mxu0 0.0
  %275 = vmatprep.subr.mxu0 0.0
  %276 = vmatpush1.msra.mxu0 0.0
  %277 = vmatprep.subr.mxu0 0.0
  %278 = vmatpush1.msra.mxu0 0.0
  %279 = vmatprep.subr.mxu0 0.0
  %280 = vmatpush1.msra.mxu0 0.0
  %281 = vmatprep.mubr.f32.mxu0 0.0
  %282 = vmatmul.mubr.f32.gmra.mrb[0].mxu0 %v215
  %v283 = vpop.f32.mrb[0].mxu0
  %v284 = vadd.f32 0.0, %v283
  %v285 = vpop.f32.mrb[0].mxu0
  %v286 = vadd.f32 0.0, %v285
  %287 = vdwg.mxu0
  %v288 = vadd.f32 %v200, %v284
  %v289 = vadd.f32 %v201, %v286
  %v290 = vxor.u32 %v288, 2147483648
  %v291 = vmul.f32 %v290, 1.442695
  %v292 = vpow.pop %v291
  %v293 = vadd.f32 %v292, 1.0
  %v294 = vrcp.pop %v293
  %v295 = vmul.f32 1.0, %v294
  %v296 = vtanh.pop %v289
  %v297 = vxor.u32 %v289, 2147483648
  %v298 = vmul.f32 %v297, 1.442695
  %v299 = vpow.pop %v298
  %v300 = vadd.f32 %v299, 1.0
  %v301 = vrcp.pop %v300
  %v302 = vmul.f32 1.0, %v301
  %304 = vrot.lane.b32.xlu0 %v188, 64
  %v305 = vpop.permute.xlu0 %304
  %v307 = vmul.f32 %v295, %v305
  %v308 = vmul.f32 %v295, %v296
  %310 = vrot.lane.b32.xlu0 %v308, 64
  %v311 = vpop.permute.xlu0 %310
  %v313 = vadd.f32 %v307, %v311
  %v314 = vtanh.pop %v313
  %v315 = vmul.f32 %v302, %v314
  %317 = vrot.lane.b32.xlu0 %v315, 64
  %v318 = vpop.permute.xlu0 %317
  %v320 = vmul.f32 %v213, %v318
  %v321 = vsub.f32 1.0, %v213
  %v322 = vmul.f32 %v321, %v181
  %v323 = vadd.f32 %v320, %v322
  %325 = vrot.lane.b32.xlu0 %v313, 64
  %v326 = vpop.permute.xlu0 %325
  %v328 = vmul.f32 %v213, %v326
  %v329 = vmul.f32 %v321, %v188
  %v330 = vadd.f32 %v328, %v329
  %v331 = vmul.f32 %v323, %v207
  %s332 = scalar_lea.vmem %s3, 8
  %333 = vst.msk [vmem:[%s332] sm:$0xff] %vm190, %v331
  %v334 = vmul.f32 %v323, %v211
  %336 = vrot.lane.b32.xlu0 %v334, 96
  %v337 = vpop.permute.xlu0 %336
  %s339 = scalar_lea.vmem %s27, 48
  %340 = vst.msk [vmem:[%s339] sm:$0xff] %vm190, %v337
  %s341 = scalar_lea.vmem %s0, 32
  %v342 = vld [vmem:[%s341] sm:$0xff]
  %v343 = vld [vmem:[%s341 + $0x8] sm:$0xff]
  %s344 = scalar_lea.vmem %s1, 16
  %v345 = vld [vmem:[%s344] sm:$0xff]
  %347 = vset.pattern.permute.xlu0 0
  %348 = vperm.xlu0 %347, %v345
  %v349 = vpop.permute.xlu0 %348
  %351 = vset.pattern.permute.xlu0 1
  %352 = vperm.xlu0 %351, %v345
  %v353 = vpop.permute.xlu0 %352
  %v355 = vsel %vm39, %v349, %v353
  %v357 = vsel %vm71, %v323, 0
  %359 = vmatprep.subr.mxu0 %v41
  %360 = vmatpush1.msra.mxu0 %v40
  %361 = vmatprep.subr.mxu0 %v43
  %362 = vmatpush1.msra.mxu0 %v42
  %363 = vmatprep.subr.mxu0 %v45
  %364 = vmatpush1.msra.mxu0 %v44
  %365 = vmatprep.subr.mxu0 %v47
  %366 = vmatpush1.msra.mxu0 %v46
  %367 = vmatprep.subr.mxu0 %v49
  %368 = vmatpush1.msra.mxu0 %v48
  %369 = vmatprep.subr.mxu0 %v51
  %370 = vmatpush1.msra.mxu0 %v50
  %371 = vmatprep.subr.mxu0 %v53
  %372 = vmatpush1.msra.mxu0 %v52
  %373 = vmatprep.subr.mxu0 %v55
  %374 = vmatpush1.msra.mxu0 %v54
  %375 = vmatprep.subr.mxu0 0.0
  %376 = vmatpush1.msra.mxu0 0.0
  %377 = vmatprep.subr.mxu0 0.0
  %378 = vmatpush1.msra.mxu0 0.0
  %379 = vmatprep.subr.mxu0 0.0
  %380 = vmatpush1.msra.mxu0 0.0
  %381 = vmatprep.subr.mxu0 0.0
  %382 = vmatpush1.msra.mxu0 0.0
  %383 = vmatprep.subr.mxu0 0.0
  %384 = vmatpush1.msra.mxu0 0.0
  %385 = vmatprep.subr.mxu0 0.0
  %386 = vmatpush1.msra.mxu0 0.0
  %387 = vmatprep.subr.mxu0 0.0
  %388 = vmatpush1.msra.mxu0 0.0
  %389 = vmatprep.subr.mxu0 0.0
  %390 = vmatpush1.msra.mxu0 0.0
  %391 = vmatprep.subr.mxu0 0.0
  %392 = vmatpush1.msra.mxu0 0.0
  %393 = vmatprep.subr.mxu0 0.0
  %394 = vmatpush1.msra.mxu0 0.0
  %395 = vmatprep.subr.mxu0 0.0
  %396 = vmatpush1.msra.mxu0 0.0
  %397 = vmatprep.subr.mxu0 0.0
  %398 = vmatpush1.msra.mxu0 0.0
  %399 = vmatprep.subr.mxu0 0.0
  %400 = vmatpush1.msra.mxu0 0.0
  %401 = vmatprep.subr.mxu0 0.0
  %402 = vmatpush1.msra.mxu0 0.0
  %403 = vmatprep.subr.mxu0 0.0
  %404 = vmatpush1.msra.mxu0 0.0
  %405 = vmatprep.subr.mxu0 0.0
  %406 = vmatpush1.msra.mxu0 0.0
  %407 = vmatprep.subr.mxu0 0.0
  %408 = vmatpush1.msra.mxu0 0.0
  %409 = vmatprep.subr.mxu0 0.0
  %410 = vmatpush1.msra.mxu0 0.0
  %411 = vmatprep.subr.mxu0 0.0
  %412 = vmatpush1.msra.mxu0 0.0
  %413 = vmatprep.subr.mxu0 0.0
  %414 = vmatpush1.msra.mxu0 0.0
  %415 = vmatprep.subr.mxu0 0.0
  %416 = vmatpush1.msra.mxu0 0.0
  %417 = vmatprep.subr.mxu0 0.0
  %418 = vmatpush1.msra.mxu0 0.0
  %419 = vmatprep.subr.mxu0 0.0
  %420 = vmatpush1.msra.mxu0 0.0
  %421 = vmatprep.subr.mxu0 0.0
  %422 = vmatpush1.msra.mxu0 0.0
  %423 = vmatprep.mubr.f32.mxu0 0.0
  %424 = vmatmul.mubr.f32.gmra.mrb[0].mxu0 %v357
  %v425 = vpop.f32.mrb[0].mxu0
  %v426 = vadd.f32 0.0, %v425
  %v427 = vpop.f32.mrb[0].mxu0
  %v428 = vadd.f32 0.0, %v427
  %429 = vdwg.mxu0
  %v430 = vadd.f32 %v342, %v426
  %v431 = vadd.f32 %v343, %v428
  %v432 = vxor.u32 %v430, 2147483648
  %v433 = vmul.f32 %v432, 1.442695
  %v434 = vpow.pop %v433
  %v435 = vadd.f32 %v434, 1.0
  %v436 = vrcp.pop %v435
  %v437 = vmul.f32 1.0, %v436
  %v438 = vtanh.pop %v431
  %v439 = vxor.u32 %v431, 2147483648
  %v440 = vmul.f32 %v439, 1.442695
  %v441 = vpow.pop %v440
  %v442 = vadd.f32 %v441, 1.0
  %v443 = vrcp.pop %v442
  %v444 = vmul.f32 1.0, %v443
  %446 = vrot.lane.b32.xlu0 %v330, 64
  %v447 = vpop.permute.xlu0 %446
  %v449 = vmul.f32 %v437, %v447
  %v450 = vmul.f32 %v437, %v438
  %452 = vrot.lane.b32.xlu0 %v450, 64
  %v453 = vpop.permute.xlu0 %452
  %v455 = vadd.f32 %v449, %v453
  %v456 = vtanh.pop %v455
  %v457 = vmul.f32 %v444, %v456
  %459 = vrot.lane.b32.xlu0 %v457, 64
  %v460 = vpop.permute.xlu0 %459
  %v462 = vmul.f32 %v355, %v460
  %v463 = vsub.f32 1.0, %v355
  %v464 = vmul.f32 %v463, %v323
  %v465 = vadd.f32 %v462, %v464
  %467 = vrot.lane.b32.xlu0 %v455, 64
  %v468 = vpop.permute.xlu0 %467
  %v470 = vmul.f32 %v355, %v468
  %v471 = vmul.f32 %v463, %v330
  %v472 = vadd.f32 %v470, %v471
  %v473 = vmul.f32 %v465, %v349
  %s474 = scalar_lea.vmem %s3, 16
  %475 = vst.msk [vmem:[%s474] sm:$0xff] %vm190, %v473
  %v476 = vmul.f32 %v465, %v353
  %478 = vrot.lane.b32.xlu0 %v476, 96
  %v479 = vpop.permute.xlu0 %478
  %s481 = scalar_lea.vmem %s27, 40
  %482 = vst.msk [vmem:[%s481] sm:$0xff] %vm190, %v479
  %s483 = scalar_lea.vmem %s0, 48
  %v484 = vld [vmem:[%s483] sm:$0xff]
  %v485 = vld [vmem:[%s483 + $0x8] sm:$0xff]
  %s486 = scalar_lea.vmem %s1, 24
  %v487 = vld [vmem:[%s486] sm:$0xff]
  %489 = vset.pattern.permute.xlu0 0
  %490 = vperm.xlu0 %489, %v487
  %v491 = vpop.permute.xlu0 %490
  %493 = vset.pattern.permute.xlu0 1
  %494 = vperm.xlu0 %493, %v487
  %v495 = vpop.permute.xlu0 %494
  %v497 = vsel %vm39, %v491, %v495
  %v499 = vsel %vm71, %v465, 0
  %501 = vmatprep.subr.mxu0 %v41
  %502 = vmatpush1.msra.mxu0 %v40
  %503 = vmatprep.subr.mxu0 %v43
  %504 = vmatpush1.msra.mxu0 %v42
  %505 = vmatprep.subr.mxu0 %v45
  %506 = vmatpush1.msra.mxu0 %v44
  %507 = vmatprep.subr.mxu0 %v47
  %508 = vmatpush1.msra.mxu0 %v46
  %509 = vmatprep.subr.mxu0 %v49
  %510 = vmatpush1.msra.mxu0 %v48
  %511 = vmatprep.subr.mxu0 %v51
  %512 = vmatpush1.msra.mxu0 %v50
  %513 = vmatprep.subr.mxu0 %v53
  %514 = vmatpush1.msra.mxu0 %v52
  %515 = vmatprep.subr.mxu0 %v55
  %516 = vmatpush1.msra.mxu0 %v54
  %517 = vmatprep.subr.mxu0 0.0
  %518 = vmatpush1.msra.mxu0 0.0
  %519 = vmatprep.subr.mxu0 0.0
  %520 = vmatpush1.msra.mxu0 0.0
  %521 = vmatprep.subr.mxu0 0.0
  %522 = vmatpush1.msra.mxu0 0.0
  %523 = vmatprep.subr.mxu0 0.0
  %524 = vmatpush1.msra.mxu0 0.0
  %525 = vmatprep.subr.mxu0 0.0
  %526 = vmatpush1.msra.mxu0 0.0
  %527 = vmatprep.subr.mxu0 0.0
  %528 = vmatpush1.msra.mxu0 0.0
  %529 = vmatprep.subr.mxu0 0.0
  %530 = vmatpush1.msra.mxu0 0.0
  %531 = vmatprep.subr.mxu0 0.0
  %532 = vmatpush1.msra.mxu0 0.0
  %533 = vmatprep.subr.mxu0 0.0
  %534 = vmatpush1.msra.mxu0 0.0
  %535 = vmatprep.subr.mxu0 0.0
  %536 = vmatpush1.msra.mxu0 0.0
  %537 = vmatprep.subr.mxu0 0.0
  %538 = vmatpush1.msra.mxu0 0.0
  %539 = vmatprep.subr.mxu0 0.0
  %540 = vmatpush1.msra.mxu0 0.0
  %541 = vmatprep.subr.mxu0 0.0
  %542 = vmatpush1.msra.mxu0 0.0
  %543 = vmatprep.subr.mxu0 0.0
  %544 = vmatpush1.msra.mxu0 0.0
  %545 = vmatprep.subr.mxu0 0.0
  %546 = vmatpush1.msra.mxu0 0.0
  %547 = vmatprep.subr.mxu0 0.0
  %548 = vmatpush1.msra.mxu0 0.0
  %549 = vmatprep.subr.mxu0 0.0
  %550 = vmatpush1.msra.mxu0 0.0
  %551 = vmatprep.subr.mxu0 0.0
  %552 = vmatpush1.msra.mxu0 0.0
  %553 = vmatprep.subr.mxu0 0.0
  %554 = vmatpush1.msra.mxu0 0.0
  %555 = vmatprep.subr.mxu0 0.0
  %556 = vmatpush1.msra.mxu0 0.0
  %557 = vmatprep.subr.mxu0 0.0
  %558 = vmatpush1.msra.mxu0 0.0
  %559 = vmatprep.subr.mxu0 0.0
  %560 = vmatpush1.msra.mxu0 0.0
  %561 = vmatprep.subr.mxu0 0.0
  %562 = vmatpush1.msra.mxu0 0.0
  %563 = vmatprep.subr.mxu0 0.0
  %564 = vmatpush1.msra.mxu0 0.0
  %565 = vmatprep.mubr.f32.mxu0 0.0
  %566 = vmatmul.mubr.f32.gmra.mrb[0].mxu0 %v499
  %v567 = vpop.f32.mrb[0].mxu0
  %v568 = vadd.f32 0.0, %v567
  %v569 = vpop.f32.mrb[0].mxu0
  %v570 = vadd.f32 0.0, %v569
  %571 = vdwg.mxu0
  %v572 = vadd.f32 %v484, %v568
  %v573 = vadd.f32 %v485, %v570
  %v574 = vxor.u32 %v572, 2147483648
  %v575 = vmul.f32 %v574, 1.442695
  %v576 = vpow.pop %v575
  %v577 = vadd.f32 %v576, 1.0
  %v578 = vrcp.pop %v577
  %v579 = vmul.f32 1.0, %v578
  %v580 = vtanh.pop %v573
  %v581 = vxor.u32 %v573, 2147483648
  %v582 = vmul.f32 %v581, 1.442695
  %v583 = vpow.pop %v582
  %v584 = vadd.f32 %v583, 1.0
  %v585 = vrcp.pop %v584
  %v586 = vmul.f32 1.0, %v585
  %588 = vrot.lane.b32.xlu0 %v472, 64
  %v589 = vpop.permute.xlu0 %588
  %v591 = vmul.f32 %v579, %v589
  %v592 = vmul.f32 %v579, %v580
  %594 = vrot.lane.b32.xlu0 %v592, 64
  %v595 = vpop.permute.xlu0 %594
  %v597 = vadd.f32 %v591, %v595
  %v598 = vtanh.pop %v597
  %v599 = vmul.f32 %v586, %v598
  %601 = vrot.lane.b32.xlu0 %v599, 64
  %v602 = vpop.permute.xlu0 %601
  %v604 = vmul.f32 %v497, %v602
  %v605 = vsub.f32 1.0, %v497
  %v606 = vmul.f32 %v605, %v465
  %v607 = vadd.f32 %v604, %v606
  %609 = vrot.lane.b32.xlu0 %v597, 64
  %v610 = vpop.permute.xlu0 %609
  %v612 = vmul.f32 %v497, %v610
  %v613 = vmul.f32 %v605, %v472
  %v614 = vadd.f32 %v612, %v613
  %v615 = vmul.f32 %v607, %v491
  %s616 = scalar_lea.vmem %s3, 24
  %617 = vst.msk [vmem:[%s616] sm:$0xff] %vm190, %v615
  %v618 = vmul.f32 %v607, %v495
  %620 = vrot.lane.b32.xlu0 %v618, 96
  %v621 = vpop.permute.xlu0 %620
  %s623 = scalar_lea.vmem %s27, 32
  %624 = vst.msk [vmem:[%s623] sm:$0xff] %vm190, %v621
  %s625 = scalar_lea.vmem %s0, 64
  %v626 = vld [vmem:[%s625] sm:$0xff]
  %v627 = vld [vmem:[%s625 + $0x8] sm:$0xff]
  %s628 = scalar_lea.vmem %s1, 32
  %v629 = vld [vmem:[%s628] sm:$0xff]
  %631 = vset.pattern.permute.xlu0 0
  %632 = vperm.xlu0 %631, %v629
  %v633 = vpop.permute.xlu0 %632
  %635 = vset.pattern.permute.xlu0 1
  %636 = vperm.xlu0 %635, %v629
  %v637 = vpop.permute.xlu0 %636
  %v639 = vsel %vm39, %v633, %v637
  %v641 = vsel %vm71, %v607, 0
  %643 = vmatprep.subr.mxu0 %v41
  %644 = vmatpush1.msra.mxu0 %v40
  %645 = vmatprep.subr.mxu0 %v43
  %646 = vmatpush1.msra.mxu0 %v42
  %647 = vmatprep.subr.mxu0 %v45
  %648 = vmatpush1.msra.mxu0 %v44
  %649 = vmatprep.subr.mxu0 %v47
  %650 = vmatpush1.msra.mxu0 %v46
  %651 = vmatprep.subr.mxu0 %v49
  %652 = vmatpush1.msra.mxu0 %v48
  %653 = vmatprep.subr.mxu0 %v51
  %654 = vmatpush1.msra.mxu0 %v50
  %655 = vmatprep.subr.mxu0 %v53
  %656 = vmatpush1.msra.mxu0 %v52
  %657 = vmatprep.subr.mxu0 %v55
  %658 = vmatpush1.msra.mxu0 %v54
  %659 = vmatprep.subr.mxu0 0.0
  %660 = vmatpush1.msra.mxu0 0.0
  %661 = vmatprep.subr.mxu0 0.0
  %662 = vmatpush1.msra.mxu0 0.0
  %663 = vmatprep.subr.mxu0 0.0
  %664 = vmatpush1.msra.mxu0 0.0
  %665 = vmatprep.subr.mxu0 0.0
  %666 = vmatpush1.msra.mxu0 0.0
  %667 = vmatprep.subr.mxu0 0.0
  %668 = vmatpush1.msra.mxu0 0.0
  %669 = vmatprep.subr.mxu0 0.0
  %670 = vmatpush1.msra.mxu0 0.0
  %671 = vmatprep.subr.mxu0 0.0
  %672 = vmatpush1.msra.mxu0 0.0
  %673 = vmatprep.subr.mxu0 0.0
  %674 = vmatpush1.msra.mxu0 0.0
  %675 = vmatprep.subr.mxu0 0.0
  %676 = vmatpush1.msra.mxu0 0.0
  %677 = vmatprep.subr.mxu0 0.0
  %678 = vmatpush1.msra.mxu0 0.0
  %679 = vmatprep.subr.mxu0 0.0
  %680 = vmatpush1.msra.mxu0 0.0
  %681 = vmatprep.subr.mxu0 0.0
  %682 = vmatpush1.msra.mxu0 0.0
  %683 = vmatprep.subr.mxu0 0.0
  %684 = vmatpush1.msra.mxu0 0.0
  %685 = vmatprep.subr.mxu0 0.0
  %686 = vmatpush1.msra.mxu0 0.0
  %687 = vmatprep.subr.mxu0 0.0
  %688 = vmatpush1.msra.mxu0 0.0
  %689 = vmatprep.subr.mxu0 0.0
  %690 = vmatpush1.msra.mxu0 0.0
  %691 = vmatprep.subr.mxu0 0.0
  %692 = vmatpush1.msra.mxu0 0.0
  %693 = vmatprep.subr.mxu0 0.0
  %694 = vmatpush1.msra.mxu0 0.0
  %695 = vmatprep.subr.mxu0 0.0
  %696 = vmatpush1.msra.mxu0 0.0
  %697 = vmatprep.subr.mxu0 0.0
  %698 = vmatpush1.msra.mxu0 0.0
  %699 = vmatprep.subr.mxu0 0.0
  %700 = vmatpush1.msra.mxu0 0.0
  %701 = vmatprep.subr.mxu0 0.0
  %702 = vmatpush1.msra.mxu0 0.0
  %703 = vmatprep.subr.mxu0 0.0
  %704 = vmatpush1.msra.mxu0 0.0
  %705 = vmatprep.subr.mxu0 0.0
  %706 = vmatpush1.msra.mxu0 0.0
  %707 = vmatprep.mubr.f32.mxu0 0.0
  %708 = vmatmul.mubr.f32.gmra.mrb[0].mxu0 %v641
  %v709 = vpop.f32.mrb[0].mxu0
  %v710 = vadd.f32 0.0, %v709
  %v711 = vpop.f32.mrb[0].mxu0
  %v712 = vadd.f32 0.0, %v711
  %713 = vdwg.mxu0
  %v714 = vadd.f32 %v626, %v710
  %v715 = vadd.f32 %v627, %v712
  %v716 = vxor.u32 %v714, 2147483648
  %v717 = vmul.f32 %v716, 1.442695
  %v718 = vpow.pop %v717
  %v719 = vadd.f32 %v718, 1.0
  %v720 = vrcp.pop %v719
  %v721 = vmul.f32 1.0, %v720
  %v722 = vtanh.pop %v715
  %v723 = vxor.u32 %v715, 2147483648
  %v724 = vmul.f32 %v723, 1.442695
  %v725 = vpow.pop %v724
  %v726 = vadd.f32 %v725, 1.0
  %v727 = vrcp.pop %v726
  %v728 = vmul.f32 1.0, %v727
  %730 = vrot.lane.b32.xlu0 %v614, 64
  %v731 = vpop.permute.xlu0 %730
  %v733 = vmul.f32 %v721, %v731
  %v734 = vmul.f32 %v721, %v722
  %736 = vrot.lane.b32.xlu0 %v734, 64
  %v737 = vpop.permute.xlu0 %736
  %v739 = vadd.f32 %v733, %v737
  %v740 = vtanh.pop %v739
  %v741 = vmul.f32 %v728, %v740
  %743 = vrot.lane.b32.xlu0 %v741, 64
  %v744 = vpop.permute.xlu0 %743
  %v746 = vmul.f32 %v639, %v744
  %v747 = vsub.f32 1.0, %v639
  %v748 = vmul.f32 %v747, %v607
  %v749 = vadd.f32 %v746, %v748
  %751 = vrot.lane.b32.xlu0 %v739, 64
  %v752 = vpop.permute.xlu0 %751
  %v754 = vmul.f32 %v639, %v752
  %v755 = vmul.f32 %v747, %v614
  %v756 = vadd.f32 %v754, %v755
  %v757 = vmul.f32 %v749, %v633
  %s758 = scalar_lea.vmem %s3, 32
  %759 = vst.msk [vmem:[%s758] sm:$0xff] %vm190, %v757
  %v760 = vmul.f32 %v749, %v637
  %762 = vrot.lane.b32.xlu0 %v760, 96
  %v763 = vpop.permute.xlu0 %762
  %s765 = scalar_lea.vmem %s27, 24
  %766 = vst.msk [vmem:[%s765] sm:$0xff] %vm190, %v763
  %s767 = scalar_lea.vmem %s0, 80
  %v768 = vld [vmem:[%s767] sm:$0xff]
  %v769 = vld [vmem:[%s767 + $0x8] sm:$0xff]
  %s770 = scalar_lea.vmem %s1, 40
  %v771 = vld [vmem:[%s770] sm:$0xff]
  %773 = vset.pattern.permute.xlu0 0
  %774 = vperm.xlu0 %773, %v771
  %v775 = vpop.permute.xlu0 %774
  %777 = vset.pattern.permute.xlu0 1
  %778 = vperm.xlu0 %777, %v771
  %v779 = vpop.permute.xlu0 %778
  %v781 = vsel %vm39, %v775, %v779
  %v783 = vsel %vm71, %v749, 0
  %785 = vmatprep.subr.mxu0 %v41
  %786 = vmatpush1.msra.mxu0 %v40
  %787 = vmatprep.subr.mxu0 %v43
  %788 = vmatpush1.msra.mxu0 %v42
  %789 = vmatprep.subr.mxu0 %v45
  %790 = vmatpush1.msra.mxu0 %v44
  %791 = vmatprep.subr.mxu0 %v47
  %792 = vmatpush1.msra.mxu0 %v46
  %793 = vmatprep.subr.mxu0 %v49
  %794 = vmatpush1.msra.mxu0 %v48
  %795 = vmatprep.subr.mxu0 %v51
  %796 = vmatpush1.msra.mxu0 %v50
  %797 = vmatprep.subr.mxu0 %v53
  %798 = vmatpush1.msra.mxu0 %v52
  %799 = vmatprep.subr.mxu0 %v55
  %800 = vmatpush1.msra.mxu0 %v54
  %801 = vmatprep.subr.mxu0 0.0
  %802 = vmatpush1.msra.mxu0 0.0
  %803 = vmatprep.subr.mxu0 0.0
  %804 = vmatpush1.msra.mxu0 0.0
  %805 = vmatprep.subr.mxu0 0.0
  %806 = vmatpush1.msra.mxu0 0.0
  %807 = vmatprep.subr.mxu0 0.0
  %808 = vmatpush1.msra.mxu0 0.0
  %809 = vmatprep.subr.mxu0 0.0
  %810 = vmatpush1.msra.mxu0 0.0
  %811 = vmatprep.subr.mxu0 0.0
  %812 = vmatpush1.msra.mxu0 0.0
  %813 = vmatprep.subr.mxu0 0.0
  %814 = vmatpush1.msra.mxu0 0.0
  %815 = vmatprep.subr.mxu0 0.0
  %816 = vmatpush1.msra.mxu0 0.0
  %817 = vmatprep.subr.mxu0 0.0
  %818 = vmatpush1.msra.mxu0 0.0
  %819 = vmatprep.subr.mxu0 0.0
  %820 = vmatpush1.msra.mxu0 0.0
  %821 = vmatprep.subr.mxu0 0.0
  %822 = vmatpush1.msra.mxu0 0.0
  %823 = vmatprep.subr.mxu0 0.0
  %824 = vmatpush1.msra.mxu0 0.0
  %825 = vmatprep.subr.mxu0 0.0
  %826 = vmatpush1.msra.mxu0 0.0
  %827 = vmatprep.subr.mxu0 0.0
  %828 = vmatpush1.msra.mxu0 0.0
  %829 = vmatprep.subr.mxu0 0.0
  %830 = vmatpush1.msra.mxu0 0.0
  %831 = vmatprep.subr.mxu0 0.0
  %832 = vmatpush1.msra.mxu0 0.0
  %833 = vmatprep.subr.mxu0 0.0
  %834 = vmatpush1.msra.mxu0 0.0
  %835 = vmatprep.subr.mxu0 0.0
  %836 = vmatpush1.msra.mxu0 0.0
  %837 = vmatprep.subr.mxu0 0.0
  %838 = vmatpush1.msra.mxu0 0.0
  %839 = vmatprep.subr.mxu0 0.0
  %840 = vmatpush1.msra.mxu0 0.0
  %841 = vmatprep.subr.mxu0 0.0
  %842 = vmatpush1.msra.mxu0 0.0
  %843 = vmatprep.subr.mxu0 0.0
  %844 = vmatpush1.msra.mxu0 0.0
  %845 = vmatprep.subr.mxu0 0.0
  %846 = vmatpush1.msra.mxu0 0.0
  %847 = vmatprep.subr.mxu0 0.0
  %848 = vmatpush1.msra.mxu0 0.0
  %849 = vmatprep.mubr.f32.mxu0 0.0
  %850 = vmatmul.mubr.f32.gmra.mrb[0].mxu0 %v783
  %v851 = vpop.f32.mrb[0].mxu0
  %v852 = vadd.f32 0.0, %v851
  %v853 = vpop.f32.mrb[0].mxu0
  %v854 = vadd.f32 0.0, %v853
  %855 = vdwg.mxu0
  %v856 = vadd.f32 %v768, %v852
  %v857 = vadd.f32 %v769, %v854
  %v858 = vxor.u32 %v856, 2147483648
  %v859 = vmul.f32 %v858, 1.442695
  %v860 = vpow.pop %v859
  %v861 = vadd.f32 %v860, 1.0
  %v862 = vrcp.pop %v861
  %v863 = vmul.f32 1.0, %v862
  %v864 = vtanh.pop %v857
  %v865 = vxor.u32 %v857, 2147483648
  %v866 = vmul.f32 %v865, 1.442695
  %v867 = vpow.pop %v866
  %v868 = vadd.f32 %v867, 1.0
  %v869 = vrcp.pop %v868
  %v870 = vmul.f32 1.0, %v869
  %872 = vrot.lane.b32.xlu0 %v756, 64
  %v873 = vpop.permute.xlu0 %872
  %v875 = vmul.f32 %v863, %v873
  %v876 = vmul.f32 %v863, %v864
  %878 = vrot.lane.b32.xlu0 %v876, 64
  %v879 = vpop.permute.xlu0 %878
  %v881 = vadd.f32 %v875, %v879
  %v882 = vtanh.pop %v881
  %v883 = vmul.f32 %v870, %v882
  %885 = vrot.lane.b32.xlu0 %v883, 64
  %v886 = vpop.permute.xlu0 %885
  %v888 = vmul.f32 %v781, %v886
  %v889 = vsub.f32 1.0, %v781
  %v890 = vmul.f32 %v889, %v749
  %v891 = vadd.f32 %v888, %v890
  %893 = vrot.lane.b32.xlu0 %v881, 64
  %v894 = vpop.permute.xlu0 %893
  %v896 = vmul.f32 %v781, %v894
  %v897 = vmul.f32 %v889, %v756
  %v898 = vadd.f32 %v896, %v897
  %v899 = vmul.f32 %v891, %v775
  %s900 = scalar_lea.vmem %s3, 40
  %901 = vst.msk [vmem:[%s900] sm:$0xff] %vm190, %v899
  %v902 = vmul.f32 %v891, %v779
  %904 = vrot.lane.b32.xlu0 %v902, 96
  %v905 = vpop.permute.xlu0 %904
  %s907 = scalar_lea.vmem %s27, 16
  %908 = vst.msk [vmem:[%s907] sm:$0xff] %vm190, %v905
  %s909 = scalar_lea.vmem %s0, 96
  %v910 = vld [vmem:[%s909] sm:$0xff]
  %v911 = vld [vmem:[%s909 + $0x8] sm:$0xff]
  %s912 = scalar_lea.vmem %s1, 48
  %v913 = vld [vmem:[%s912] sm:$0xff]
  %915 = vset.pattern.permute.xlu0 0
  %916 = vperm.xlu0 %915, %v913
  %v917 = vpop.permute.xlu0 %916
  %919 = vset.pattern.permute.xlu0 1
  %920 = vperm.xlu0 %919, %v913
  %v921 = vpop.permute.xlu0 %920
  %v923 = vsel %vm39, %v917, %v921
  %v925 = vsel %vm71, %v891, 0
  %927 = vmatprep.subr.mxu0 %v41
  %928 = vmatpush1.msra.mxu0 %v40
  %929 = vmatprep.subr.mxu0 %v43
  %930 = vmatpush1.msra.mxu0 %v42
  %931 = vmatprep.subr.mxu0 %v45
  %932 = vmatpush1.msra.mxu0 %v44
  %933 = vmatprep.subr.mxu0 %v47
  %934 = vmatpush1.msra.mxu0 %v46
  %935 = vmatprep.subr.mxu0 %v49
  %936 = vmatpush1.msra.mxu0 %v48
  %937 = vmatprep.subr.mxu0 %v51
  %938 = vmatpush1.msra.mxu0 %v50
  %939 = vmatprep.subr.mxu0 %v53
  %940 = vmatpush1.msra.mxu0 %v52
  %941 = vmatprep.subr.mxu0 %v55
  %942 = vmatpush1.msra.mxu0 %v54
  %943 = vmatprep.subr.mxu0 0.0
  %944 = vmatpush1.msra.mxu0 0.0
  %945 = vmatprep.subr.mxu0 0.0
  %946 = vmatpush1.msra.mxu0 0.0
  %947 = vmatprep.subr.mxu0 0.0
  %948 = vmatpush1.msra.mxu0 0.0
  %949 = vmatprep.subr.mxu0 0.0
  %950 = vmatpush1.msra.mxu0 0.0
  %951 = vmatprep.subr.mxu0 0.0
  %952 = vmatpush1.msra.mxu0 0.0
  %953 = vmatprep.subr.mxu0 0.0
  %954 = vmatpush1.msra.mxu0 0.0
  %955 = vmatprep.subr.mxu0 0.0
  %956 = vmatpush1.msra.mxu0 0.0
  %957 = vmatprep.subr.mxu0 0.0
  %958 = vmatpush1.msra.mxu0 0.0
  %959 = vmatprep.subr.mxu0 0.0
  %960 = vmatpush1.msra.mxu0 0.0
  %961 = vmatprep.subr.mxu0 0.0
  %962 = vmatpush1.msra.mxu0 0.0
  %963 = vmatprep.subr.mxu0 0.0
  %964 = vmatpush1.msra.mxu0 0.0
  %965 = vmatprep.subr.mxu0 0.0
  %966 = vmatpush1.msra.mxu0 0.0
  %967 = vmatprep.subr.mxu0 0.0
  %968 = vmatpush1.msra.mxu0 0.0
  %969 = vmatprep.subr.mxu0 0.0
  %970 = vmatpush1.msra.mxu0 0.0
  %971 = vmatprep.subr.mxu0 0.0
  %972 = vmatpush1.msra.mxu0 0.0
  %973 = vmatprep.subr.mxu0 0.0
  %974 = vmatpush1.msra.mxu0 0.0
  %975 = vmatprep.subr.mxu0 0.0
  %976 = vmatpush1.msra.mxu0 0.0
  %977 = vmatprep.subr.mxu0 0.0
  %978 = vmatpush1.msra.mxu0 0.0
  %979 = vmatprep.subr.mxu0 0.0
  %980 = vmatpush1.msra.mxu0 0.0
  %981 = vmatprep.subr.mxu0 0.0
  %982 = vmatpush1.msra.mxu0 0.0
  %983 = vmatprep.subr.mxu0 0.0
  %984 = vmatpush1.msra.mxu0 0.0
  %985 = vmatprep.subr.mxu0 0.0
  %986 = vmatpush1.msra.mxu0 0.0
  %987 = vmatprep.subr.mxu0 0.0
  %988 = vmatpush1.msra.mxu0 0.0
  %989 = vmatprep.subr.mxu0 0.0
  %990 = vmatpush1.msra.mxu0 0.0
  %991 = vmatprep.mubr.f32.mxu0 0.0
  %992 = vmatmul.mubr.f32.gmra.mrb[0].mxu0 %v925
  %v993 = vpop.f32.mrb[0].mxu0
  %v994 = vadd.f32 0.0, %v993
  %v995 = vpop.f32.mrb[0].mxu0
  %v996 = vadd.f32 0.0, %v995
  %997 = vdwg.mxu0
  %v998 = vadd.f32 %v910, %v994
  %v999 = vadd.f32 %v911, %v996
  %v1000 = vxor.u32 %v998, 2147483648
  %v1001 = vmul.f32 %v1000, 1.442695
  %v1002 = vpow.pop %v1001
  %v1003 = vadd.f32 %v1002, 1.0
  %v1004 = vrcp.pop %v1003
  %v1005 = vmul.f32 1.0, %v1004
  %v1006 = vtanh.pop %v999
  %v1007 = vxor.u32 %v999, 2147483648
  %v1008 = vmul.f32 %v1007, 1.442695
  %v1009 = vpow.pop %v1008
  %v1010 = vadd.f32 %v1009, 1.0
  %v1011 = vrcp.pop %v1010
  %v1012 = vmul.f32 1.0, %v1011
  %1014 = vrot.lane.b32.xlu0 %v898, 64
  %v1015 = vpop.permute.xlu0 %1014
  %v1017 = vmul.f32 %v1005, %v1015
  %v1018 = vmul.f32 %v1005, %v1006
  %1020 = vrot.lane.b32.xlu0 %v1018, 64
  %v1021 = vpop.permute.xlu0 %1020
  %v1023 = vadd.f32 %v1017, %v1021
  %v1024 = vtanh.pop %v1023
  %v1025 = vmul.f32 %v1012, %v1024
  %1027 = vrot.lane.b32.xlu0 %v1025, 64
  %v1028 = vpop.permute.xlu0 %1027
  %v1030 = vmul.f32 %v923, %v1028
  %v1031 = vsub.f32 1.0, %v923
  %v1032 = vmul.f32 %v1031, %v891
  %v1033 = vadd.f32 %v1030, %v1032
  %1035 = vrot.lane.b32.xlu0 %v1023, 64
  %v1036 = vpop.permute.xlu0 %1035
  %v1038 = vmul.f32 %v923, %v1036
  %v1039 = vmul.f32 %v1031, %v898
  %v1040 = vadd.f32 %v1038, %v1039
  %v1041 = vmul.f32 %v1033, %v917
  %s1042 = scalar_lea.vmem %s3, 48
  %1043 = vst.msk [vmem:[%s1042] sm:$0xff] %vm190, %v1041
  %v1044 = vmul.f32 %v1033, %v921
  %1046 = vrot.lane.b32.xlu0 %v1044, 96
  %v1047 = vpop.permute.xlu0 %1046
  %s1049 = scalar_lea.vmem %s27, 8
  %1050 = vst.msk [vmem:[%s1049] sm:$0xff] %vm190, %v1047
  %s1051 = scalar_lea.vmem %s0, 112
  %v1052 = vld [vmem:[%s1051] sm:$0xff]
  %v1053 = vld [vmem:[%s1051 + $0x8] sm:$0xff]
  %s1054 = scalar_lea.vmem %s1, 56
  %v1055 = vld [vmem:[%s1054] sm:$0xff]
  %1057 = vset.pattern.permute.xlu0 0
  %1058 = vperm.xlu0 %1057, %v1055
  %v1059 = vpop.permute.xlu0 %1058
  %1061 = vset.pattern.permute.xlu0 1
  %1062 = vperm.xlu0 %1061, %v1055
  %v1063 = vpop.permute.xlu0 %1062
  %v1065 = vsel %vm39, %v1059, %v1063
  %v1067 = vsel %vm71, %v1033, 0
  %1069 = vmatprep.subr.mxu0 %v41
  %1070 = vmatpush1.msra.mxu0 %v40
  %1071 = vmatprep.subr.mxu0 %v43
  %1072 = vmatpush1.msra.mxu0 %v42
  %1073 = vmatprep.subr.mxu0 %v45
  %1074 = vmatpush1.msra.mxu0 %v44
  %1075 = vmatprep.subr.mxu0 %v47
  %1076 = vmatpush1.msra.mxu0 %v46
  %1077 = vmatprep.subr.mxu0 %v49
  %1078 = vmatpush1.msra.mxu0 %v48
  %1079 = vmatprep.subr.mxu0 %v51
  %1080 = vmatpush1.msra.mxu0 %v50
  %1081 = vmatprep.subr.mxu0 %v53
  %1082 = vmatpush1.msra.mxu0 %v52
  %1083 = vmatprep.subr.mxu0 %v55
  %1084 = vmatpush1.msra.mxu0 %v54
  %1085 = vmatprep.subr.mxu0 0.0
  %1086 = vmatpush1.msra.mxu0 0.0
  %1087 = vmatprep.subr.mxu0 0.0
  %1088 = vmatpush1.msra.mxu0 0.0
  %1089 = vmatprep.subr.mxu0 0.0
  %1090 = vmatpush1.msra.mxu0 0.0
  %1091 = vmatprep.subr.mxu0 0.0
  %1092 = vmatpush1.msra.mxu0 0.0
  %1093 = vmatprep.subr.mxu0 0.0
  %1094 = vmatpush1.msra.mxu0 0.0
  %1095 = vmatprep.subr.mxu0 0.0
  %1096 = vmatpush1.msra.mxu0 0.0
  %1097 = vmatprep.subr.mxu0 0.0
  %1098 = vmatpush1.msra.mxu0 0.0
  %1099 = vmatprep.subr.mxu0 0.0
  %1100 = vmatpush1.msra.mxu0 0.0
  %1101 = vmatprep.subr.mxu0 0.0
  %1102 = vmatpush1.msra.mxu0 0.0
  %1103 = vmatprep.subr.mxu0 0.0
  %1104 = vmatpush1.msra.mxu0 0.0
  %1105 = vmatprep.subr.mxu0 0.0
  %1106 = vmatpush1.msra.mxu0 0.0
  %1107 = vmatprep.subr.mxu0 0.0
  %1108 = vmatpush1.msra.mxu0 0.0
  %1109 = vmatprep.subr.mxu0 0.0
  %1110 = vmatpush1.msra.mxu0 0.0
  %1111 = vmatprep.subr.mxu0 0.0
  %1112 = vmatpush1.msra.mxu0 0.0
  %1113 = vmatprep.subr.mxu0 0.0
  %1114 = vmatpush1.msra.mxu0 0.0
  %1115 = vmatprep.subr.mxu0 0.0
  %1116 = vmatpush1.msra.mxu0 0.0
  %1117 = vmatprep.subr.mxu0 0.0
  %1118 = vmatpush1.msra.mxu0 0.0
  %1119 = vmatprep.subr.mxu0 0.0
  %1120 = vmatpush1.msra.mxu0 0.0
  %1121 = vmatprep.subr.mxu0 0.0
  %1122 = vmatpush1.msra.mxu0 0.0
  %1123 = vmatprep.subr.mxu0 0.0
  %1124 = vmatpush1.msra.mxu0 0.0
  %1125 = vmatprep.subr.mxu0 0.0
  %1126 = vmatpush1.msra.mxu0 0.0
  %1127 = vmatprep.subr.mxu0 0.0
  %1128 = vmatpush1.msra.mxu0 0.0
  %1129 = vmatprep.subr.mxu0 0.0
  %1130 = vmatpush1.msra.mxu0 0.0
  %1131 = vmatprep.subr.mxu0 0.0
  %1132 = vmatpush1.msra.mxu0 0.0
  %1133 = vmatprep.mubr.f32.mxu0 0.0
  %1134 = vmatmul.mubr.f32.gmra.mrb[0].mxu0 %v1067
  %v1135 = vpop.f32.mrb[0].mxu0
  %v1136 = vadd.f32 0.0, %v1135
  %v1137 = vpop.f32.mrb[0].mxu0
  %v1138 = vadd.f32 0.0, %v1137
  %1139 = vdwg.mxu0
  %v1140 = vadd.f32 %v1052, %v1136
  %v1141 = vadd.f32 %v1053, %v1138
  %v1142 = vxor.u32 %v1140, 2147483648
  %v1143 = vmul.f32 %v1142, 1.442695
  %v1144 = vpow.pop %v1143
  %v1145 = vadd.f32 %v1144, 1.0
  %v1146 = vrcp.pop %v1145
  %v1147 = vmul.f32 1.0, %v1146
  %v1148 = vtanh.pop %v1141
  %v1149 = vxor.u32 %v1141, 2147483648
  %v1150 = vmul.f32 %v1149, 1.442695
  %v1151 = vpow.pop %v1150
  %v1152 = vadd.f32 %v1151, 1.0
  %v1153 = vrcp.pop %v1152
  %v1154 = vmul.f32 1.0, %v1153
  %1156 = vrot.lane.b32.xlu0 %v1040, 64
  %v1157 = vpop.permute.xlu0 %1156
  %v1159 = vmul.f32 %v1147, %v1157
  %v1160 = vmul.f32 %v1147, %v1148
  %1162 = vrot.lane.b32.xlu0 %v1160, 64
  %v1163 = vpop.permute.xlu0 %1162
  %v1165 = vadd.f32 %v1159, %v1163
  %v1166 = vtanh.pop %v1165
  %v1167 = vmul.f32 %v1154, %v1166
  %1169 = vrot.lane.b32.xlu0 %v1167, 64
  %v1170 = vpop.permute.xlu0 %1169
  %v1172 = vmul.f32 %v1065, %v1170
  %v1173 = vsub.f32 1.0, %v1065
  %v1174 = vmul.f32 %v1173, %v1033
  %v1175 = vadd.f32 %v1172, %v1174
  %1177 = vrot.lane.b32.xlu0 %v1165, 64
  %v1178 = vpop.permute.xlu0 %1177
  %v1180 = vmul.f32 %v1065, %v1178
  %v1181 = vmul.f32 %v1173, %v1040
  %v1182 = vadd.f32 %v1180, %v1181
  %v1183 = vmul.f32 %v1175, %v1059
  %s1184 = scalar_lea.vmem %s3, 56
  %1185 = vst.msk [vmem:[%s1184] sm:$0xff] %vm190, %v1183
  %v1186 = vmul.f32 %v1175, %v1063
  %1188 = vrot.lane.b32.xlu0 %v1186, 96
  %v1189 = vpop.permute.xlu0 %1188
  %1191 = vst.msk [vmem:[%s27] sm:$0xff] %vm190, %v1189
  %1192 = vst.msk [vmem:[#allocation2] sm:$0xff] %vm71, %v1175
  %1193 = vst.msk [vmem:[#allocation3] sm:$0xff] %vm71, %v1182
  %s1194 = ssub.s32 0, 0
  %s1195 = smul.u32 8, %s1194
  %p1196 = scmp.lt.s32.totalorder %s1195, 7
  %s1197 = scalar_select %p1196, %s1195, 7
  %s1198 = smul.addr %s1197, 8
  %s1199 = scalar_lea.vmem %s4, %s1198
  // Predicated region
  $region18: #{seq_tagger_forward.4} parent=0 // pred_check
    _
  $region19: #{seq_tagger_forward.4} parent=0 // pred_check_branch
    %1201 = sbr.rel (0) target = $region21
  $region20: #{seq_tagger_forward.4} parent=0 // pred_region
    _
  $region21: #{seq_tagger_forward.4} parent=0 // pred_fallthru
    _
  // Predicated region
  $region22: #{seq_tagger_forward.4} parent=0 // pred_check
    _
  $region23: #{seq_tagger_forward.4} parent=0 // pred_check_branch
    %1203 = sbr.rel (0) target = $region25
  $region24: #{seq_tagger_forward.4} parent=0 // pred_region
    %s1204 = ssub.s32 0, 0
    %s1205 = smul.u32 8, %s1204
  $region25: #{seq_tagger_forward.4} parent=0 // pred_fallthru
    _
  // Predicated region
  $region26: #{seq_tagger_forward.4} parent=0 // pred_check
    _
  $region27: #{seq_tagger_forward.4} parent=0 // pred_check_branch
    %1207 = sbr.rel (0) target = $region29
  $region28: #{seq_tagger_forward.4} parent=0 // pred_region
    _
  $region29: #{seq_tagger_forward.4} parent=0 // pred_fallthru
    _
  // Predicated region
  $region30: #{seq_tagger_forward.4} parent=0 // pred_check
    _
  $region31: #{seq_tagger_forward.4} parent=0 // pred_check_branch
    %1209 = sbr.rel (0) target = $region33
  $region32: #{seq_tagger_forward.4} parent=0 // pred_region
    %s1210 = ssub.s32 0, 0
    %s1211 = smul.u32 8, %s1210
    %p1212 = scmp.lt.s32.totalorder %s1211, 7
    %s1213 = scalar_select %p1212, %s1211, 7
    %s1214 = smul.addr %s1213, 8
    %s1215 = scalar_lea.vmem %s4, %s1214
  $region33: #{seq_tagger_forward.4} parent=0 // pred_fallthru
    _

// kernel: seq_tagger_forward.5
$region0: #{seq_tagger_forward.5}
  #allocation0 [shape = 'u32[]', space=smem, size = 0x4, offset = 0x4, fixed_abs, tag = 'smem constant byte address 0x4 - core index']
  #allocation1 [shape = 'u32[144,128]{1,0:T(1,128)}', space=vmem, size = 0x12000, scoped, tag = 'internal scratch']
  %s0 = inlined_call_operand.vmem [shape: f32[64,32], index: 0, kind: input, shape index: {}]
  %s1 = inlined_call_operand.vmem [shape: f32[64,32], index: 1, kind: input, shape index: {}]
  %s2 = inlined_call_operand.vmem [shape: s32[64,1], index: 2, kind: input, shape index: {}]
  %s3 = inlined_call_operand.vmem [shape: f32[64,1], index: 3, kind: input, shape index: {}]
  %s4 = inlined_call_operand.vmem [shape: bf16[64,128], index: 4, kind: input, shape index: {}]
  %s5 = inlined_call_operand.vmem [shape: f32[1,128], index: 5, kind: input, shape index: {}]
  %s6 = inlined_call_operand.vmem [shape: s32[64,1], index: 6, kind: output, shape index: {0}]
  %s7 = inlined_call_operand.vmem [shape: f32[8,128], index: 7, kind: output, shape index: {1}]
  %8 = xla_tuple %s6, %s7
  %s9 = sld [smem:[#allocation0]]
  $region42: #{seq_tagger_forward.5} parent=0
    _
  %s11 = ssub.s32 1, %s9
  %s12 = scalar_select 0, %s11, %s9
  // Predicated region
  $region2: #{seq_tagger_forward.5} parent=0 // pred_check
    _
  $region3: #{seq_tagger_forward.5} parent=0 // pred_check_branch
    %14 = sbr.rel (0) target = $region5
  $region4: #{seq_tagger_forward.5} parent=0 // pred_region
    _
  $region5: #{seq_tagger_forward.5} parent=0 // pred_fallthru
    _
  // Predicated region
  $region6: #{seq_tagger_forward.5} parent=0 // pred_check
    _
  $region7: #{seq_tagger_forward.5} parent=0 // pred_check_branch
    %16 = sbr.rel (0) target = $region9
  $region8: #{seq_tagger_forward.5} parent=0 // pred_region
    _
  $region9: #{seq_tagger_forward.5} parent=0 // pred_fallthru
    _
  // Predicated region
  $region10: #{seq_tagger_forward.5} parent=0 // pred_check
    _
  $region11: #{seq_tagger_forward.5} parent=0 // pred_check_branch
    %18 = sbr.rel (0) target = $region13
  $region12: #{seq_tagger_forward.5} parent=0 // pred_region
    _
  $region13: #{seq_tagger_forward.5} parent=0 // pred_fallthru
    _
  // Predicated region
  $region14: #{seq_tagger_forward.5} parent=0 // pred_check
    _
  $region15: #{seq_tagger_forward.5} parent=0 // pred_check_branch
    %20 = sbr.rel (0) target = $region17
  $region16: #{seq_tagger_forward.5} parent=0 // pred_region
    _
  $region17: #{seq_tagger_forward.5} parent=0 // pred_fallthru
    _
  // Predicated region
  $region18: #{seq_tagger_forward.5} parent=0 // pred_check
    _
  $region19: #{seq_tagger_forward.5} parent=0 // pred_check_branch
    %22 = sbr.rel (0) target = $region21
  $region20: #{seq_tagger_forward.5} parent=0 // pred_region
    _
  $region21: #{seq_tagger_forward.5} parent=0 // pred_fallthru
    _
  // Predicated region
  $region22: #{seq_tagger_forward.5} parent=0 // pred_check
    _
  $region23: #{seq_tagger_forward.5} parent=0 // pred_check_branch
    %24 = sbr.rel (0) target = $region25
  $region24: #{seq_tagger_forward.5} parent=0 // pred_region
    _
  $region25: #{seq_tagger_forward.5} parent=0 // pred_fallthru
    _
  %v26 = vld [vmem:[%s0] sm:$0xff]
  %v27 = vld [vmem:[%s0 + $0x8] sm:$0xff]
  %v28 = vld [vmem:[%s0 + $0x10] sm:$0xff]
  %v29 = vld [vmem:[%s0 + $0x18] sm:$0xff]
  %v30 = vld [vmem:[%s0 + $0x20] sm:$0xff]
  %v31 = vld [vmem:[%s0 + $0x28] sm:$0xff]
  %v32 = vld [vmem:[%s0 + $0x30] sm:$0xff]
  %v33 = vld [vmem:[%s0 + $0x38] sm:$0xff]
  %v34 = vld [vmem:[%s1] sm:$0xff]
  %v35 = vld [vmem:[%s1 + $0x8] sm:$0xff]
  %v36 = vld [vmem:[%s1 + $0x10] sm:$0xff]
  %v37 = vld [vmem:[%s1 + $0x18] sm:$0xff]
  %v38 = vld [vmem:[%s1 + $0x20] sm:$0xff]
  %v39 = vld [vmem:[%s1 + $0x28] sm:$0xff]
  %v40 = vld [vmem:[%s1 + $0x30] sm:$0xff]
  %v41 = vld [vmem:[%s1 + $0x38] sm:$0xff]
  %50 = vrot.lane.b32.xlu0 %v34, 32
  %v51 = vpop.permute.xlu0 %50
  %52 = vrot.lane.b32.xlu0 %v35, 32
  %v53 = vpop.permute.xlu0 %52
  %54 = vrot.lane.b32.xlu0 %v36, 32
  %v55 = vpop.permute.xlu0 %54
  %56 = vrot.lane.b32.xlu0 %v37, 32
  %v57 = vpop.permute.xlu0 %56
  %58 = vrot.lane.b32.xlu0 %v38, 32
  %v59 = vpop.permute.xlu0 %58
  %60 = vrot.lane.b32.xlu0 %v39, 32
  %v61 = vpop.permute.xlu0 %60
  %62 = vrot.lane.b32.xlu0 %v40, 32
  %v63 = vpop.permute.xlu0 %62
  %64 = vrot.lane.b32.xlu0 %v41, 32
  %v65 = vpop.permute.xlu0 %64
  %vm74 = vcmask 261120
  %v75 = vsel %vm74, %v26, %v51
  %v76 = vsel %vm74, %v27, %v53
  %v77 = vsel %vm74, %v28, %v55
  %v78 = vsel %vm74, %v29, %v57
  %v79 = vsel %vm74, %v30, %v59
  %v80 = vsel %vm74, %v31, %v61
  %v81 = vsel %vm74, %v32, %v63
  %v82 = vsel %vm74, %v33, %v65
  %v83 = vpack.c.bf16 %v76, %v75
  %v84 = vpack.c.bf16 %v78, %v77
  %v85 = vpack.c.bf16 %v80, %v79
  %v86 = vpack.c.bf16 %v82, %v81
  %v87 = vld [vmem:[%s4] sm:$0xf]
  %v88 = vld [vmem:[%s4 + $0x4] sm:$0xf]
  %v89 = vld [vmem:[%s4 + $0x8] sm:$0xf]
  %v90 = vld [vmem:[%s4 + $0xc] sm:$0xf]
  %v91 = vld [vmem:[%s4 + $0x10] sm:$0xf]
  %v92 = vld [vmem:[%s4 + $0x14] sm:$0xf]
  %v93 = vld [vmem:[%s4 + $0x18] sm:$0xf]
  %v94 = vld [vmem:[%s4 + $0x1c] sm:$0xf]
  %v95 = vld [vmem:[%s5] sm:$0x1]
  %v97 = vlaneseq
  %v98 = vshrl.u32 %v97, 7
  %v99 = vsub.s32 0, %v98
  %v100 = vrot.slane %v95, %v99
  %v110 = vunpack.c.l.b16 %v87
  %v111 = vunpack.c.l.b16 %v88
  %v112 = vunpack.c.l.b16 %v89
  %v113 = vunpack.c.l.b16 %v90
  %v114 = vunpack.c.l.b16 %v91
  %v115 = vunpack.c.l.b16 %v92
  %v116 = vunpack.c.l.b16 %v93
  %v117 = vunpack.c.l.b16 %v94
  %v118 = vpack.c.b16 %v111, %v110
  %v119 = vpack.c.b16 %v113, %v112
  %v120 = vpack.c.b16 %v115, %v114
  %v121 = vpack.c.b16 %v117, %v116
  %vm126 = vcmask 523264
  %v128 = vsel %vm126, %v83, 0
  %v131 = vsel %vm126, %v84, 0
  %v134 = vsel %vm126, %v85, 0
  %v137 = vsel %vm126, %v86, 0
  %139 = vmatprep.subr.bf16.mxu0 0
  %140 = vmatpush1.bf16.msra.mxu0 %v118
  %141 = vmatprep.subr.bf16.mxu0 0
  %142 = vmatpush1.bf16.msra.mxu0 %v119
  %143 = vmatprep.subr.bf16.mxu0 0
  %144 = vmatpush1.bf16.msra.mxu0 %v120
  %145 = vmatprep.subr.bf16.mxu0 0
  %146 = vmatpush1.bf16.msra.mxu0 %v121
  %147 = vmatprep.subr.bf16.mxu0 0
  %148 = vmatpush1.bf16.msra.mxu0 0
  %149 = vmatprep.subr.bf16.mxu0 0
  %150 = vmatpush1.bf16.msra.mxu0 0
  %151 = vmatprep.subr.bf16.mxu0 0
  %152 = vmatpush1.bf16.msra.mxu0 0
  %153 = vmatprep.subr.bf16.mxu0 0
  %154 = vmatpush1.bf16.msra.mxu0 0
  %155 = vmatprep.subr.bf16.mxu0 0
  %156 = vmatpush1.bf16.msra.mxu0 0
  %157 = vmatprep.subr.bf16.mxu0 0
  %158 = vmatpush1.bf16.msra.mxu0 0
  %159 = vmatprep.subr.bf16.mxu0 0
  %160 = vmatpush1.bf16.msra.mxu0 0
  %161 = vmatprep.subr.bf16.mxu0 0
  %162 = vmatpush1.bf16.msra.mxu0 0
  %163 = vmatprep.subr.bf16.mxu0 0
  %164 = vmatpush1.bf16.msra.mxu0 0
  %165 = vmatprep.subr.bf16.mxu0 0
  %166 = vmatpush1.bf16.msra.mxu0 0
  %167 = vmatprep.subr.bf16.mxu0 0
  %168 = vmatpush1.bf16.msra.mxu0 0
  %169 = vmatprep.subr.bf16.mxu0 0
  %170 = vmatpush1.bf16.msra.mxu0 0
  %171 = vmatprep.mubr.bf16.mxu0 0
  %172 = vmatmul.mubr.bf16.gmra.mrb[0].mxu0 %v128
  %v173 = vpop.f32.mrb[0].mxu0
  %v174 = vadd.f32 %v100, %v173
  %v175 = vpop.f32.mrb[0].mxu0
  %v176 = vpop.f32.mrb[0].mxu0
  %v177 = vadd.f32 %v100, %v176
  %v178 = vpop.f32.mrb[0].mxu0
  %179 = vmatprep.mubr.bf16.mxu0 0
  %180 = vmatmul.mubr.bf16.gmra.mrb[0].mxu0 %v131
  %v181 = vpop.f32.mrb[0].mxu0
  %v182 = vadd.f32 %v100, %v181
  %v183 = vpop.f32.mrb[0].mxu0
  %v184 = vpop.f32.mrb[0].mxu0
  %v185 = vadd.f32 %v100, %v184
  %v186 = vpop.f32.mrb[0].mxu0
  %187 = vmatprep.mubr.bf16.mxu0 0
  %188 = vmatmul.mubr.bf16.gmra.mrb[0].mxu0 %v134
  %v189 = vpop.f32.mrb[0].mxu0
  %v190 = vadd.f32 %v100, %v189
  %v191 = vpop.f32.mrb[0].mxu0
  %v192 = vpop.f32.mrb[0].mxu0
  %v193 = vadd.f32 %v100, %v192
  %v194 = vpop.f32.mrb[0].mxu0
  %195 = vmatprep.mubr.bf16.mxu0 0
  %196 = vmatmul.mubr.bf16.gmra.mrb[0].mxu0 %v137
  %v197 = vpop.f32.mrb[0].mxu0
  %v198 = vadd.f32 %v100, %v197
  %v199 = vpop.f32.mrb[0].mxu0
  %v200 = vpop.f32.mrb[0].mxu0
  %v201 = vadd.f32 %v100, %v200
  %v202 = vpop.f32.mrb[0].mxu0
  %203 = vdwg.mxu0
  %204 = vmax.xlane.f32.xlu0 %v174
  %v205 = vpop.xlane.xlu0 %204
  %206 = vmax.xlane.f32.xlu0 %v177
  %v207 = vpop.xlane.xlu0 %206
  %208 = vmax.xlane.f32.xlu0 %v182
  %v209 = vpop.xlane.xlu0 %208
  %210 = vmax.xlane.f32.xlu0 %v185
  %v211 = vpop.xlane.xlu0 %210
  %212 = vmax.xlane.f32.xlu0 %v190
  %v213 = vpop.xlane.xlu0 %212
  %214 = vmax.xlane.f32.xlu0 %v193
  %v215 = vpop.xlane.xlu0 %214
  %216 = vmax.xlane.f32.xlu0 %v198
  %v217 = vpop.xlane.xlu0 %216
  %218 = vmax.xlane.f32.xlu0 %v201
  %v219 = vpop.xlane.xlu0 %218
  %v220 = vlaneseq
  %v221 = vand.u32 %v220, 127
  %vm222 = vcmp.eq.f32.partialorder %v174, %v205
  %vm223 = vcmp.eq.f32.partialorder %v177, %v207
  %vm224 = vcmp.eq.f32.partialorder %v182, %v209
  %vm225 = vcmp.eq.f32.partialorder %v185, %v211
  %vm226 = vcmp.eq.f32.partialorder %v190, %v213
  %vm227 = vcmp.eq.f32.partialorder %v193, %v215
  %vm228 = vcmp.eq.f32.partialorder %v198, %v217
  %vm229 = vcmp.eq.f32.partialorder %v201, %v219
  %v230 = vsel %vm222, %v221, 128
  %v231 = vsel %vm223, %v221, 128
  %v232 = vsel %vm224, %v221, 128
  %v233 = vsel %vm225, %v221, 128
  %v234 = vsel %vm226, %v221, 128
  %v235 = vsel %vm227, %v221, 128
  %v236 = vsel %vm228, %v221, 128
  %v237 = vsel %vm229, %v221, 128
  %v238 = vand.u32 %v230, 65535
  %v239 = vshra.s32 %v230, 16
  %v240 = vcvt.s32.f32 %v238
  %v241 = vcvt.s32.f32 %v239
  %242 = vmin.xlane.f32.xlu0 %v241
  %v243 = vpop.xlane.xlu0 %242
  %vm244 = vcmp.eq.f32.partialorder %v241, %v243
  %v245 = vsel %vm244, %v240, inf
  %246 = vmin.xlane.f32.xlu0 %v245
  %v247 = vpop.xlane.xlu0 %246
  %v248 = vcvt.f32.s32 %v247
  %v249 = vcvt.f32.s32 %v243
  %v250 = vshll.u32 %v249, 16
  %v251 = vadd.s32 %v250, %v248
  %v252 = vand.u32 %v231, 65535
  %v253 = vshra.s32 %v231, 16
  %v254 = vcvt.s32.f32 %v252
  %v255 = vcvt.s32.f32 %v253
  %256 = vmin.xlane.f32.xlu0 %v255
  %v257 = vpop.xlane.xlu0 %256
  %vm258 = vcmp.eq.f32.partialorder %v255, %v257
  %v259 = vsel %vm258, %v254, inf
  %260 = vmin.xlane.f32.xlu0 %v259
  %v261 = vpop.xlane.xlu0 %260
  %v262 = vcvt.f32.s32 %v261
  %v263 = vcvt.f32.s32 %v257
  %v264 = vshll.u32 %v263, 16
  %v265 = vadd.s32 %v264, %v262
  %v266 = vand.u32 %v232, 65535
  %v267 = vshra.s32 %v232, 16
  %v268 = vcvt.s32.f32 %v266
  %v269 = vcvt.s32.f32 %v267
  %270 = vmin.xlane.f32.xlu0 %v269
  %v271 = vpop.xlane.xlu0 %270
  %vm272 = vcmp.eq.f32.partialorder %v269, %v271
  %v273 = vsel %vm272, %v268, inf
  %274 = vmin.xlane.f32.xlu0 %v273
  %v275 = vpop.xlane.xlu0 %274
  %v276 = vcvt.f32.s32 %v275
  %v277 = vcvt.f32.s32 %v271
  %v278 = vshll.u32 %v277, 16
  %v279 = vadd.s32 %v278, %v276
  %v280 = vand.u32 %v233, 65535
  %v281 = vshra.s32 %v233, 16
  %v282 = vcvt.s32.f32 %v280
  %v283 = vcvt.s32.f32 %v281
  %284 = vmin.xlane.f32.xlu0 %v283
  %v285 = vpop.xlane.xlu0 %284
  %vm286 = vcmp.eq.f32.partialorder %v283, %v285
  %v287 = vsel %vm286, %v282, inf
  %288 = vmin.xlane.f32.xlu0 %v287
  %v289 = vpop.xlane.xlu0 %288
  %v290 = vcvt.f32.s32 %v289
  %v291 = vcvt.f32.s32 %v285
  %v292 = vshll.u32 %v291, 16
  %v293 = vadd.s32 %v292, %v290
  %v294 = vand.u32 %v234, 65535
  %v295 = vshra.s32 %v234, 16
  %v296 = vcvt.s32.f32 %v294
  %v297 = vcvt.s32.f32 %v295
  %298 = vmin.xlane.f32.xlu0 %v297
  %v299 = vpop.xlane.xlu0 %298
  %vm300 = vcmp.eq.f32.partialorder %v297, %v299
  %v301 = vsel %vm300, %v296, inf
  %302 = vmin.xlane.f32.xlu0 %v301
  %v303 = vpop.xlane.xlu0 %302
  %v304 = vcvt.f32.s32 %v303
  %v305 = vcvt.f32.s32 %v299
  %v306 = vshll.u32 %v305, 16
  %v307 = vadd.s32 %v306, %v304
  %v308 = vand.u32 %v235, 65535
  %v309 = vshra.s32 %v235, 16
  %v310 = vcvt.s32.f32 %v308
  %v311 = vcvt.s32.f32 %v309
  %312 = vmin.xlane.f32.xlu0 %v311
  %v313 = vpop.xlane.xlu0 %312
  %vm314 = vcmp.eq.f32.partialorder %v311, %v313
  %v315 = vsel %vm314, %v310, inf
  %316 = vmin.xlane.f32.xlu0 %v315
  %v317 = vpop.xlane.xlu0 %316
  %v318 = vcvt.f32.s32 %v317
  %v319 = vcvt.f32.s32 %v313
  %v320 = vshll.u32 %v319, 16
  %v321 = vadd.s32 %v320, %v318
  %v322 = vand.u32 %v236, 65535
  %v323 = vshra.s32 %v236, 16
  %v324 = vcvt.s32.f32 %v322
  %v325 = vcvt.s32.f32 %v323
  %326 = vmin.xlane.f32.xlu0 %v325
  %v327 = vpop.xlane.xlu0 %326
  %vm328 = vcmp.eq.f32.partialorder %v325, %v327
  %v329 = vsel %vm328, %v324, inf
  %330 = vmin.xlane.f32.xlu0 %v329
  %v331 = vpop.xlane.xlu0 %330
  %v332 = vcvt.f32.s32 %v331
  %v333 = vcvt.f32.s32 %v327
  %v334 = vshll.u32 %v333, 16
  %v335 = vadd.s32 %v334, %v332
  %v336 = vand.u32 %v237, 65535
  %v337 = vshra.s32 %v237, 16
  %v338 = vcvt.s32.f32 %v336
  %v339 = vcvt.s32.f32 %v337
  %340 = vmin.xlane.f32.xlu0 %v339
  %v341 = vpop.xlane.xlu0 %340
  %vm342 = vcmp.eq.f32.partialorder %v339, %v341
  %v343 = vsel %vm342, %v338, inf
  %344 = vmin.xlane.f32.xlu0 %v343
  %v345 = vpop.xlane.xlu0 %344
  %v346 = vcvt.f32.s32 %v345
  %v347 = vcvt.f32.s32 %v341
  %v348 = vshll.u32 %v347, 16
  %v349 = vadd.s32 %v348, %v346
  %vm350 = vcmask 7168
  %351 = vst.msk [vmem:[%s6] sm:$0xff] %vm350, %v251
  %352 = vst.msk [vmem:[%s6 + $0x8] sm:$0xff] %vm350, %v265
  %353 = vst.msk [vmem:[%s6 + $0x10] sm:$0xff] %vm350, %v279
  %354 = vst.msk [vmem:[%s6 + $0x18] sm:$0xff] %vm350, %v293
  %355 = vst.msk [vmem:[%s6 + $0x20] sm:$0xff] %vm350, %v307
  %356 = vst.msk [vmem:[%s6 + $0x28] sm:$0xff] %vm350, %v321
  %357 = vst.msk [vmem:[%s6 + $0x30] sm:$0xff] %vm350, %v335
  %358 = vst.msk [vmem:[%s6 + $0x38] sm:$0xff] %vm350, %v349
  %v359 = vld [vmem:[%s2] sm:$0xff]
  %v360 = vld [vmem:[%s2 + $0x8] sm:$0xff]
  %v361 = vld [vmem:[%s2 + $0x10] sm:$0xff]
  %v362 = vld [vmem:[%s2 + $0x18] sm:$0xff]
  %v363 = vld [vmem:[%s2 + $0x20] sm:$0xff]
  %v364 = vld [vmem:[%s2 + $0x28] sm:$0xff]
  %v365 = vld [vmem:[%s2 + $0x30] sm:$0xff]
  %v366 = vld [vmem:[%s2 + $0x38] sm:$0xff]
  %v367 = vsub.f32 %v174, %v205
  %v368 = vsub.f32 %v177, %v207
  %v369 = vsub.f32 %v182, %v209
  %v370 = vsub.f32 %v185, %v211
  %v371 = vsub.f32 %v190, %v213
  %v372 = vsub.f32 %v193, %v215
  %v373 = vsub.f32 %v198, %v217
  %v374 = vsub.f32 %v201, %v219
  %v375 = vmul.f32 %v367, 1.442695
  %v376 = vpow.pop %v375
  %v377 = vmul.f32 %v368, 1.442695
  %v378 = vpow.pop %v377
  %v379 = vmul.f32 %v369, 1.442695
  %v380 = vpow.pop %v379
  %v381 = vmul.f32 %v370, 1.442695
  %v382 = vpow.pop %v381
  %v383 = vmul.f32 %v371, 1.442695
  %v384 = vpow.pop %v383
  %v385 = vmul.f32 %v372, 1.442695
  %v386 = vpow.pop %v385
  %v387 = vmul.f32 %v373, 1.442695
  %v388 = vpow.pop %v387
  %v389 = vmul.f32 %v374, 1.442695
  %v390 = vpow.pop %v389
  %391 = vadd.xlane.f32.xlu0 %v376
  %v392 = vpop.xlane.xlu0 %391
  %393 = vadd.xlane.f32.xlu0 %v378
  %v394 = vpop.xlane.xlu0 %393
  %395 = vadd.xlane.f32.xlu0 %v380
  %v396 = vpop.xlane.xlu0 %395
  %397 = vadd.xlane.f32.xlu0 %v382
  %v398 = vpop.xlane.xlu0 %397
  %399 = vadd.xlane.f32.xlu0 %v384
  %v400 = vpop.xlane.xlu0 %399
  %401 = vadd.xlane.f32.xlu0 %v386
  %v402 = vpop.xlane.xlu0 %401
  %403 = vadd.xlane.f32.xlu0 %v388
  %v404 = vpop.xlane.xlu0 %403
  %405 = vadd.xlane.f32.xlu0 %v390
  %v406 = vpop.xlane.xlu0 %405
  %v407 = vlog2.pop %v392
  %v408 = vmul.f32 %v407, 0.6931472
  %v409 = vlog2.pop %v394
  %v410 = vmul.f32 %v409, 0.6931472
  %v411 = vlog2.pop %v396
  %v412 = vmul.f32 %v411, 0.6931472
  %v413 = vlog2.pop %v398
  %v414 = vmul.f32 %v413, 0.6931472
  %v415 = vlog2.pop %v400
  %v416 = vmul.f32 %v415, 0.6931472
  %v417 = vlog2.pop %v402
  %v418 = vmul.f32 %v417, 0.6931472
  %v419 = vlog2.pop %v404
  %v420 = vmul.f32 %v419, 0.6931472
  %v421 = vlog2.pop %v406
  %v422 = vmul.f32 %v421, 0.6931472
  %v423 = vadd.f32 %v205, %v408
  %v424 = vadd.f32 %v207, %v410
  %v425 = vadd.f32 %v209, %v412
  %v426 = vadd.f32 %v211, %v414
  %v427 = vadd.f32 %v213, %v416
  %v428 = vadd.f32 %v215, %v418
  %v429 = vadd.f32 %v217, %v420
  %v430 = vadd.f32 %v219, %v422
  %431 = vset.pattern.permute.xlu0 0
  %432 = vperm.xlu0 %431, %v359
  %v433 = vpop.permute.xlu0 %432
  %434 = vset.pattern.permute.xlu0 0
  %435 = vperm.xlu0 %434, %v360
  %v436 = vpop.permute.xlu0 %435
  %437 = vset.pattern.permute.xlu0 0
  %438 = vperm.xlu0 %437, %v361
  %v439 = vpop.permute.xlu0 %438
  %440 = vset.pattern.permute.xlu0 0
  %441 = vperm.xlu0 %440, %v362
  %v442 = vpop.permute.xlu0 %441
  %443 = vset.pattern.permute.xlu0 0
  %444 = vperm.xlu0 %443, %v363
  %v445 = vpop.permute.xlu0 %444
  %446 = vset.pattern.permute.xlu0 0
  %447 = vperm.xlu0 %446, %v364
  %v448 = vpop.permute.xlu0 %447
  %449 = vset.pattern.permute.xlu0 0
  %450 = vperm.xlu0 %449, %v365
  %v451 = vpop.permute.xlu0 %450
  %452 = vset.pattern.permute.xlu0 0
  %453 = vperm.xlu0 %452, %v366
  %v454 = vpop.permute.xlu0 %453
  %vm455 = vcmp.eq.s32.totalorder %v221, %v433
  %vm456 = vcmp.eq.s32.totalorder %v221, %v436
  %vm457 = vcmp.eq.s32.totalorder %v221, %v439
  %vm458 = vcmp.eq.s32.totalorder %v221, %v442
  %vm459 = vcmp.eq.s32.totalorder %v221, %v445
  %vm460 = vcmp.eq.s32.totalorder %v221, %v448
  %vm461 = vcmp.eq.s32.totalorder %v221, %v451
  %vm462 = vcmp.eq.s32.totalorder %v221, %v454
  %v463 = vsel %vm455, %v174, 0.0
  %v464 = vsel %vm456, %v177, 0.0
  %v465 = vsel %vm457, %v182, 0.0
  %v466 = vsel %vm458, %v185, 0.0
  %v467 = vsel %vm459, %v190, 0.0
  %v468 = vsel %vm460, %v193, 0.0
  %v469 = vsel %vm461, %v198, 0.0
  %v470 = vsel %vm462, %v201, 0.0
  %471 = vadd.xlane.f32.xlu0 %v463
  %v472 = vpop.xlane.xlu0 %471
  %473 = vadd.xlane.f32.xlu0 %v464
  %v474 = vpop.xlane.xlu0 %473
  %475 = vadd.xlane.f32.xlu0 %v465
  %v476 = vpop.xlane.xlu0 %475
  %477 = vadd.xlane.f32.xlu0 %v466
  %v478 = vpop.xlane.xlu0 %477
  %479 = vadd.xlane.f32.xlu0 %v467
  %v480 = vpop.xlane.xlu0 %479
  %481 = vadd.xlane.f32.xlu0 %v468
  %v482 = vpop.xlane.xlu0 %481
  %483 = vadd.xlane.f32.xlu0 %v469
  %v484 = vpop.xlane.xlu0 %483
  %485 = vadd.xlane.f32.xlu0 %v470
  %v486 = vpop.xlane.xlu0 %485
  %v487 = vsub.f32 %v423, %v472
  %v488 = vsub.f32 %v424, %v474
  %v489 = vsub.f32 %v425, %v476
  %v490 = vsub.f32 %v426, %v478
  %v491 = vsub.f32 %v427, %v480
  %v492 = vsub.f32 %v428, %v482
  %v493 = vsub.f32 %v429, %v484
  %v494 = vsub.f32 %v430, %v486
  %v495 = vld [vmem:[%s3] sm:$0xff]
  %v496 = vld [vmem:[%s3 + $0x8] sm:$0xff]
  %v497 = vld [vmem:[%s3 + $0x10] sm:$0xff]
  %v498 = vld [vmem:[%s3 + $0x18] sm:$0xff]
  %v499 = vld [vmem:[%s3 + $0x20] sm:$0xff]
  %v500 = vld [vmem:[%s3 + $0x28] sm:$0xff]
  %v501 = vld [vmem:[%s3 + $0x30] sm:$0xff]
  %v502 = vld [vmem:[%s3 + $0x38] sm:$0xff]
  %v503 = vmul.f32 %v487, %v495
  %v504 = vmul.f32 %v488, %v496
  %v505 = vmul.f32 %v489, %v497
  %v506 = vmul.f32 %v490, %v498
  %v507 = vmul.f32 %v491, %v499
  %v508 = vmul.f32 %v492, %v500
  %v509 = vmul.f32 %v493, %v501
  %v510 = vmul.f32 %v494, %v502
  %v511 = vsel %vm350, %v503, 0.0
  %v512 = vsel %vm350, %v504, 0.0
  %v513 = vadd.f32 %v511, %v512
  %v514 = vsel %vm350, %v505, 0.0
  %v515 = vadd.f32 %v513, %v514
  %v516 = vsel %vm350, %v506, 0.0
  %v517 = vadd.f32 %v515, %v516
  %v518 = vsel %vm350, %v507, 0.0
  %v519 = vadd.f32 %v517, %v518
  %v520 = vsel %vm350, %v508, 0.0
  %v521 = vadd.f32 %v519, %v520
  %v522 = vsel %vm350, %v509, 0.0
  %v523 = vadd.f32 %v521, %v522
  %v524 = vsel %vm350, %v510, 0.0
  %v525 = vadd.f32 %v523, %v524
  %526 = vadd.xlane.f32.xlu0 %v525
  %v527 = vpop.xlane.xlu0 %526
  %v528 = vrot.slane %v527, 4
  %v529 = vadd.f32 %v527, %v528
  %v530 = vrot.slane %v529, 2
  %v531 = vadd.f32 %v529, %v530
  %v532 = vrot.slane %v531, 1
  %v533 = vadd.f32 %v531, %v532
  %s534 = vtos %v533
  %v535 = vlaneseq
  %v536 = vshrl.u32 %v535, 7
  %vm537 = vcmp.eq.s32.totalorder %v536, 0
  %vm538 = vcmp.eq.s32.totalorder %v221, 0
  %vm539 = vmand %vm537, %vm538
  %v540 = vstv %s534
  %v541 = vsel %vm539, %v540, 0.0
  %542 = vst [vmem:[%s7] sm:$0xff] %v541
  // Predicated region
  $region26: #{seq_tagger_forward.5} parent=0 // pred_check
    _
  $region27: #{seq_tagger_forward.5} parent=0 // pred_check_branch
    %544 = sbr.rel (0) target = $region29
  $region28: #{seq_tagger_forward.5} parent=0 // pred_region
    _
  $region29: #{seq_tagger_forward.5} parent=0 // pred_fallthru
    _
  // Predicated region
  $region30: #{seq_tagger_forward.5} parent=0 // pred_check
    _
  $region31: #{seq_tagger_forward.5} parent=0 // pred_check_branch
    %546 = sbr.rel (0) target = $region33
  $region32: #{seq_tagger_forward.5} parent=0 // pred_region
    _
  $region33: #{seq_tagger_forward.5} parent=0 // pred_fallthru
    _
  // Predicated region
  $region34: #{seq_tagger_forward.5} parent=0 // pred_check
    _
  $region35: #{seq_tagger_forward.5} parent=0 // pred_check_branch
    %548 = sbr.rel (0) target = $region37
  $region36: #{seq_tagger_forward.5} parent=0 // pred_region
    _
  $region37: #{seq_tagger_forward.5} parent=0 // pred_fallthru
    _
  // Predicated region
  $region38: #{seq_tagger_forward.5} parent=0 // pred_check
    _
  $region39: #{seq_tagger_forward.5} parent=0 // pred_check_branch
    %550 = sbr.rel (0) target = $region41
  $region40: #{seq_tagger_forward.5} parent=0 // pred_region
    _
  $region41: #{seq_tagger_forward.5} parent=0 // pred_fallthru
    _

</llo_original>
